<compile_context>
chip_gen: v5e
topology: v5e:2x2
jax: 0.10.0
libtpu: 0.0.40
codegen_flags: <defaults>
</compile_context>

<pallas_src>
import jax
import jax.numpy as jnp
from jax.experimental import pallas as pl
from jax.experimental.pallas import tpu as pltpu

# ---------------- small, forward-consistent hyper-parameters ----------------
B = 2
C_IN = 2
C_OUT = 2
SEQ_LEN = 8          # L
OUT_LEN = 4
D_MODEL = 32
N_HEADS = 4
N_LAYERS = 2
D_FF = 8
NODES = 8            # N
ORDER = 2
SUPPORT_LEN = 1      # adaptive adjacency only (supports=None, aptinit=None)
D_MARK = 5           # time-feature width consumed by TemporalEncoding
LN_EPS = 1e-5
ATTN_EPS = 1e-6

BL = B * SEQ_LEN               # 16  (b, l) groups
BT = B * SEQ_LEN * NODES       # 128 tokens total
TOK = SEQ_LEN * NODES          # 64  tokens per batch
DH = D_MODEL // N_HEADS        # 8   head dim
M1_ROWS = B * OUT_LEN * NODES  # 64  output rows of end_conv1

# ---- packed-constants (32-lane blob) row offsets ----
C_EMB = 0                       # (BT, 32)  value_b + temp_b + PE + spatial, per token
C_HMASK = BT                    # (32, 32)  block-diagonal head mask
C_WEMB = BT + D_MODEL           # (8, 32)   [value_w ; temp_w ; 0] fused embed weight
C_FING = C_WEMB + 8             # (1, 32)   final norm gamma
C_FINB = C_FING + 1             # (1, 32)   final norm beta
C_B1 = 176                      # (M1_ROWS, 32) end_conv1 bias, lane-broadcast
CONST_ROWS = C_B1 + M1_ROWS     # 240

# ---- per-layer 32-lane slab row offsets ----
W_MLPW = 0                      # (96, 32)  mlp_w @ wo   (wo folded in)
W_MLPB = 96                     # (1, 32)   mlp_b @ wo + bo
W_L1B = 97                      # (1, 32)   lin1 bias (lanes 8:32 zero)
W_L2B = 98                      # (1, 32)   lin2 bias
W_N1G, W_N1B = 99, 100          # LN1 gamma / beta
W_N2G, W_N2B = 101, 102         # LN2 gamma / beta
W_L1W = 104                     # (32, 32)  lin1 weight padded to 32 out lanes
W_L2W = 136                     # (32, 32)  lin2 weight padded to 32 in rows
W32_ROWS = 168

W96_ROWS = 40                   # rows 0:32 = fused wqkv, row 32 = fused bqkv


# ----------------------------- fused Pallas kernel ---------------------------
def _polla_fused_kernel(xin_ref, consts_ref, dmat_ref, endw_ref,
                        w96_ref, w32_ref, out_ref):
    f32 = jnp.float32
    bf16 = jnp.bfloat16
    D = D_MODEL

    def mm(a, b_):
        # MXU-native bf16 operands, f32 accumulation.
        return jnp.dot(a.astype(bf16), b_.astype(bf16), preferred_element_type=f32)

    def layer_norm(x, g, b_):
        mu = jnp.mean(x, axis=-1, keepdims=True)
        var = jnp.mean(jnp.square(x - mu), axis=-1, keepdims=True)
        return (x - mu) * jax.lax.rsqrt(var + LN_EPS) * g + b_

    def phi(x):      # elu(x) + 1
        return jnp.where(x > 0, x + 1.0, jnp.exp(x))

    head_mask = consts_ref[C_HMASK:C_HMASK + D, :]            # (32,32) f32 {0,1}
    bd = dmat_ref[0:BT, :]                                    # (128,128) bf16
    bd2 = dmat_ref[BT:2 * BT, :]                              # (128,128) bf16

    # ------------------------------ embeddings ------------------------------
    # one (128,8)x(8,32) matmul = value + temporal embedding; PE/spatial/biases
    # are pre-folded into the (128,32) constant.  dropout(p=0) == identity.
    h = mm(xin_ref[...], consts_ref[C_WEMB:C_WEMB + 8, :]) \
        + consts_ref[C_EMB:C_EMB + BT, :]                     # (128,32)

    # ----------------------------- encoder layers ---------------------------
    for l in range(N_LAYERS):
        w96 = w96_ref[l]                                      # (40, 96)
        w32 = w32_ref[l]                                      # (168, 32)

        # fused Q/K/V projection: one (128,32)x(32,96) MXU op
        qkv = mm(h, w96[0:D, :]) + w96[D:D + 1, :]            # (128,96)
        q = phi(qkv[:, 0:D])
        k = phi(qkv[:, D:2 * D])
        v = qkv[:, 2 * D:3 * D]

        # linear (elu+1) attention, all heads at once via block-diagonal KV
        parts = []
        for bi in range(B):
            r0 = bi * TOK
            qb = q[r0:r0 + TOK, :]
            kb = k[r0:r0 + TOK, :]
            vb = v[r0:r0 + TOK, :]
            kv = jax.lax.dot_general(kb.astype(bf16), vb.astype(bf16),
                                     (((0,), (0,)), ((), ())),
                                     preferred_element_type=f32) * head_mask  # (32,32)
            ksum = jnp.sum(kb, axis=0, keepdims=True)         # (1,32)
            # per-head q.ksum, already broadcast to all 32 lanes of each head
            denom = mm(qb * ksum, head_mask) + ATTN_EPS       # (64,32)
            parts.append(mm(qb, kv) * pl.reciprocal(denom, approx=True))
        attn = jnp.concatenate(parts, axis=0)                 # (128,32)

        # order-2 graph diffusion; bd2 precomputed so x1/x2 are independent,
        # and the feature concat feeds ONE (128,96)x(96,32) matmul whose
        # weight already has the output projection wo folded in.
        x1 = mm(bd, attn)
        x2 = mm(bd2, attn)
        cat = jnp.concatenate([attn, x1, x2], axis=1)         # (128,96)
        attn_out = mm(cat, w32[W_MLPW:W_MLPW + 96, :]) + w32[W_MLPB:W_MLPB + 1, :]

        # residual + LN1 + FFN(gelu) + residual + LN2 (dropout p=0 -> identity)
        h = layer_norm(h + attn_out, w32[W_N1G:W_N1G + 1, :], w32[W_N1B:W_N1B + 1, :])
        y = jax.nn.gelu(mm(h, w32[W_L1W:W_L1W + D, :]) + w32[W_L1B:W_L1B + 1, :],
                        approximate=True)
        y = mm(y, w32[W_L2W:W_L2W + D, :]) + w32[W_L2B:W_L2B + 1, :]
        h = layer_norm(h + y, w32[W_N2G:W_N2G + 1, :], w32[W_N2B:W_N2B + 1, :])

    h = layer_norm(h, consts_ref[C_FING:C_FING + 1, :], consts_ref[C_FINB:C_FINB + 1, :])

    # -------------- end_conv1 (relu) + end_conv2, no transposes -------------
    m1 = dmat_ref[2 * BT:2 * BT + M1_ROWS, :]                 # (64,128) bf16
    z1 = jnp.maximum(mm(m1, h) + consts_ref[C_B1:C_B1 + M1_ROWS, :], 0.0)  # (64,32)
    endw = endw_ref[...]                                      # (40, 2)
    out_ref[...] = (mm(z1, endw[0:D, :]) + endw[D:D + 1, :]).astype(out_ref.dtype)


# ----------------------------- helpers / packing ------------------------------
def positional_encoding(L, d_model):
    pos = jnp.arange(L, dtype=jnp.float32)[:, None]
    div = jnp.exp(jnp.arange(0, d_model, 2, dtype=jnp.float32)
                  * (-jnp.log(10000.0) / d_model))
    pe = jnp.zeros((L, d_model), jnp.float32)
    pe = pe.at[:, 0::2].set(jnp.sin(pos * div))
    pe = pe.at[:, 1::2].set(jnp.cos(pos * div))
    return pe


def prepare_packed(params):
    """Parameter-only preprocessing, run ONCE at model load (not per forward)."""
    D = D_MODEL

    # adaptive adjacency: softmax(relu(nodevec1 @ nodevec2), dim=1)
    adp = jax.nn.softmax(
        jnp.maximum(params["nodevec1"] @ params["nodevec2"], 0.0), axis=1)
    adp2 = adp @ adp
    eye_bl = jnp.eye(BL, dtype=jnp.float32)
    bd = jnp.kron(eye_bl, adp.T)                              # (128,128)
    bd2 = jnp.kron(eye_bl, adp2.T)                            # (128,128)
    m1 = jnp.kron(jnp.kron(jnp.eye(B, dtype=jnp.float32), params["end1_w"].T),
                  jnp.eye(NODES, dtype=jnp.float32))          # (64,128)
    dmat = jnp.concatenate([bd, bd2, m1], axis=0).astype(jnp.bfloat16)  # (320,128)

    spa = adp @ params["spatial_w"] + params["spatial_b"]     # (N, D)
    pe = positional_encoding(SEQ_LEN, D)                      # (L, D)
    pe_tok = jnp.repeat(jnp.tile(pe, (B, 1)), NODES, axis=0)  # (128, D)
    spa_tok = jnp.tile(spa, (B * SEQ_LEN, 1))                 # (128, D)
    const_emb = pe_tok + spa_tok + params["value_b"] + params["temp_b"]

    ar = jnp.arange(D)
    head_mask = (ar[:, None] // DH == ar[None, :] // DH).astype(jnp.float32)
    w_emb8 = (jnp.zeros((8, D), jnp.float32)
              .at[0:C_IN].set(params["value_w"])
              .at[C_IN:C_IN + D_MARK].set(params["temp_w"]))
    b1_vec = jnp.tile(jnp.repeat(params["end1_b"], NODES), B)          # (64,)
    b1_bcast = jnp.broadcast_to(b1_vec[:, None], (M1_ROWS, D))

    consts = jnp.zeros((CONST_ROWS, D), jnp.float32)
    consts = consts.at[C_EMB:C_EMB + BT].set(const_emb)
    consts = consts.at[C_HMASK:C_HMASK + D].set(head_mask)
    consts = consts.at[C_WEMB:C_WEMB + 8].set(w_emb8)
    consts = consts.at[C_FING].set(params["final_norm_g"])
    consts = consts.at[C_FINB].set(params["final_norm_b"])
    consts = consts.at[C_B1:C_B1 + M1_ROWS].set(b1_bcast)

    endw = (jnp.zeros((40, C_OUT), jnp.float32)
            .at[0:D].set(params["end2_w"])
            .at[D].set(params["end2_b"]))

    w96 = jnp.zeros((N_LAYERS, W96_ROWS, 3 * D), jnp.float32)
    w32 = jnp.zeros((N_LAYERS, W32_ROWS, D), jnp.float32)
    for i, lyr in enumerate(params["layers"]):
        wqkv = jnp.concatenate([lyr["wq"], lyr["wk"], lyr["wv"]], axis=1)   # (32,96)
        bqkv = jnp.concatenate([lyr["bq"], lyr["bk"], lyr["bv"]])           # (96,)
        w96 = w96.at[i, 0:D].set(wqkv).at[i, D].set(bqkv)

        mlp_wf = lyr["mlp_w"] @ lyr["wo"]                     # fold wo into mlp
        mlp_bf = lyr["mlp_b"] @ lyr["wo"] + lyr["bo"]
        lin1_wp = jnp.zeros((D, D), jnp.float32).at[:, 0:D_FF].set(lyr["lin1_w"])
        lin1_bp = jnp.zeros((D,), jnp.float32).at[0:D_FF].set(lyr["lin1_b"])
        lin2_wp = jnp.zeros((D, D), jnp.float32).at[0:D_FF, :].set(lyr["lin2_w"])
        w32 = (w32.at[i, W_MLPW:W_MLPW + 96].set(mlp_wf)
                  .at[i, W_MLPB].set(mlp_bf)
                  .at[i, W_L1B].set(lin1_bp)
                  .at[i, W_L2B].set(lyr["lin2_b"])
                  .at[i, W_N1G].set(lyr["norm1_g"])
                  .at[i, W_N1B].set(lyr["norm1_b"])
                  .at[i, W_N2G].set(lyr["norm2_g"])
                  .at[i, W_N2B].set(lyr["norm2_b"])
                  .at[i, W_L1W:W_L1W + D].set(lin1_wp)
                  .at[i, W_L2W:W_L2W + D].set(lin2_wp))

    return {"consts": consts, "dmat": dmat, "endw": endw, "w96": w96, "w32": w32}


# ----------------------------- model wrapper ---------------------------------
def polla_adpadj_forward(packed, x, x_mark, se):
    # `se` is accepted but unused, matching the PyTorch forward signature.
    del se
    Bq, L, N, _ = x.shape
    assert (Bq, L, N) == (B, SEQ_LEN, NODES)

    # only per-call data prep: pack [x features | x_mark expanded per node | pad]
    xf = x.reshape(-1, C_IN)                                           # (128,2)
    xm = jnp.repeat(x_mark.reshape(Bq * L, D_MARK), N, axis=0)         # (128,5)
    xin = jnp.concatenate([xf, xm, jnp.zeros((BT, 1), jnp.float32)], axis=1)

    vmem = lambda: pl.BlockSpec(memory_space=pltpu.MemorySpace.VMEM)
    out2d = pl.pallas_call(
        _polla_fused_kernel,
        out_shape=jax.ShapeDtypeStruct((Bq * OUT_LEN * N, C_OUT), jnp.float32),
        in_specs=[vmem() for _ in range(6)],
        out_specs=vmem(),
    )(xin, packed["consts"], packed["dmat"], packed["endw"],
      packed["w96"], packed["w32"])
    return out2d.reshape(Bq, OUT_LEN, N, C_OUT)


# ----------------------- pure-JAX reference (for checking) -------------------
def polla_reference(params, x, x_mark):
    Bq, L, N, _ = x.shape
    D, H, dh = D_MODEL, N_HEADS, D_MODEL // N_HEADS
    adp = jax.nn.softmax(
        jnp.maximum(params["nodevec1"] @ params["nodevec2"], 0.0), axis=1)
    val = (x.reshape(-1, C_IN) @ params["value_w"] + params["value_b"]).reshape(Bq, L, N, D)
    tmp = (x_mark.reshape(-1, D_MARK) @ params["temp_w"] + params["temp_b"]).reshape(Bq, L, 1, D)
    spa = (adp @ params["spatial_w"] + params["spatial_b"]).reshape(1, 1, N, D)
    pe = positional_encoding(L, D).reshape(1, L, 1, D)
    h = val + tmp + spa + pe

    def ln(x_, g, b_):
        mu = x_.mean(-1, keepdims=True)
        var = ((x_ - mu) ** 2).mean(-1, keepdims=True)
        return (x_ - mu) / jnp.sqrt(var + LN_EPS) * g + b_

    phi = lambda t: jnp.where(t > 0, t + 1.0, jnp.exp(t))

    for layer in params["layers"]:
        xf = h.reshape(Bq, L * N, D)
        q = phi((xf @ layer["wq"] + layer["bq"]).reshape(Bq, L * N, H, dh))
        k = phi((xf @ layer["wk"] + layer["bk"]).reshape(Bq, L * N, H, dh))
        v = (xf @ layer["wv"] + layer["bv"]).reshape(Bq, L * N, H, dh)
        kv = jnp.einsum("bthd,bthe->bhde", k, v)
        z = 1.0 / (jnp.einsum("bthd,bhd->bth", q, k.sum(axis=1)) + ATTN_EPS)
        attn = (jnp.einsum("bthd,bhde->bthe", q, kv) * z[..., None]).reshape(Bq, L, N, D)
        x1 = jnp.einsum("blvd,vw->blwd", attn, adp)
        x2 = jnp.einsum("blvd,vw->blwd", x1, adp)
        g = jnp.concatenate([attn, x1, x2], axis=-1) @ layer["mlp_w"] + layer["mlp_b"]
        attn_out = g @ layer["wo"] + layer["bo"]
        h = ln(h + attn_out, layer["norm1_g"], layer["norm1_b"])
        y = jax.nn.gelu(h @ layer["lin1_w"] + layer["lin1_b"], approximate=True)
        y = y @ layer["lin2_w"] + layer["lin2_b"]
        h = ln(h + y, layer["norm2_g"], layer["norm2_b"])

    h = ln(h, params["final_norm_g"], params["final_norm_b"])
    z1 = jnp.maximum(jnp.einsum("blnd,lo->bond", h, params["end1_w"])
                     + params["end1_b"][None, :, None, None], 0.0)
    return z1 @ params["end2_w"] + params["end2_b"]


# ------------------------------ parameters ------------------------------------
def init_params(key):
    keys = jax.random.split(key, 128)
    ki = iter(keys)

    def nrm(shape, scale=0.1):
        return scale * jax.random.normal(next(ki), shape, dtype=jnp.float32)

    params = {
        "nodevec1": jax.random.normal(next(ki), (NODES, 10), jnp.float32),
        "nodevec2": jax.random.normal(next(ki), (10, NODES), jnp.float32),
        "value_w": nrm((C_IN, D_MODEL)), "value_b": nrm((D_MODEL,)),
        "temp_w": nrm((D_MARK, D_MODEL)), "temp_b": nrm((D_MODEL,)),
        "spatial_w": nrm((NODES, D_MODEL)), "spatial_b": nrm((D_MODEL,)),
        "final_norm_g": jnp.ones((D_MODEL,), jnp.float32),
        "final_norm_b": jnp.zeros((D_MODEL,), jnp.float32),
        "end1_w": nrm((SEQ_LEN, OUT_LEN)), "end1_b": nrm((OUT_LEN,)),
        "end2_w": nrm((D_MODEL, C_OUT)), "end2_b": nrm((C_OUT,)),
    }
    c_gcn = (ORDER * SUPPORT_LEN + 1) * D_MODEL
    layers = []
    for _ in range(N_LAYERS):
        layers.append({
            "wq": nrm((D_MODEL, D_MODEL)), "bq": nrm((D_MODEL,)),
            "wk": nrm((D_MODEL, D_MODEL)), "bk": nrm((D_MODEL,)),
            "wv": nrm((D_MODEL, D_MODEL)), "bv": nrm((D_MODEL,)),
            "wo": nrm((D_MODEL, D_MODEL)), "bo": nrm((D_MODEL,)),
            "mlp_w": nrm((c_gcn, D_MODEL)), "mlp_b": nrm((D_MODEL,)),
            "lin1_w": nrm((D_MODEL, D_FF)), "lin1_b": nrm((D_FF,)),
            "lin2_w": nrm((D_FF, D_MODEL)), "lin2_b": nrm((D_MODEL,)),
            "norm1_g": jnp.ones((D_MODEL,), jnp.float32),
            "norm1_b": jnp.zeros((D_MODEL,), jnp.float32),
            "norm2_g": jnp.ones((D_MODEL,), jnp.float32),
            "norm2_b": jnp.zeros((D_MODEL,), jnp.float32),
        })
    params["layers"] = layers
    return params


# --------------------------------- main ---------------------------------------
if __name__ == "__main__":
    key = jax.random.PRNGKey(0)
    pkey, xkey, mkey, skey = jax.random.split(key, 4)
    params = init_params(pkey)

    x = jax.random.normal(xkey, (B, SEQ_LEN, NODES, C_IN), jnp.float32)
    x_mark = jax.random.normal(mkey, (B, SEQ_LEN, D_MARK), jnp.float32)
    se = jax.random.normal(skey, (NODES, D_MODEL), jnp.float32)  # unused, as in PyTorch

    packed = prepare_packed(params)          # parameter-only work, once at load
    fwd = jax.jit(polla_adpadj_forward)
    out = jax.block_until_ready(fwd(packed, x, x_mark, se))
    assert out.shape == (B, OUT_LEN, NODES, C_OUT), out.shape
    assert bool(jnp.all(jnp.isfinite(out)))

    # numerical check against the straightforward pure-JAX f32 reference.
    # tolerance is loosened slightly vs. before because the kernel now runs the
    # MXU with bf16 operands + approximate reciprocal (per perf review).
    with jax.default_matmul_precision("float32"):
        ref = jax.jit(polla_reference)(params, x, x_mark)
    ref = jax.block_until_ready(ref)
    err = float(jnp.max(jnp.abs(out - ref)))
    assert jnp.allclose(out, ref, rtol=5e-2, atol=5e-2), err
    print("KERNEL_OK")
</pallas_src>

<mosaic_0001>
module attributes {stable_mosaic.version = 11 : i64} {
  func.func @_polla_fused_kernel(%arg0: memref<128x8xf32, #tpu.memory_space<vmem>>, %arg1: memref<240x32xf32, #tpu.memory_space<vmem>>, %arg2: memref<320x128xbf16, #tpu.memory_space<vmem>>, %arg3: memref<40x2xf32, #tpu.memory_space<vmem>>, %arg4: memref<2x40x96xf32, #tpu.memory_space<vmem>>, %arg5: memref<2x168x32xf32, #tpu.memory_space<vmem>>, %arg6: memref<64x2xf32, #tpu.memory_space<vmem>>) attributes {dimension_semantics = [], scalar_prefetch = 0 : i64, scratch_operands = 0 : i64, tpu.core_type = #tpu.core_type<tc>} {
    %c128 = arith.constant 128 : index
    %c0 = arith.constant 0 : index
    %0 = vector.load %arg1[%c128, %c0] : memref<240x32xf32, #tpu.memory_space<vmem>>, vector<32x32xf32>
    %c0_0 = arith.constant 0 : index
    %c0_1 = arith.constant 0 : index
    %1 = vector.load %arg2[%c0_0, %c0_1] : memref<320x128xbf16, #tpu.memory_space<vmem>>, vector<128x128xbf16>
    %c128_2 = arith.constant 128 : index
    %c0_3 = arith.constant 0 : index
    %2 = vector.load %arg2[%c128_2, %c0_3] : memref<320x128xbf16, #tpu.memory_space<vmem>>, vector<128x128xbf16>
    %c0_4 = arith.constant 0 : index
    %c0_5 = arith.constant 0 : index
    %3 = vector.load %arg0[%c0_4, %c0_5] : memref<128x8xf32, #tpu.memory_space<vmem>>, vector<128x8xf32>
    %c160 = arith.constant 160 : index
    %c0_6 = arith.constant 0 : index
    %4 = vector.load %arg1[%c160, %c0_6] : memref<240x32xf32, #tpu.memory_space<vmem>>, vector<8x32xf32>
    %5 = arith.truncf %3 : vector<128x8xf32> to vector<128x8xbf16>
    %6 = arith.truncf %4 : vector<8x32xf32> to vector<8x32xbf16>
    %cst = arith.constant dense<0.000000e+00> : vector<128x32xf32>
    %7 = tpu.matmul %5, %6, %cst {dimension_numbers = #tpu.dot_dimension_numbers<[1], [0], [0], [1], [0, 0, 1, 1], [], []>} : vector<128x8xbf16>, vector<8x32xbf16>, vector<128x32xf32> -> vector<128x32xf32>
    %c0_7 = arith.constant 0 : index
    %c0_8 = arith.constant 0 : index
    %8 = vector.load %arg1[%c0_7, %c0_8] : memref<240x32xf32, #tpu.memory_space<vmem>>, vector<128x32xf32>
    %9 = arith.addf %7, %8 : vector<128x32xf32>
    %c0_9 = arith.constant 0 : index
    %c0_10 = arith.constant 0 : index
    %c0_11 = arith.constant 0 : index
    %10 = vector.load %arg4[%c0_9, %c0_10, %c0_11] : memref<2x40x96xf32, #tpu.memory_space<vmem>>, vector<1x40x96xf32>
    %11 = vector.shape_cast %10 : vector<1x40x96xf32> to vector<40x96xf32>
    %c0_12 = arith.constant 0 : index
    %c0_13 = arith.constant 0 : index
    %c0_14 = arith.constant 0 : index
    %12 = vector.load %arg5[%c0_12, %c0_13, %c0_14] : memref<2x168x32xf32, #tpu.memory_space<vmem>>, vector<1x168x32xf32>
    %13 = vector.shape_cast %12 : vector<1x168x32xf32> to vector<168x32xf32>
    %14 = vector.extract_strided_slice %11 {offsets = [0, 0], sizes = [32, 96], strides = [1, 1]} : vector<40x96xf32> to vector<32x96xf32>
    %15 = arith.truncf %9 : vector<128x32xf32> to vector<128x32xbf16>
    %16 = arith.truncf %14 : vector<32x96xf32> to vector<32x96xbf16>
    %cst_15 = arith.constant dense<0.000000e+00> : vector<128x96xf32>
    %17 = tpu.matmul %15, %16, %cst_15 {dimension_numbers = #tpu.dot_dimension_numbers<[1], [0], [0], [1], [0, 0, 1, 1], [], []>} : vector<128x32xbf16>, vector<32x96xbf16>, vector<128x96xf32> -> vector<128x96xf32>
    %18 = vector.extract_strided_slice %11 {offsets = [32, 0], sizes = [1, 96], strides = [1, 1]} : vector<40x96xf32> to vector<1x96xf32>
    %19 = vector.broadcast %18 : vector<1x96xf32> to vector<128x96xf32>
    %20 = arith.addf %17, %19 : vector<128x96xf32>
    %21 = vector.extract_strided_slice %20 {offsets = [0, 0], sizes = [128, 32], strides = [1, 1]} : vector<128x96xf32> to vector<128x32xf32>
    %cst_16 = arith.constant 0.000000e+00 : f32
    %22 = vector.broadcast %cst_16 : f32 to vector<128x32xf32>
    %23 = arith.cmpf ogt, %21, %22 : vector<128x32xf32>
    %cst_17 = arith.constant 1.000000e+00 : f32
    %24 = vector.broadcast %cst_17 : f32 to vector<128x32xf32>
    %25 = arith.addf %21, %24 : vector<128x32xf32>
    %26 = math.exp %21 : vector<128x32xf32>
    %27 = arith.select %23, %25, %26 : vector<128x32xi1>, vector<128x32xf32>
    %28 = vector.extract_strided_slice %20 {offsets = [0, 32], sizes = [128, 32], strides = [1, 1]} : vector<128x96xf32> to vector<128x32xf32>
    %cst_18 = arith.constant 0.000000e+00 : f32
    %29 = vector.broadcast %cst_18 : f32 to vector<128x32xf32>
    %30 = arith.cmpf ogt, %28, %29 : vector<128x32xf32>
    %cst_19 = arith.constant 1.000000e+00 : f32
    %31 = vector.broadcast %cst_19 : f32 to vector<128x32xf32>
    %32 = arith.addf %28, %31 : vector<128x32xf32>
    %33 = math.exp %28 : vector<128x32xf32>
    %34 = arith.select %30, %32, %33 : vector<128x32xi1>, vector<128x32xf32>
    %35 = vector.extract_strided_slice %20 {offsets = [0, 64], sizes = [128, 32], strides = [1, 1]} : vector<128x96xf32> to vector<128x32xf32>
    %36 = vector.extract_strided_slice %27 {offsets = [0, 0], sizes = [64, 32], strides = [1, 1]} : vector<128x32xf32> to vector<64x32xf32>
    %37 = vector.extract_strided_slice %34 {offsets = [0, 0], sizes = [64, 32], strides = [1, 1]} : vector<128x32xf32> to vector<64x32xf32>
    %38 = vector.extract_strided_slice %35 {offsets = [0, 0], sizes = [64, 32], strides = [1, 1]} : vector<128x32xf32> to vector<64x32xf32>
    %39 = arith.truncf %37 : vector<64x32xf32> to vector<64x32xbf16>
    %40 = arith.truncf %38 : vector<64x32xf32> to vector<64x32xbf16>
    %cst_20 = arith.constant dense<0.000000e+00> : vector<32x32xf32>
    %41 = tpu.matmul %39, %40, %cst_20 {dimension_numbers = #tpu.dot_dimension_numbers<[0], [0], [1], [1], [0, 1, 1, 1], [], []>} : vector<64x32xbf16>, vector<64x32xbf16>, vector<32x32xf32> -> vector<32x32xf32>
    %42 = arith.mulf %41, %0 : vector<32x32xf32>
    %cst_21 = arith.constant dense<0.000000e+00> : vector<32xf32>
    %43 = vector.multi_reduction <add>, %37, %cst_21 [0] : vector<64x32xf32> to vector<32xf32>
    %44 = vector.shape_cast %43 : vector<32xf32> to vector<1x32xf32>
    %45 = vector.broadcast %44 : vector<1x32xf32> to vector<64x32xf32>
    %46 = arith.mulf %36, %45 : vector<64x32xf32>
    %47 = arith.truncf %46 : vector<64x32xf32> to vector<64x32xbf16>
    %48 = arith.truncf %0 : vector<32x32xf32> to vector<32x32xbf16>
    %cst_22 = arith.constant dense<0.000000e+00> : vector<64x32xf32>
    %49 = tpu.matmul %47, %48, %cst_22 {dimension_numbers = #tpu.dot_dimension_numbers<[1], [0], [0], [1], [0, 0, 1, 1], [], []>} : vector<64x32xbf16>, vector<32x32xbf16>, vector<64x32xf32> -> vector<64x32xf32>
    %cst_23 = arith.constant 9.99999997E-7 : f32
    %50 = vector.broadcast %cst_23 : f32 to vector<64x32xf32>
    %51 = arith.addf %49, %50 : vector<64x32xf32>
    %52 = arith.truncf %36 : vector<64x32xf32> to vector<64x32xbf16>
    %53 = arith.truncf %42 : vector<32x32xf32> to vector<32x32xbf16>
    %cst_24 = arith.constant dense<0.000000e+00> : vector<64x32xf32>
    %54 = tpu.matmul %52, %53, %cst_24 {dimension_numbers = #tpu.dot_dimension_numbers<[1], [0], [0], [1], [0, 0, 1, 1], [], []>} : vector<64x32xbf16>, vector<32x32xbf16>, vector<64x32xf32> -> vector<64x32xf32>
    %55 = tpu.reciprocal %51 {approx = true} : vector<64x32xf32> -> vector<64x32xf32>
    %56 = arith.mulf %54, %55 : vector<64x32xf32>
    %57 = vector.extract_strided_slice %27 {offsets = [64, 0], sizes = [64, 32], strides = [1, 1]} : vector<128x32xf32> to vector<64x32xf32>
    %58 = vector.extract_strided_slice %34 {offsets = [64, 0], sizes = [64, 32], strides = [1, 1]} : vector<128x32xf32> to vector<64x32xf32>
    %59 = vector.extract_strided_slice %35 {offsets = [64, 0], sizes = [64, 32], strides = [1, 1]} : vector<128x32xf32> to vector<64x32xf32>
    %60 = arith.truncf %58 : vector<64x32xf32> to vector<64x32xbf16>
    %61 = arith.truncf %59 : vector<64x32xf32> to vector<64x32xbf16>
    %cst_25 = arith.constant dense<0.000000e+00> : vector<32x32xf32>
    %62 = tpu.matmul %60, %61, %cst_25 {dimension_numbers = #tpu.dot_dimension_numbers<[0], [0], [1], [1], [0, 1, 1, 1], [], []>} : vector<64x32xbf16>, vector<64x32xbf16>, vector<32x32xf32> -> vector<32x32xf32>
    %63 = arith.mulf %62, %0 : vector<32x32xf32>
    %cst_26 = arith.constant dense<0.000000e+00> : vector<32xf32>
    %64 = vector.multi_reduction <add>, %58, %cst_26 [0] : vector<64x32xf32> to vector<32xf32>
    %65 = vector.shape_cast %64 : vector<32xf32> to vector<1x32xf32>
    %66 = vector.broadcast %65 : vector<1x32xf32> to vector<64x32xf32>
    %67 = arith.mulf %57, %66 : vector<64x32xf32>
    %68 = arith.truncf %67 : vector<64x32xf32> to vector<64x32xbf16>
    %69 = arith.truncf %0 : vector<32x32xf32> to vector<32x32xbf16>
    %cst_27 = arith.constant dense<0.000000e+00> : vector<64x32xf32>
    %70 = tpu.matmul %68, %69, %cst_27 {dimension_numbers = #tpu.dot_dimension_numbers<[1], [0], [0], [1], [0, 0, 1, 1], [], []>} : vector<64x32xbf16>, vector<32x32xbf16>, vector<64x32xf32> -> vector<64x32xf32>
    %cst_28 = arith.constant 9.99999997E-7 : f32
    %71 = vector.broadcast %cst_28 : f32 to vector<64x32xf32>
    %72 = arith.addf %70, %71 : vector<64x32xf32>
    %73 = arith.truncf %57 : vector<64x32xf32> to vector<64x32xbf16>
    %74 = arith.truncf %63 : vector<32x32xf32> to vector<32x32xbf16>
    %cst_29 = arith.constant dense<0.000000e+00> : vector<64x32xf32>
    %75 = tpu.matmul %73, %74, %cst_29 {dimension_numbers = #tpu.dot_dimension_numbers<[1], [0], [0], [1], [0, 0, 1, 1], [], []>} : vector<64x32xbf16>, vector<32x32xbf16>, vector<64x32xf32> -> vector<64x32xf32>
    %76 = tpu.reciprocal %72 {approx = true} : vector<64x32xf32> -> vector<64x32xf32>
    %77 = arith.mulf %75, %76 : vector<64x32xf32>
    %78 = tpu.concatenate %56, %77 in 0 : vector<64x32xf32>, vector<64x32xf32> -> vector<128x32xf32>
    %79 = arith.truncf %78 : vector<128x32xf32> to vector<128x32xbf16>
    %cst_30 = arith.constant dense<0.000000e+00> : vector<128x32xf32>
    %80 = tpu.matmul %1, %79, %cst_30 {dimension_numbers = #tpu.dot_dimension_numbers<[1], [0], [0], [1], [0, 0, 1, 1], [], []>} : vector<128x128xbf16>, vector<128x32xbf16>, vector<128x32xf32> -> vector<128x32xf32>
    %81 = arith.truncf %78 : vector<128x32xf32> to vector<128x32xbf16>
    %cst_31 = arith.constant dense<0.000000e+00> : vector<128x32xf32>
    %82 = tpu.matmul %2, %81, %cst_31 {dimension_numbers = #tpu.dot_dimension_numbers<[1], [0], [0], [1], [0, 0, 1, 1], [], []>} : vector<128x128xbf16>, vector<128x32xbf16>, vector<128x32xf32> -> vector<128x32xf32>
    %83 = tpu.concatenate %78, %80, %82 in 1 : vector<128x32xf32>, vector<128x32xf32>, vector<128x32xf32> -> vector<128x96xf32>
    %84 = vector.extract_strided_slice %13 {offsets = [0, 0], sizes = [96, 32], strides = [1, 1]} : vector<168x32xf32> to vector<96x32xf32>
    %85 = arith.truncf %83 : vector<128x96xf32> to vector<128x96xbf16>
    %86 = arith.truncf %84 : vector<96x32xf32> to vector<96x32xbf16>
    %cst_32 = arith.constant dense<0.000000e+00> : vector<128x32xf32>
    %87 = tpu.matmul %85, %86, %cst_32 {dimension_numbers = #tpu.dot_dimension_numbers<[1], [0], [0], [1], [0, 0, 1, 1], [], []>} : vector<128x96xbf16>, vector<96x32xbf16>, vector<128x32xf32> -> vector<128x32xf32>
    %88 = vector.extract_strided_slice %13 {offsets = [96, 0], sizes = [1, 32], strides = [1, 1]} : vector<168x32xf32> to vector<1x32xf32>
    %89 = vector.broadcast %88 : vector<1x32xf32> to vector<128x32xf32>
    %90 = arith.addf %87, %89 : vector<128x32xf32>
    %91 = arith.addf %9, %90 : vector<128x32xf32>
    %92 = vector.extract_strided_slice %13 {offsets = [99, 0], sizes = [1, 32], strides = [1, 1]} : vector<168x32xf32> to vector<1x32xf32>
    %93 = vector.extract_strided_slice %13 {offsets = [100, 0], sizes = [1, 32], strides = [1, 1]} : vector<168x32xf32> to vector<1x32xf32>
    %cst_33 = arith.constant dense<0.000000e+00> : vector<128xf32>
    %94 = vector.multi_reduction <add>, %91, %cst_33 [1] : vector<128x32xf32> to vector<128xf32>
    %95 = vector.shape_cast %94 : vector<128xf32> to vector<128x1xf32>
    %cst_34 = arith.constant 3.200000e+01 : f32
    %96 = vector.broadcast %cst_34 : f32 to vector<128x1xf32>
    %97 = arith.divf %95, %96 : vector<128x1xf32>
    %98 = vector.broadcast %97 : vector<128x1xf32> to vector<128x32xf32>
    %99 = arith.subf %91, %98 : vector<128x32xf32>
    %100 = arith.mulf %99, %99 : vector<128x32xf32>
    %cst_35 = arith.constant dense<0.000000e+00> : vector<128xf32>
    %101 = vector.multi_reduction <add>, %100, %cst_35 [1] : vector<128x32xf32> to vector<128xf32>
    %102 = vector.shape_cast %101 : vector<128xf32> to vector<128x1xf32>
    %cst_36 = arith.constant 3.200000e+01 : f32
    %103 = vector.broadcast %cst_36 : f32 to vector<128x1xf32>
    %104 = arith.divf %102, %103 : vector<128x1xf32>
    %105 = vector.broadcast %97 : vector<128x1xf32> to vector<128x32xf32>
    %106 = arith.subf %91, %105 : vector<128x32xf32>
    %cst_37 = arith.constant 9.99999974E-6 : f32
    %107 = vector.broadcast %cst_37 : f32 to vector<128x1xf32>
    %108 = arith.addf %104, %107 : vector<128x1xf32>
    %109 = math.rsqrt %108 : vector<128x1xf32>
    %110 = vector.broadcast %109 : vector<128x1xf32> to vector<128x32xf32>
    %111 = arith.mulf %106, %110 : vector<128x32xf32>
    %112 = vector.broadcast %92 : vector<1x32xf32> to vector<128x32xf32>
    %113 = arith.mulf %111, %112 : vector<128x32xf32>
    %114 = vector.broadcast %93 : vector<1x32xf32> to vector<128x32xf32>
    %115 = arith.addf %113, %114 : vector<128x32xf32>
    %116 = vector.extract_strided_slice %13 {offsets = [104, 0], sizes = [32, 32], strides = [1, 1]} : vector<168x32xf32> to vector<32x32xf32>
    %117 = arith.truncf %115 : vector<128x32xf32> to vector<128x32xbf16>
    %118 = arith.truncf %116 : vector<32x32xf32> to vector<32x32xbf16>
    %cst_38 = arith.constant dense<0.000000e+00> : vector<128x32xf32>
    %119 = tpu.matmul %117, %118, %cst_38 {dimension_numbers = #tpu.dot_dimension_numbers<[1], [0], [0], [1], [0, 0, 1, 1], [], []>} : vector<128x32xbf16>, vector<32x32xbf16>, vector<128x32xf32> -> vector<128x32xf32>
    %120 = vector.extract_strided_slice %13 {offsets = [97, 0], sizes = [1, 32], strides = [1, 1]} : vector<168x32xf32> to vector<1x32xf32>
    %121 = vector.broadcast %120 : vector<1x32xf32> to vector<128x32xf32>
    %122 = arith.addf %119, %121 : vector<128x32xf32>
    %123 = arith.mulf %122, %122 : vector<128x32xf32>
    %124 = arith.mulf %122, %123 : vector<128x32xf32>
    %cst_39 = arith.constant 4.471500e-02 : f32
    %125 = vector.broadcast %cst_39 : f32 to vector<128x32xf32>
    %126 = arith.mulf %125, %124 : vector<128x32xf32>
    %127 = arith.addf %122, %126 : vector<128x32xf32>
    %cst_40 = arith.constant 0.797884583 : f32
    %128 = vector.broadcast %cst_40 : f32 to vector<128x32xf32>
    %129 = arith.mulf %128, %127 : vector<128x32xf32>
    %130 = math.tanh %129 : vector<128x32xf32>
    %cst_41 = arith.constant 1.000000e+00 : f32
    %131 = vector.broadcast %cst_41 : f32 to vector<128x32xf32>
    %132 = arith.addf %131, %130 : vector<128x32xf32>
    %cst_42 = arith.constant 5.000000e-01 : f32
    %133 = vector.broadcast %cst_42 : f32 to vector<128x32xf32>
    %134 = arith.mulf %133, %132 : vector<128x32xf32>
    %135 = arith.mulf %122, %134 : vector<128x32xf32>
    %136 = vector.extract_strided_slice %13 {offsets = [136, 0], sizes = [32, 32], strides = [1, 1]} : vector<168x32xf32> to vector<32x32xf32>
    %137 = arith.truncf %135 : vector<128x32xf32> to vector<128x32xbf16>
    %138 = arith.truncf %136 : vector<32x32xf32> to vector<32x32xbf16>
    %cst_43 = arith.constant dense<0.000000e+00> : vector<128x32xf32>
    %139 = tpu.matmul %137, %138, %cst_43 {dimension_numbers = #tpu.dot_dimension_numbers<[1], [0], [0], [1], [0, 0, 1, 1], [], []>} : vector<128x32xbf16>, vector<32x32xbf16>, vector<128x32xf32> -> vector<128x32xf32>
    %140 = vector.extract_strided_slice %13 {offsets = [98, 0], sizes = [1, 32], strides = [1, 1]} : vector<168x32xf32> to vector<1x32xf32>
    %141 = vector.broadcast %140 : vector<1x32xf32> to vector<128x32xf32>
    %142 = arith.addf %139, %141 : vector<128x32xf32>
    %143 = arith.addf %115, %142 : vector<128x32xf32>
    %144 = vector.extract_strided_slice %13 {offsets = [101, 0], sizes = [1, 32], strides = [1, 1]} : vector<168x32xf32> to vector<1x32xf32>
    %145 = vector.extract_strided_slice %13 {offsets = [102, 0], sizes = [1, 32], strides = [1, 1]} : vector<168x32xf32> to vector<1x32xf32>
    %cst_44 = arith.constant dense<0.000000e+00> : vector<128xf32>
    %146 = vector.multi_reduction <add>, %143, %cst_44 [1] : vector<128x32xf32> to vector<128xf32>
    %147 = vector.shape_cast %146 : vector<128xf32> to vector<128x1xf32>
    %cst_45 = arith.constant 3.200000e+01 : f32
    %148 = vector.broadcast %cst_45 : f32 to vector<128x1xf32>
    %149 = arith.divf %147, %148 : vector<128x1xf32>
    %150 = vector.broadcast %149 : vector<128x1xf32> to vector<128x32xf32>
    %151 = arith.subf %143, %150 : vector<128x32xf32>
    %152 = arith.mulf %151, %151 : vector<128x32xf32>
    %cst_46 = arith.constant dense<0.000000e+00> : vector<128xf32>
    %153 = vector.multi_reduction <add>, %152, %cst_46 [1] : vector<128x32xf32> to vector<128xf32>
    %154 = vector.shape_cast %153 : vector<128xf32> to vector<128x1xf32>
    %cst_47 = arith.constant 3.200000e+01 : f32
    %155 = vector.broadcast %cst_47 : f32 to vector<128x1xf32>
    %156 = arith.divf %154, %155 : vector<128x1xf32>
    %157 = vector.broadcast %149 : vector<128x1xf32> to vector<128x32xf32>
    %158 = arith.subf %143, %157 : vector<128x32xf32>
    %cst_48 = arith.constant 9.99999974E-6 : f32
    %159 = vector.broadcast %cst_48 : f32 to vector<128x1xf32>
    %160 = arith.addf %156, %159 : vector<128x1xf32>
    %161 = math.rsqrt %160 : vector<128x1xf32>
    %162 = vector.broadcast %161 : vector<128x1xf32> to vector<128x32xf32>
    %163 = arith.mulf %158, %162 : vector<128x32xf32>
    %164 = vector.broadcast %144 : vector<1x32xf32> to vector<128x32xf32>
    %165 = arith.mulf %163, %164 : vector<128x32xf32>
    %166 = vector.broadcast %145 : vector<1x32xf32> to vector<128x32xf32>
    %167 = arith.addf %165, %166 : vector<128x32xf32>
    %c1 = arith.constant 1 : index
    %c0_49 = arith.constant 0 : index
    %c0_50 = arith.constant 0 : index
    %168 = vector.load %arg4[%c1, %c0_49, %c0_50] : memref<2x40x96xf32, #tpu.memory_space<vmem>>, vector<1x40x96xf32>
    %169 = vector.shape_cast %168 : vector<1x40x96xf32> to vector<40x96xf32>
    %c1_51 = arith.constant 1 : index
    %c0_52 = arith.constant 0 : index
    %c0_53 = arith.constant 0 : index
    %170 = vector.load %arg5[%c1_51, %c0_52, %c0_53] : memref<2x168x32xf32, #tpu.memory_space<vmem>>, vector<1x168x32xf32>
    %171 = vector.shape_cast %170 : vector<1x168x32xf32> to vector<168x32xf32>
    %172 = vector.extract_strided_slice %169 {offsets = [0, 0], sizes = [32, 96], strides = [1, 1]} : vector<40x96xf32> to vector<32x96xf32>
    %173 = arith.truncf %167 : vector<128x32xf32> to vector<128x32xbf16>
    %174 = arith.truncf %172 : vector<32x96xf32> to vector<32x96xbf16>
    %cst_54 = arith.constant dense<0.000000e+00> : vector<128x96xf32>
    %175 = tpu.matmul %173, %174, %cst_54 {dimension_numbers = #tpu.dot_dimension_numbers<[1], [0], [0], [1], [0, 0, 1, 1], [], []>} : vector<128x32xbf16>, vector<32x96xbf16>, vector<128x96xf32> -> vector<128x96xf32>
    %176 = vector.extract_strided_slice %169 {offsets = [32, 0], sizes = [1, 96], strides = [1, 1]} : vector<40x96xf32> to vector<1x96xf32>
    %177 = vector.broadcast %176 : vector<1x96xf32> to vector<128x96xf32>
    %178 = arith.addf %175, %177 : vector<128x96xf32>
    %179 = vector.extract_strided_slice %178 {offsets = [0, 0], sizes = [128, 32], strides = [1, 1]} : vector<128x96xf32> to vector<128x32xf32>
    %cst_55 = arith.constant 0.000000e+00 : f32
    %180 = vector.broadcast %cst_55 : f32 to vector<128x32xf32>
    %181 = arith.cmpf ogt, %179, %180 : vector<128x32xf32>
    %cst_56 = arith.constant 1.000000e+00 : f32
    %182 = vector.broadcast %cst_56 : f32 to vector<128x32xf32>
    %183 = arith.addf %179, %182 : vector<128x32xf32>
    %184 = math.exp %179 : vector<128x32xf32>
    %185 = arith.select %181, %183, %184 : vector<128x32xi1>, vector<128x32xf32>
    %186 = vector.extract_strided_slice %178 {offsets = [0, 32], sizes = [128, 32], strides = [1, 1]} : vector<128x96xf32> to vector<128x32xf32>
    %cst_57 = arith.constant 0.000000e+00 : f32
    %187 = vector.broadcast %cst_57 : f32 to vector<128x32xf32>
    %188 = arith.cmpf ogt, %186, %187 : vector<128x32xf32>
    %cst_58 = arith.constant 1.000000e+00 : f32
    %189 = vector.broadcast %cst_58 : f32 to vector<128x32xf32>
    %190 = arith.addf %186, %189 : vector<128x32xf32>
    %191 = math.exp %186 : vector<128x32xf32>
    %192 = arith.select %188, %190, %191 : vector<128x32xi1>, vector<128x32xf32>
    %193 = vector.extract_strided_slice %178 {offsets = [0, 64], sizes = [128, 32], strides = [1, 1]} : vector<128x96xf32> to vector<128x32xf32>
    %194 = vector.extract_strided_slice %185 {offsets = [0, 0], sizes = [64, 32], strides = [1, 1]} : vector<128x32xf32> to vector<64x32xf32>
    %195 = vector.extract_strided_slice %192 {offsets = [0, 0], sizes = [64, 32], strides = [1, 1]} : vector<128x32xf32> to vector<64x32xf32>
    %196 = vector.extract_strided_slice %193 {offsets = [0, 0], sizes = [64, 32], strides = [1, 1]} : vector<128x32xf32> to vector<64x32xf32>
    %197 = arith.truncf %195 : vector<64x32xf32> to vector<64x32xbf16>
    %198 = arith.truncf %196 : vector<64x32xf32> to vector<64x32xbf16>
    %cst_59 = arith.constant dense<0.000000e+00> : vector<32x32xf32>
    %199 = tpu.matmul %197, %198, %cst_59 {dimension_numbers = #tpu.dot_dimension_numbers<[0], [0], [1], [1], [0, 1, 1, 1], [], []>} : vector<64x32xbf16>, vector<64x32xbf16>, vector<32x32xf32> -> vector<32x32xf32>
    %200 = arith.mulf %199, %0 : vector<32x32xf32>
    %cst_60 = arith.constant dense<0.000000e+00> : vector<32xf32>
    %201 = vector.multi_reduction <add>, %195, %cst_60 [0] : vector<64x32xf32> to vector<32xf32>
    %202 = vector.shape_cast %201 : vector<32xf32> to vector<1x32xf32>
    %203 = vector.broadcast %202 : vector<1x32xf32> to vector<64x32xf32>
    %204 = arith.mulf %194, %203 : vector<64x32xf32>
    %205 = arith.truncf %204 : vector<64x32xf32> to vector<64x32xbf16>
    %206 = arith.truncf %0 : vector<32x32xf32> to vector<32x32xbf16>
    %cst_61 = arith.constant dense<0.000000e+00> : vector<64x32xf32>
    %207 = tpu.matmul %205, %206, %cst_61 {dimension_numbers = #tpu.dot_dimension_numbers<[1], [0], [0], [1], [0, 0, 1, 1], [], []>} : vector<64x32xbf16>, vector<32x32xbf16>, vector<64x32xf32> -> vector<64x32xf32>
    %cst_62 = arith.constant 9.99999997E-7 : f32
    %208 = vector.broadcast %cst_62 : f32 to vector<64x32xf32>
    %209 = arith.addf %207, %208 : vector<64x32xf32>
    %210 = arith.truncf %194 : vector<64x32xf32> to vector<64x32xbf16>
    %211 = arith.truncf %200 : vector<32x32xf32> to vector<32x32xbf16>
    %cst_63 = arith.constant dense<0.000000e+00> : vector<64x32xf32>
    %212 = tpu.matmul %210, %211, %cst_63 {dimension_numbers = #tpu.dot_dimension_numbers<[1], [0], [0], [1], [0, 0, 1, 1], [], []>} : vector<64x32xbf16>, vector<32x32xbf16>, vector<64x32xf32> -> vector<64x32xf32>
    %213 = tpu.reciprocal %209 {approx = true} : vector<64x32xf32> -> vector<64x32xf32>
    %214 = arith.mulf %212, %213 : vector<64x32xf32>
    %215 = vector.extract_strided_slice %185 {offsets = [64, 0], sizes = [64, 32], strides = [1, 1]} : vector<128x32xf32> to vector<64x32xf32>
    %216 = vector.extract_strided_slice %192 {offsets = [64, 0], sizes = [64, 32], strides = [1, 1]} : vector<128x32xf32> to vector<64x32xf32>
    %217 = vector.extract_strided_slice %193 {offsets = [64, 0], sizes = [64, 32], strides = [1, 1]} : vector<128x32xf32> to vector<64x32xf32>
    %218 = arith.truncf %216 : vector<64x32xf32> to vector<64x32xbf16>
    %219 = arith.truncf %217 : vector<64x32xf32> to vector<64x32xbf16>
    %cst_64 = arith.constant dense<0.000000e+00> : vector<32x32xf32>
    %220 = tpu.matmul %218, %219, %cst_64 {dimension_numbers = #tpu.dot_dimension_numbers<[0], [0], [1], [1], [0, 1, 1, 1], [], []>} : vector<64x32xbf16>, vector<64x32xbf16>, vector<32x32xf32> -> vector<32x32xf32>
    %221 = arith.mulf %220, %0 : vector<32x32xf32>
    %cst_65 = arith.constant dense<0.000000e+00> : vector<32xf32>
    %222 = vector.multi_reduction <add>, %216, %cst_65 [0] : vector<64x32xf32> to vector<32xf32>
    %223 = vector.shape_cast %222 : vector<32xf32> to vector<1x32xf32>
    %224 = vector.broadcast %223 : vector<1x32xf32> to vector<64x32xf32>
    %225 = arith.mulf %215, %224 : vector<64x32xf32>
    %226 = arith.truncf %225 : vector<64x32xf32> to vector<64x32xbf16>
    %227 = arith.truncf %0 : vector<32x32xf32> to vector<32x32xbf16>
    %cst_66 = arith.constant dense<0.000000e+00> : vector<64x32xf32>
    %228 = tpu.matmul %226, %227, %cst_66 {dimension_numbers = #tpu.dot_dimension_numbers<[1], [0], [0], [1], [0, 0, 1, 1], [], []>} : vector<64x32xbf16>, vector<32x32xbf16>, vector<64x32xf32> -> vector<64x32xf32>
    %cst_67 = arith.constant 9.99999997E-7 : f32
    %229 = vector.broadcast %cst_67 : f32 to vector<64x32xf32>
    %230 = arith.addf %228, %229 : vector<64x32xf32>
    %231 = arith.truncf %215 : vector<64x32xf32> to vector<64x32xbf16>
    %232 = arith.truncf %221 : vector<32x32xf32> to vector<32x32xbf16>
    %cst_68 = arith.constant dense<0.000000e+00> : vector<64x32xf32>
    %233 = tpu.matmul %231, %232, %cst_68 {dimension_numbers = #tpu.dot_dimension_numbers<[1], [0], [0], [1], [0, 0, 1, 1], [], []>} : vector<64x32xbf16>, vector<32x32xbf16>, vector<64x32xf32> -> vector<64x32xf32>
    %234 = tpu.reciprocal %230 {approx = true} : vector<64x32xf32> -> vector<64x32xf32>
    %235 = arith.mulf %233, %234 : vector<64x32xf32>
    %236 = tpu.concatenate %214, %235 in 0 : vector<64x32xf32>, vector<64x32xf32> -> vector<128x32xf32>
    %237 = arith.truncf %236 : vector<128x32xf32> to vector<128x32xbf16>
    %cst_69 = arith.constant dense<0.000000e+00> : vector<128x32xf32>
    %238 = tpu.matmul %1, %237, %cst_69 {dimension_numbers = #tpu.dot_dimension_numbers<[1], [0], [0], [1], [0, 0, 1, 1], [], []>} : vector<128x128xbf16>, vector<128x32xbf16>, vector<128x32xf32> -> vector<128x32xf32>
    %239 = arith.truncf %236 : vector<128x32xf32> to vector<128x32xbf16>
    %cst_70 = arith.constant dense<0.000000e+00> : vector<128x32xf32>
    %240 = tpu.matmul %2, %239, %cst_70 {dimension_numbers = #tpu.dot_dimension_numbers<[1], [0], [0], [1], [0, 0, 1, 1], [], []>} : vector<128x128xbf16>, vector<128x32xbf16>, vector<128x32xf32> -> vector<128x32xf32>
    %241 = tpu.concatenate %236, %238, %240 in 1 : vector<128x32xf32>, vector<128x32xf32>, vector<128x32xf32> -> vector<128x96xf32>
    %242 = vector.extract_strided_slice %171 {offsets = [0, 0], sizes = [96, 32], strides = [1, 1]} : vector<168x32xf32> to vector<96x32xf32>
    %243 = arith.truncf %241 : vector<128x96xf32> to vector<128x96xbf16>
    %244 = arith.truncf %242 : vector<96x32xf32> to vector<96x32xbf16>
    %cst_71 = arith.constant dense<0.000000e+00> : vector<128x32xf32>
    %245 = tpu.matmul %243, %244, %cst_71 {dimension_numbers = #tpu.dot_dimension_numbers<[1], [0], [0], [1], [0, 0, 1, 1], [], []>} : vector<128x96xbf16>, vector<96x32xbf16>, vector<128x32xf32> -> vector<128x32xf32>
    %246 = vector.extract_strided_slice %171 {offsets = [96, 0], sizes = [1, 32], strides = [1, 1]} : vector<168x32xf32> to vector<1x32xf32>
    %247 = vector.broadcast %246 : vector<1x32xf32> to vector<128x32xf32>
    %248 = arith.addf %245, %247 : vector<128x32xf32>
    %249 = arith.addf %167, %248 : vector<128x32xf32>
    %250 = vector.extract_strided_slice %171 {offsets = [99, 0], sizes = [1, 32], strides = [1, 1]} : vector<168x32xf32> to vector<1x32xf32>
    %251 = vector.extract_strided_slice %171 {offsets = [100, 0], sizes = [1, 32], strides = [1, 1]} : vector<168x32xf32> to vector<1x32xf32>
    %cst_72 = arith.constant dense<0.000000e+00> : vector<128xf32>
    %252 = vector.multi_reduction <add>, %249, %cst_72 [1] : vector<128x32xf32> to vector<128xf32>
    %253 = vector.shape_cast %252 : vector<128xf32> to vector<128x1xf32>
    %cst_73 = arith.constant 3.200000e+01 : f32
    %254 = vector.broadcast %cst_73 : f32 to vector<128x1xf32>
    %255 = arith.divf %253, %254 : vector<128x1xf32>
    %256 = vector.broadcast %255 : vector<128x1xf32> to vector<128x32xf32>
    %257 = arith.subf %249, %256 : vector<128x32xf32>
    %258 = arith.mulf %257, %257 : vector<128x32xf32>
    %cst_74 = arith.constant dense<0.000000e+00> : vector<128xf32>
    %259 = vector.multi_reduction <add>, %258, %cst_74 [1] : vector<128x32xf32> to vector<128xf32>
    %260 = vector.shape_cast %259 : vector<128xf32> to vector<128x1xf32>
    %cst_75 = arith.constant 3.200000e+01 : f32
    %261 = vector.broadcast %cst_75 : f32 to vector<128x1xf32>
    %262 = arith.divf %260, %261 : vector<128x1xf32>
    %263 = vector.broadcast %255 : vector<128x1xf32> to vector<128x32xf32>
    %264 = arith.subf %249, %263 : vector<128x32xf32>
    %cst_76 = arith.constant 9.99999974E-6 : f32
    %265 = vector.broadcast %cst_76 : f32 to vector<128x1xf32>
    %266 = arith.addf %262, %265 : vector<128x1xf32>
    %267 = math.rsqrt %266 : vector<128x1xf32>
    %268 = vector.broadcast %267 : vector<128x1xf32> to vector<128x32xf32>
    %269 = arith.mulf %264, %268 : vector<128x32xf32>
    %270 = vector.broadcast %250 : vector<1x32xf32> to vector<128x32xf32>
    %271 = arith.mulf %269, %270 : vector<128x32xf32>
    %272 = vector.broadcast %251 : vector<1x32xf32> to vector<128x32xf32>
    %273 = arith.addf %271, %272 : vector<128x32xf32>
    %274 = vector.extract_strided_slice %171 {offsets = [104, 0], sizes = [32, 32], strides = [1, 1]} : vector<168x32xf32> to vector<32x32xf32>
    %275 = arith.truncf %273 : vector<128x32xf32> to vector<128x32xbf16>
    %276 = arith.truncf %274 : vector<32x32xf32> to vector<32x32xbf16>
    %cst_77 = arith.constant dense<0.000000e+00> : vector<128x32xf32>
    %277 = tpu.matmul %275, %276, %cst_77 {dimension_numbers = #tpu.dot_dimension_numbers<[1], [0], [0], [1], [0, 0, 1, 1], [], []>} : vector<128x32xbf16>, vector<32x32xbf16>, vector<128x32xf32> -> vector<128x32xf32>
    %278 = vector.extract_strided_slice %171 {offsets = [97, 0], sizes = [1, 32], strides = [1, 1]} : vector<168x32xf32> to vector<1x32xf32>
    %279 = vector.broadcast %278 : vector<1x32xf32> to vector<128x32xf32>
    %280 = arith.addf %277, %279 : vector<128x32xf32>
    %281 = arith.mulf %280, %280 : vector<128x32xf32>
    %282 = arith.mulf %280, %281 : vector<128x32xf32>
    %cst_78 = arith.constant 4.471500e-02 : f32
    %283 = vector.broadcast %cst_78 : f32 to vector<128x32xf32>
    %284 = arith.mulf %283, %282 : vector<128x32xf32>
    %285 = arith.addf %280, %284 : vector<128x32xf32>
    %cst_79 = arith.constant 0.797884583 : f32
    %286 = vector.broadcast %cst_79 : f32 to vector<128x32xf32>
    %287 = arith.mulf %286, %285 : vector<128x32xf32>
    %288 = math.tanh %287 : vector<128x32xf32>
    %cst_80 = arith.constant 1.000000e+00 : f32
    %289 = vector.broadcast %cst_80 : f32 to vector<128x32xf32>
    %290 = arith.addf %289, %288 : vector<128x32xf32>
    %cst_81 = arith.constant 5.000000e-01 : f32
    %291 = vector.broadcast %cst_81 : f32 to vector<128x32xf32>
    %292 = arith.mulf %291, %290 : vector<128x32xf32>
    %293 = arith.mulf %280, %292 : vector<128x32xf32>
    %294 = vector.extract_strided_slice %171 {offsets = [136, 0], sizes = [32, 32], strides = [1, 1]} : vector<168x32xf32> to vector<32x32xf32>
    %295 = arith.truncf %293 : vector<128x32xf32> to vector<128x32xbf16>
    %296 = arith.truncf %294 : vector<32x32xf32> to vector<32x32xbf16>
    %cst_82 = arith.constant dense<0.000000e+00> : vector<128x32xf32>
    %297 = tpu.matmul %295, %296, %cst_82 {dimension_numbers = #tpu.dot_dimension_numbers<[1], [0], [0], [1], [0, 0, 1, 1], [], []>} : vector<128x32xbf16>, vector<32x32xbf16>, vector<128x32xf32> -> vector<128x32xf32>
    %298 = vector.extract_strided_slice %171 {offsets = [98, 0], sizes = [1, 32], strides = [1, 1]} : vector<168x32xf32> to vector<1x32xf32>
    %299 = vector.broadcast %298 : vector<1x32xf32> to vector<128x32xf32>
    %300 = arith.addf %297, %299 : vector<128x32xf32>
    %301 = arith.addf %273, %300 : vector<128x32xf32>
    %302 = vector.extract_strided_slice %171 {offsets = [101, 0], sizes = [1, 32], strides = [1, 1]} : vector<168x32xf32> to vector<1x32xf32>
    %303 = vector.extract_strided_slice %171 {offsets = [102, 0], sizes = [1, 32], strides = [1, 1]} : vector<168x32xf32> to vector<1x32xf32>
    %cst_83 = arith.constant dense<0.000000e+00> : vector<128xf32>
    %304 = vector.multi_reduction <add>, %301, %cst_83 [1] : vector<128x32xf32> to vector<128xf32>
    %305 = vector.shape_cast %304 : vector<128xf32> to vector<128x1xf32>
    %cst_84 = arith.constant 3.200000e+01 : f32
    %306 = vector.broadcast %cst_84 : f32 to vector<128x1xf32>
    %307 = arith.divf %305, %306 : vector<128x1xf32>
    %308 = vector.broadcast %307 : vector<128x1xf32> to vector<128x32xf32>
    %309 = arith.subf %301, %308 : vector<128x32xf32>
    %310 = arith.mulf %309, %309 : vector<128x32xf32>
    %cst_85 = arith.constant dense<0.000000e+00> : vector<128xf32>
    %311 = vector.multi_reduction <add>, %310, %cst_85 [1] : vector<128x32xf32> to vector<128xf32>
    %312 = vector.shape_cast %311 : vector<128xf32> to vector<128x1xf32>
    %cst_86 = arith.constant 3.200000e+01 : f32
    %313 = vector.broadcast %cst_86 : f32 to vector<128x1xf32>
    %314 = arith.divf %312, %313 : vector<128x1xf32>
    %315 = vector.broadcast %307 : vector<128x1xf32> to vector<128x32xf32>
    %316 = arith.subf %301, %315 : vector<128x32xf32>
    %cst_87 = arith.constant 9.99999974E-6 : f32
    %317 = vector.broadcast %cst_87 : f32 to vector<128x1xf32>
    %318 = arith.addf %314, %317 : vector<128x1xf32>
    %319 = math.rsqrt %318 : vector<128x1xf32>
    %320 = vector.broadcast %319 : vector<128x1xf32> to vector<128x32xf32>
    %321 = arith.mulf %316, %320 : vector<128x32xf32>
    %322 = vector.broadcast %302 : vector<1x32xf32> to vector<128x32xf32>
    %323 = arith.mulf %321, %322 : vector<128x32xf32>
    %324 = vector.broadcast %303 : vector<1x32xf32> to vector<128x32xf32>
    %325 = arith.addf %323, %324 : vector<128x32xf32>
    %c168 = arith.constant 168 : index
    %c0_88 = arith.constant 0 : index
    %326 = vector.load %arg1[%c168, %c0_88] : memref<240x32xf32, #tpu.memory_space<vmem>>, vector<1x32xf32>
    %c169 = arith.constant 169 : index
    %c0_89 = arith.constant 0 : index
    %327 = vector.load %arg1[%c169, %c0_89] : memref<240x32xf32, #tpu.memory_space<vmem>>, vector<1x32xf32>
    %cst_90 = arith.constant dense<0.000000e+00> : vector<128xf32>
    %328 = vector.multi_reduction <add>, %325, %cst_90 [1] : vector<128x32xf32> to vector<128xf32>
    %329 = vector.shape_cast %328 : vector<128xf32> to vector<128x1xf32>
    %cst_91 = arith.constant 3.200000e+01 : f32
    %330 = vector.broadcast %cst_91 : f32 to vector<128x1xf32>
    %331 = arith.divf %329, %330 : vector<128x1xf32>
    %332 = vector.broadcast %331 : vector<128x1xf32> to vector<128x32xf32>
    %333 = arith.subf %325, %332 : vector<128x32xf32>
    %334 = arith.mulf %333, %333 : vector<128x32xf32>
    %cst_92 = arith.constant dense<0.000000e+00> : vector<128xf32>
    %335 = vector.multi_reduction <add>, %334, %cst_92 [1] : vector<128x32xf32> to vector<128xf32>
    %336 = vector.shape_cast %335 : vector<128xf32> to vector<128x1xf32>
    %cst_93 = arith.constant 3.200000e+01 : f32
    %337 = vector.broadcast %cst_93 : f32 to vector<128x1xf32>
    %338 = arith.divf %336, %337 : vector<128x1xf32>
    %339 = vector.broadcast %331 : vector<128x1xf32> to vector<128x32xf32>
    %340 = arith.subf %325, %339 : vector<128x32xf32>
    %cst_94 = arith.constant 9.99999974E-6 : f32
    %341 = vector.broadcast %cst_94 : f32 to vector<128x1xf32>
    %342 = arith.addf %338, %341 : vector<128x1xf32>
    %343 = math.rsqrt %342 : vector<128x1xf32>
    %344 = vector.broadcast %343 : vector<128x1xf32> to vector<128x32xf32>
    %345 = arith.mulf %340, %344 : vector<128x32xf32>
    %346 = vector.broadcast %326 : vector<1x32xf32> to vector<128x32xf32>
    %347 = arith.mulf %345, %346 : vector<128x32xf32>
    %348 = vector.broadcast %327 : vector<1x32xf32> to vector<128x32xf32>
    %349 = arith.addf %347, %348 : vector<128x32xf32>
    %c256 = arith.constant 256 : index
    %c0_95 = arith.constant 0 : index
    %350 = vector.load %arg2[%c256, %c0_95] : memref<320x128xbf16, #tpu.memory_space<vmem>>, vector<64x128xbf16>
    %351 = arith.truncf %349 : vector<128x32xf32> to vector<128x32xbf16>
    %cst_96 = arith.constant dense<0.000000e+00> : vector<64x32xf32>
    %352 = tpu.matmul %350, %351, %cst_96 {dimension_numbers = #tpu.dot_dimension_numbers<[1], [0], [0], [1], [0, 0, 1, 1], [], []>} : vector<64x128xbf16>, vector<128x32xbf16>, vector<64x32xf32> -> vector<64x32xf32>
    %c176 = arith.constant 176 : index
    %c0_97 = arith.constant 0 : index
    %353 = vector.load %arg1[%c176, %c0_97] : memref<240x32xf32, #tpu.memory_space<vmem>>, vector<64x32xf32>
    %354 = arith.addf %352, %353 : vector<64x32xf32>
    %cst_98 = arith.constant 0.000000e+00 : f32
    %355 = vector.broadcast %cst_98 : f32 to vector<64x32xf32>
    %356 = arith.maximumf %354, %355 : vector<64x32xf32>
    %c0_99 = arith.constant 0 : index
    %c0_100 = arith.constant 0 : index
    %357 = vector.load %arg3[%c0_99, %c0_100] : memref<40x2xf32, #tpu.memory_space<vmem>>, vector<40x2xf32>
    %358 = vector.extract_strided_slice %357 {offsets = [0, 0], sizes = [32, 2], strides = [1, 1]} : vector<40x2xf32> to vector<32x2xf32>
    %359 = arith.truncf %356 : vector<64x32xf32> to vector<64x32xbf16>
    %360 = arith.truncf %358 : vector<32x2xf32> to vector<32x2xbf16>
    %cst_101 = arith.constant dense<0.000000e+00> : vector<64x2xf32>
    %361 = tpu.matmul %359, %360, %cst_101 {dimension_numbers = #tpu.dot_dimension_numbers<[1], [0], [0], [1], [0, 0, 1, 1], [], []>} : vector<64x32xbf16>, vector<32x2xbf16>, vector<64x2xf32> -> vector<64x2xf32>
    %362 = vector.extract_strided_slice %357 {offsets = [32, 0], sizes = [1, 2], strides = [1, 1]} : vector<40x2xf32> to vector<1x2xf32>
    %363 = vector.broadcast %362 : vector<1x2xf32> to vector<64x2xf32>
    %364 = arith.addf %361, %363 : vector<64x2xf32>
    %c0_102 = arith.constant 0 : index
    %c0_103 = arith.constant 0 : index
    %365 = vector.load %arg6[%c0_102, %c0_103] : memref<64x2xf32, #tpu.memory_space<vmem>>, vector<64x2xf32>
    tpu.vector_store %arg6[%c0_102, %c0_103], %364 {strides = array<i32>} : memref<64x2xf32, #tpu.memory_space<vmem>>, vector<64x2xf32>,
    return
  }
}

</mosaic_0001>

<llo_original>
// kernel: polla_adpadj_forward.1
$region0: #{polla_adpadj_forward.1}
  #allocation0 [shape = 'u32[]', space=smem, size = 0x4, offset = 0x4, fixed_abs, tag = 'smem constant byte address 0x4 - core index']
  #allocation1 [shape = 'u32[72,128]{1,0:T(1,128)}', space=vmem, size = 0x9000, scoped, tag = 'internal scratch']
  %s0 = inlined_call_operand.vmem [shape: f32[128,8], index: 0, kind: input, shape index: {}]
  %s1 = inlined_call_operand.vmem [shape: f32[240,32], index: 1, kind: input, shape index: {}]
  %s2 = inlined_call_operand.vmem [shape: bf16[320,128], index: 2, kind: input, shape index: {}]
  %s3 = inlined_call_operand.vmem [shape: f32[40,2], index: 3, kind: input, shape index: {}]
  %s4 = inlined_call_operand.vmem [shape: f32[2,40,96], index: 4, kind: input, shape index: {}]
  %s5 = inlined_call_operand.vmem [shape: f32[2,168,32], index: 5, kind: input, shape index: {}]
  %s6 = inlined_call_operand.vmem [shape: f32[64,2], index: 6, kind: output, shape index: {}]
  %s7 = sld [smem:[#allocation0]]
  $region34: #{polla_adpadj_forward.1} parent=0
    _
  %s9 = ssub.s32 1, %s7
  %s10 = scalar_select 0, %s9, %s7
  // Predicated region
  $region2: #{polla_adpadj_forward.1} parent=0 // pred_check
    _
  $region3: #{polla_adpadj_forward.1} parent=0 // pred_check_branch
    %12 = sbr.rel (0) target = $region5
  $region4: #{polla_adpadj_forward.1} parent=0 // pred_region
    _
  $region5: #{polla_adpadj_forward.1} parent=0 // pred_fallthru
    _
  // Predicated region
  $region6: #{polla_adpadj_forward.1} parent=0 // pred_check
    _
  $region7: #{polla_adpadj_forward.1} parent=0 // pred_check_branch
    %14 = sbr.rel (0) target = $region9
  $region8: #{polla_adpadj_forward.1} parent=0 // pred_region
    _
  $region9: #{polla_adpadj_forward.1} parent=0 // pred_fallthru
    _
  // Predicated region
  $region10: #{polla_adpadj_forward.1} parent=0 // pred_check
    _
  $region11: #{polla_adpadj_forward.1} parent=0 // pred_check_branch
    %16 = sbr.rel (0) target = $region13
  $region12: #{polla_adpadj_forward.1} parent=0 // pred_region
    _
  $region13: #{polla_adpadj_forward.1} parent=0 // pred_fallthru
    _
  // Predicated region
  $region14: #{polla_adpadj_forward.1} parent=0 // pred_check
    _
  $region15: #{polla_adpadj_forward.1} parent=0 // pred_check_branch
    %18 = sbr.rel (0) target = $region17
  $region16: #{polla_adpadj_forward.1} parent=0 // pred_region
    _
  $region17: #{polla_adpadj_forward.1} parent=0 // pred_fallthru
    _
  // Predicated region
  $region18: #{polla_adpadj_forward.1} parent=0 // pred_check
    _
  $region19: #{polla_adpadj_forward.1} parent=0 // pred_check_branch
    %20 = sbr.rel (0) target = $region21
  $region20: #{polla_adpadj_forward.1} parent=0 // pred_region
    _
  $region21: #{polla_adpadj_forward.1} parent=0 // pred_fallthru
    _
  // Predicated region
  $region22: #{polla_adpadj_forward.1} parent=0 // pred_check
    _
  $region23: #{polla_adpadj_forward.1} parent=0 // pred_check_branch
    %22 = sbr.rel (0) target = $region25
  $region24: #{polla_adpadj_forward.1} parent=0 // pred_region
    _
  $region25: #{polla_adpadj_forward.1} parent=0 // pred_fallthru
    _
  %v24 = vld [vmem:[%s1 + $0x80] sm:$0xff]
  %v25 = vld [vmem:[%s1 + $0x88] sm:$0xff]
  %v26 = vld [vmem:[%s1 + $0x90] sm:$0xff]
  %v27 = vld [vmem:[%s1 + $0x98] sm:$0xff]
  %v28 = vld [vmem:[%s2] sm:$0xf]
  %v29 = vld [vmem:[%s2 + $0x4] sm:$0xf]
  %v30 = vld [vmem:[%s2 + $0x8] sm:$0xf]
  %v31 = vld [vmem:[%s2 + $0xc] sm:$0xf]
  %v32 = vld [vmem:[%s2 + $0x10] sm:$0xf]
  %v33 = vld [vmem:[%s2 + $0x14] sm:$0xf]
  %v34 = vld [vmem:[%s2 + $0x18] sm:$0xf]
  %v35 = vld [vmem:[%s2 + $0x1c] sm:$0xf]
  %v36 = vld [vmem:[%s2 + $0x20] sm:$0xf]
  %v37 = vld [vmem:[%s2 + $0x24] sm:$0xf]
  %v38 = vld [vmem:[%s2 + $0x28] sm:$0xf]
  %v39 = vld [vmem:[%s2 + $0x2c] sm:$0xf]
  %v40 = vld [vmem:[%s2 + $0x30] sm:$0xf]
  %v41 = vld [vmem:[%s2 + $0x34] sm:$0xf]
  %v42 = vld [vmem:[%s2 + $0x38] sm:$0xf]
  %v43 = vld [vmem:[%s2 + $0x3c] sm:$0xf]
  %v44 = vld [vmem:[%s2 + $0x40] sm:$0xf]
  %v45 = vld [vmem:[%s2 + $0x44] sm:$0xf]
  %v46 = vld [vmem:[%s2 + $0x48] sm:$0xf]
  %v47 = vld [vmem:[%s2 + $0x4c] sm:$0xf]
  %v48 = vld [vmem:[%s2 + $0x50] sm:$0xf]
  %v49 = vld [vmem:[%s2 + $0x54] sm:$0xf]
  %v50 = vld [vmem:[%s2 + $0x58] sm:$0xf]
  %v51 = vld [vmem:[%s2 + $0x5c] sm:$0xf]
  %v52 = vld [vmem:[%s2 + $0x60] sm:$0xf]
  %v53 = vld [vmem:[%s2 + $0x64] sm:$0xf]
  %v54 = vld [vmem:[%s2 + $0x68] sm:$0xf]
  %v55 = vld [vmem:[%s2 + $0x6c] sm:$0xf]
  %v56 = vld [vmem:[%s2 + $0x70] sm:$0xf]
  %v57 = vld [vmem:[%s2 + $0x74] sm:$0xf]
  %v58 = vld [vmem:[%s2 + $0x78] sm:$0xf]
  %v59 = vld [vmem:[%s2 + $0x7c] sm:$0xf]
  %v60 = vld [vmem:[%s0] sm:$0xff]
  %v61 = vld [vmem:[%s0 + $0x8] sm:$0xff]
  %v62 = vld [vmem:[%s0 + $0x10] sm:$0xff]
  %v63 = vld [vmem:[%s0 + $0x18] sm:$0xff]
  %v64 = vld [vmem:[%s0 + $0x20] sm:$0xff]
  %v65 = vld [vmem:[%s0 + $0x28] sm:$0xff]
  %v66 = vld [vmem:[%s0 + $0x30] sm:$0xff]
  %v67 = vld [vmem:[%s0 + $0x38] sm:$0xff]
  %v68 = vld [vmem:[%s0 + $0x40] sm:$0xff]
  %v69 = vld [vmem:[%s0 + $0x48] sm:$0xff]
  %v70 = vld [vmem:[%s0 + $0x50] sm:$0xff]
  %v71 = vld [vmem:[%s0 + $0x58] sm:$0xff]
  %v72 = vld [vmem:[%s0 + $0x60] sm:$0xff]
  %v73 = vld [vmem:[%s0 + $0x68] sm:$0xff]
  %v74 = vld [vmem:[%s0 + $0x70] sm:$0xff]
  %v75 = vld [vmem:[%s0 + $0x78] sm:$0xff]
  %v76 = vld [vmem:[%s1 + $0xa0] sm:$0xff]
  %v77 = vpack.c.bf16 %v61, %v60
  %v78 = vpack.c.bf16 %v63, %v62
  %v79 = vpack.c.bf16 %v65, %v64
  %v80 = vpack.c.bf16 %v67, %v66
  %v81 = vpack.c.bf16 %v69, %v68
  %v82 = vpack.c.bf16 %v71, %v70
  %v83 = vpack.c.bf16 %v73, %v72
  %v84 = vpack.c.bf16 %v75, %v74
  %v85 = vpack.c.bf16 %v76, %v76
  %v86 = vld [vmem:[%s1] sm:$0xff]
  %v87 = vld [vmem:[%s1 + $0x8] sm:$0xff]
  %v88 = vld [vmem:[%s1 + $0x10] sm:$0xff]
  %v89 = vld [vmem:[%s1 + $0x18] sm:$0xff]
  %v90 = vld [vmem:[%s1 + $0x20] sm:$0xff]
  %v91 = vld [vmem:[%s1 + $0x28] sm:$0xff]
  %v92 = vld [vmem:[%s1 + $0x30] sm:$0xff]
  %v93 = vld [vmem:[%s1 + $0x38] sm:$0xff]
  %v94 = vld [vmem:[%s1 + $0x40] sm:$0xff]
  %v95 = vld [vmem:[%s1 + $0x48] sm:$0xff]
  %v96 = vld [vmem:[%s1 + $0x50] sm:$0xff]
  %v97 = vld [vmem:[%s1 + $0x58] sm:$0xff]
  %v98 = vld [vmem:[%s1 + $0x60] sm:$0xff]
  %v99 = vld [vmem:[%s1 + $0x68] sm:$0xff]
  %v100 = vld [vmem:[%s1 + $0x70] sm:$0xff]
  %v101 = vld [vmem:[%s1 + $0x78] sm:$0xff]
  %vm102 = vcmask 64512
  %v104 = vsel %vm102, %v77, 0
  %v107 = vsel %vm102, %v78, 0
  %v110 = vsel %vm102, %v79, 0
  %v113 = vsel %vm102, %v80, 0
  %v116 = vsel %vm102, %v81, 0
  %v119 = vsel %vm102, %v82, 0
  %v122 = vsel %vm102, %v83, 0
  %v125 = vsel %vm102, %v84, 0
  %vm127 = vcmask 1043456
  %v129 = vsel %vm127, %v85, 0
  %131 = vmatpush.bf16.msra.mxu0 0
  %132 = vmatpush.bf16.msra.mxu0 0
  %133 = vmatpush.bf16.msra.mxu0 0
  %134 = vmatpush.bf16.msra.mxu0 0
  %135 = vmatpush.bf16.msra.mxu0 0
  %136 = vmatpush.bf16.msra.mxu0 0
  %137 = vmatpush.bf16.msra.mxu0 0
  %138 = vmatpush.bf16.msra.mxu0 %v129
  %139 = vmatmul.bf16.gmra.mxu0 %v104
  %v140 = vpop.f32.mrf.mxu0
  %v141 = vadd.f32 %v86, %v140
  %v142 = vpop.f32.mrf.mxu0
  %v143 = vadd.f32 %v87, %v142
  %144 = vmatmul.bf16.gmra.mxu0 %v107
  %v145 = vpop.f32.mrf.mxu0
  %v146 = vadd.f32 %v88, %v145
  %v147 = vpop.f32.mrf.mxu0
  %v148 = vadd.f32 %v89, %v147
  %149 = vmatmul.bf16.gmra.mxu0 %v110
  %v150 = vpop.f32.mrf.mxu0
  %v151 = vadd.f32 %v90, %v150
  %v152 = vpop.f32.mrf.mxu0
  %v153 = vadd.f32 %v91, %v152
  %154 = vmatmul.bf16.gmra.mxu0 %v113
  %v155 = vpop.f32.mrf.mxu0
  %v156 = vadd.f32 %v92, %v155
  %v157 = vpop.f32.mrf.mxu0
  %v158 = vadd.f32 %v93, %v157
  %159 = vmatmul.bf16.gmra.mxu0 %v116
  %v160 = vpop.f32.mrf.mxu0
  %v161 = vadd.f32 %v94, %v160
  %v162 = vpop.f32.mrf.mxu0
  %v163 = vadd.f32 %v95, %v162
  %164 = vmatmul.bf16.gmra.mxu0 %v119
  %v165 = vpop.f32.mrf.mxu0
  %v166 = vadd.f32 %v96, %v165
  %v167 = vpop.f32.mrf.mxu0
  %v168 = vadd.f32 %v97, %v167
  %169 = vmatmul.bf16.gmra.mxu0 %v122
  %v170 = vpop.f32.mrf.mxu0
  %v171 = vadd.f32 %v98, %v170
  %v172 = vpop.f32.mrf.mxu0
  %v173 = vadd.f32 %v99, %v172
  %174 = vmatmul.bf16.gmra.mxu0 %v125
  %v175 = vpop.f32.mrf.mxu0
  %v176 = vadd.f32 %v100, %v175
  %v177 = vpop.f32.mrf.mxu0
  %v178 = vadd.f32 %v101, %v177
  %179 = vdwg.mxu0
  %v180 = vld [vmem:[%s4] sm:$0xff]
  %v181 = vld [vmem:[%s4 + $0x8] sm:$0xff]
  %v182 = vld [vmem:[%s4 + $0x10] sm:$0xff]
  %v183 = vld [vmem:[%s4 + $0x18] sm:$0xff]
  %v184 = vld [vmem:[%s4 + $0x20] sm:$0xff]
  %v185 = vld [vmem:[%s5] sm:$0xff]
  %v186 = vld [vmem:[%s5 + $0x8] sm:$0xff]
  %v187 = vld [vmem:[%s5 + $0x10] sm:$0xff]
  %v188 = vld [vmem:[%s5 + $0x18] sm:$0xff]
  %v189 = vld [vmem:[%s5 + $0x20] sm:$0xff]
  %v190 = vld [vmem:[%s5 + $0x28] sm:$0xff]
  %v191 = vld [vmem:[%s5 + $0x30] sm:$0xff]
  %v192 = vld [vmem:[%s5 + $0x38] sm:$0xff]
  %v193 = vld [vmem:[%s5 + $0x40] sm:$0xff]
  %v194 = vld [vmem:[%s5 + $0x48] sm:$0xff]
  %v195 = vld [vmem:[%s5 + $0x50] sm:$0xff]
  %v196 = vld [vmem:[%s5 + $0x58] sm:$0xff]
  %v197 = vld [vmem:[%s5 + $0x60] sm:$0xff]
  %v198 = vld [vmem:[%s5 + $0x68] sm:$0xff]
  %v199 = vld [vmem:[%s5 + $0x70] sm:$0xff]
  %v200 = vld [vmem:[%s5 + $0x78] sm:$0xff]
  %v201 = vld [vmem:[%s5 + $0x80] sm:$0xff]
  %v202 = vld [vmem:[%s5 + $0x88] sm:$0xff]
  %v203 = vld [vmem:[%s5 + $0x90] sm:$0xff]
  %v204 = vld [vmem:[%s5 + $0x98] sm:$0xff]
  %v205 = vld [vmem:[%s5 + $0xa0] sm:$0xff]
  %v206 = vpack.c.bf16 %v143, %v141
  %v207 = vpack.c.bf16 %v148, %v146
  %v208 = vpack.c.bf16 %v153, %v151
  %v209 = vpack.c.bf16 %v158, %v156
  %v210 = vpack.c.bf16 %v163, %v161
  %v211 = vpack.c.bf16 %v168, %v166
  %v212 = vpack.c.bf16 %v173, %v171
  %v213 = vpack.c.bf16 %v178, %v176
  %v214 = vpack.c.bf16 %v181, %v180
  %v215 = vpack.c.bf16 %v183, %v182
  %v216 = vperm.slane %v184, 0
  %vm217 = vcmask 261120
  %v219 = vsel %vm217, %v206, 0
  %v222 = vsel %vm217, %v207, 0
  %v225 = vsel %vm217, %v208, 0
  %v228 = vsel %vm217, %v209, 0
  %v231 = vsel %vm217, %v210, 0
  %v234 = vsel %vm217, %v211, 0
  %v237 = vsel %vm217, %v212, 0
  %v240 = vsel %vm217, %v213, 0
  %242 = vmatpush.bf16.msra.mxu0 0
  %243 = vmatpush.bf16.msra.mxu0 0
  %244 = vmatpush.bf16.msra.mxu0 0
  %245 = vmatpush.bf16.msra.mxu0 0
  %246 = vmatpush.bf16.msra.mxu0 0
  %247 = vmatpush.bf16.msra.mxu0 0
  %248 = vmatpush.bf16.msra.mxu0 %v215
  %249 = vmatpush.bf16.msra.mxu0 %v214
  %250 = vmatmul.bf16.gmra.mxu0 %v219
  %v251 = vpop.f32.mrf.mxu0
  %v252 = vadd.f32 %v216, %v251
  %v253 = vpop.f32.mrf.mxu0
  %v254 = vadd.f32 %v216, %v253
  %255 = vmatmul.bf16.gmra.mxu0 %v222
  %v256 = vpop.f32.mrf.mxu0
  %v257 = vadd.f32 %v216, %v256
  %v258 = vpop.f32.mrf.mxu0
  %v259 = vadd.f32 %v216, %v258
  %260 = vmatmul.bf16.gmra.mxu0 %v225
  %v261 = vpop.f32.mrf.mxu0
  %v262 = vadd.f32 %v216, %v261
  %v263 = vpop.f32.mrf.mxu0
  %v264 = vadd.f32 %v216, %v263
  %265 = vmatmul.bf16.gmra.mxu0 %v228
  %v266 = vpop.f32.mrf.mxu0
  %v267 = vadd.f32 %v216, %v266
  %v268 = vpop.f32.mrf.mxu0
  %v269 = vadd.f32 %v216, %v268
  %270 = vmatmul.bf16.gmra.mxu0 %v231
  %v271 = vpop.f32.mrf.mxu0
  %v272 = vadd.f32 %v216, %v271
  %v273 = vpop.f32.mrf.mxu0
  %v274 = vadd.f32 %v216, %v273
  %275 = vmatmul.bf16.gmra.mxu0 %v234
  %v276 = vpop.f32.mrf.mxu0
  %v277 = vadd.f32 %v216, %v276
  %v278 = vpop.f32.mrf.mxu0
  %v279 = vadd.f32 %v216, %v278
  %280 = vmatmul.bf16.gmra.mxu0 %v237
  %v281 = vpop.f32.mrf.mxu0
  %v282 = vadd.f32 %v216, %v281
  %v283 = vpop.f32.mrf.mxu0
  %v284 = vadd.f32 %v216, %v283
  %285 = vmatmul.bf16.gmra.mxu0 %v240
  %v286 = vpop.f32.mrf.mxu0
  %v287 = vadd.f32 %v216, %v286
  %v288 = vpop.f32.mrf.mxu0
  %v289 = vadd.f32 %v216, %v288
  %290 = vdwg.mxu0
  %vm291 = vcmp.gt.f32.partialorder %v252, 0.0
  %vm292 = vcmp.gt.f32.partialorder %v254, 0.0
  %vm293 = vcmp.gt.f32.partialorder %v257, 0.0
  %vm294 = vcmp.gt.f32.partialorder %v259, 0.0
  %vm295 = vcmp.gt.f32.partialorder %v262, 0.0
  %vm296 = vcmp.gt.f32.partialorder %v264, 0.0
  %vm297 = vcmp.gt.f32.partialorder %v267, 0.0
  %vm298 = vcmp.gt.f32.partialorder %v269, 0.0
  %vm299 = vcmp.gt.f32.partialorder %v272, 0.0
  %vm300 = vcmp.gt.f32.partialorder %v274, 0.0
  %vm301 = vcmp.gt.f32.partialorder %v277, 0.0
  %vm302 = vcmp.gt.f32.partialorder %v279, 0.0
  %vm303 = vcmp.gt.f32.partialorder %v282, 0.0
  %vm304 = vcmp.gt.f32.partialorder %v284, 0.0
  %vm305 = vcmp.gt.f32.partialorder %v287, 0.0
  %vm306 = vcmp.gt.f32.partialorder %v289, 0.0
  %v307 = vadd.f32 %v252, 1.0
  %v308 = vadd.f32 %v254, 1.0
  %v309 = vadd.f32 %v257, 1.0
  %v310 = vadd.f32 %v259, 1.0
  %v311 = vadd.f32 %v262, 1.0
  %v312 = vadd.f32 %v264, 1.0
  %v313 = vadd.f32 %v267, 1.0
  %v314 = vadd.f32 %v269, 1.0
  %v315 = vadd.f32 %v272, 1.0
  %v316 = vadd.f32 %v274, 1.0
  %v317 = vadd.f32 %v277, 1.0
  %v318 = vadd.f32 %v279, 1.0
  %v319 = vadd.f32 %v282, 1.0
  %v320 = vadd.f32 %v284, 1.0
  %v321 = vadd.f32 %v287, 1.0
  %v322 = vadd.f32 %v289, 1.0
  %v323 = vmul.f32 %v252, 1.442695
  %v324 = vpow.pop %v323
  %v325 = vmul.f32 %v254, 1.442695
  %v326 = vpow.pop %v325
  %v327 = vmul.f32 %v257, 1.442695
  %v328 = vpow.pop %v327
  %v329 = vmul.f32 %v259, 1.442695
  %v330 = vpow.pop %v329
  %v331 = vmul.f32 %v262, 1.442695
  %v332 = vpow.pop %v331
  %v333 = vmul.f32 %v264, 1.442695
  %v334 = vpow.pop %v333
  %v335 = vmul.f32 %v267, 1.442695
  %v336 = vpow.pop %v335
  %v337 = vmul.f32 %v269, 1.442695
  %v338 = vpow.pop %v337
  %v339 = vmul.f32 %v272, 1.442695
  %v340 = vpow.pop %v339
  %v341 = vmul.f32 %v274, 1.442695
  %v342 = vpow.pop %v341
  %v343 = vmul.f32 %v277, 1.442695
  %v344 = vpow.pop %v343
  %v345 = vmul.f32 %v279, 1.442695
  %v346 = vpow.pop %v345
  %v347 = vmul.f32 %v282, 1.442695
  %v348 = vpow.pop %v347
  %v349 = vmul.f32 %v284, 1.442695
  %v350 = vpow.pop %v349
  %v351 = vmul.f32 %v287, 1.442695
  %v352 = vpow.pop %v351
  %v353 = vmul.f32 %v289, 1.442695
  %v354 = vpow.pop %v353
  %v355 = vsel %vm291, %v307, %v324
  %v356 = vsel %vm292, %v308, %v326
  %v357 = vsel %vm293, %v309, %v328
  %v358 = vsel %vm294, %v310, %v330
  %v359 = vsel %vm295, %v311, %v332
  %v360 = vsel %vm296, %v312, %v334
  %v361 = vsel %vm297, %v313, %v336
  %v362 = vsel %vm298, %v314, %v338
  %v363 = vsel %vm299, %v315, %v340
  %v364 = vsel %vm300, %v316, %v342
  %v365 = vsel %vm301, %v317, %v344
  %v366 = vsel %vm302, %v318, %v346
  %v367 = vsel %vm303, %v319, %v348
  %v368 = vsel %vm304, %v320, %v350
  %v369 = vsel %vm305, %v321, %v352
  %v370 = vsel %vm306, %v322, %v354
  %v371 = vpack.c.bf16 %v356, %v355
  %v372 = vpack.c.bf16 %v358, %v357
  %v373 = vpack.c.bf16 %v360, %v359
  %v374 = vpack.c.bf16 %v362, %v361
  %v375 = vpack.c.bf16 %v254, %v252
  %v376 = vpack.c.bf16 %v259, %v257
  %v377 = vpack.c.bf16 %v264, %v262
  %v378 = vpack.c.bf16 %v269, %v267
  %383 = vrot.lane.b32.xlu0 %v371, 96
  %v384 = vpop.permute.xlu0 %383
  %385 = vrot.lane.b32.xlu0 %v372, 96
  %v386 = vpop.permute.xlu0 %385
  %387 = vrot.lane.b32.xlu0 %v373, 96
  %v388 = vpop.permute.xlu0 %387
  %389 = vrot.lane.b32.xlu0 %v374, 96
  %v390 = vpop.permute.xlu0 %389
  %395 = vxpose.xlu0.c.b16.start [1/8] %v384, 128
  %396 = vxpose.xlu0.c.b16.cont [2/8] %v386, 128
  %397 = vxpose.xlu0.c.b16.cont [3/8] %v388, 128
  %398 = vxpose.xlu0.c.b16.cont [4/8] %v390, 128
  %399 = vxpose.xlu0.c.b16.cont [5/8] 0, 128
  %400 = vxpose.xlu0.c.b16.cont [6/8] 0, 128
  %401 = vxpose.xlu0.c.b16.cont [7/8] 0, 128
  %402 = vxpose.xlu0.c.b16.end [8/8] 0, 128
  %v403 = vpop.trf.xlu0
  %v404 = vpop.trf.xlu0
  %v405 = vpop.trf.xlu0
  %v406 = vpop.trf.xlu0
  %v407 = vpop.trf.xlu0
  %v408 = vpop.trf.xlu0
  %v409 = vpop.trf.xlu0
  %v410 = vpop.trf.xlu0
  %415 = vrot.lane.b32.xlu0 %v375, 64
  %v416 = vpop.permute.xlu0 %415
  %417 = vrot.lane.b32.xlu0 %v376, 64
  %v418 = vpop.permute.xlu0 %417
  %419 = vrot.lane.b32.xlu0 %v377, 64
  %v420 = vpop.permute.xlu0 %419
  %421 = vrot.lane.b32.xlu0 %v378, 64
  %v422 = vpop.permute.xlu0 %421
  %vm427 = vcmask 523264
  %v429 = vsel %vm427, %v403, 0
  %v432 = vsel %vm427, %v404, 0
  %434 = vmatpush.bf16.msra.mxu0 0
  %435 = vmatpush.bf16.msra.mxu0 0
  %436 = vmatpush.bf16.msra.mxu0 0
  %437 = vmatpush.bf16.msra.mxu0 0
  %438 = vmatpush.bf16.msra.mxu0 %v422
  %439 = vmatpush.bf16.msra.mxu0 %v420
  %440 = vmatpush.bf16.msra.mxu0 %v418
  %441 = vmatpush.bf16.msra.mxu0 %v416
  %442 = vmatmul.bf16.gmra.mxu0 %v429
  %v443 = vpop.f32.mrf.mxu0
  %v444 = vadd.f32 0.0, %v443
  %v445 = vpop.f32.mrf.mxu0
  %v446 = vadd.f32 0.0, %v445
  %447 = vmatmul.bf16.gmra.mxu0 %v432
  %v448 = vpop.f32.mrf.mxu0
  %v449 = vadd.f32 0.0, %v448
  %v450 = vpop.f32.mrf.mxu0
  %v451 = vadd.f32 0.0, %v450
  %452 = vdwg.mxu0
  %v453 = vmul.f32 %v444, %v24
  %v454 = vmul.f32 %v446, %v25
  %v455 = vmul.f32 %v449, %v26
  %v456 = vmul.f32 %v451, %v27
  %vm457 = vcmask 523520
  %v458 = vsel %vm457, %v355, 0.0
  %v459 = vsel %vm457, %v356, 0.0
  %v460 = vadd.f32 %v458, %v459
  %v461 = vsel %vm457, %v357, 0.0
  %v462 = vadd.f32 %v460, %v461
  %v463 = vsel %vm457, %v358, 0.0
  %v464 = vadd.f32 %v462, %v463
  %v465 = vsel %vm457, %v359, 0.0
  %v466 = vadd.f32 %v464, %v465
  %v467 = vsel %vm457, %v360, 0.0
  %v468 = vadd.f32 %v466, %v467
  %v469 = vsel %vm457, %v361, 0.0
  %v470 = vadd.f32 %v468, %v469
  %v471 = vsel %vm457, %v362, 0.0
  %v472 = vadd.f32 %v470, %v471
  %v473 = vrot.slane %v472, 4
  %v474 = vadd.f32 %v472, %v473
  %v475 = vrot.slane %v474, 2
  %v476 = vadd.f32 %v474, %v475
  %v477 = vrot.slane %v476, 1
  %v478 = vadd.f32 %v476, %v477
  %480 = vrot.lane.b32.xlu0 %v478, 96
  %v481 = vpop.permute.xlu0 %480
  %v483 = vmul.f32 %v355, %v481
  %v484 = vmul.f32 %v356, %v481
  %v485 = vmul.f32 %v357, %v481
  %v486 = vmul.f32 %v358, %v481
  %v487 = vmul.f32 %v359, %v481
  %v488 = vmul.f32 %v360, %v481
  %v489 = vmul.f32 %v361, %v481
  %v490 = vmul.f32 %v362, %v481
  %v491 = vpack.c.bf16 %v484, %v483
  %v492 = vpack.c.bf16 %v486, %v485
  %v493 = vpack.c.bf16 %v488, %v487
  %v494 = vpack.c.bf16 %v490, %v489
  %v495 = vpack.c.bf16 %v25, %v24
  %v496 = vpack.c.bf16 %v27, %v26
  %v498 = vsel %vm217, %v491, 0
  %v501 = vsel %vm217, %v492, 0
  %v504 = vsel %vm217, %v493, 0
  %v507 = vsel %vm217, %v494, 0
  %509 = vmatpush.bf16.msra.mxu0 0
  %510 = vmatpush.bf16.msra.mxu0 0
  %511 = vmatpush.bf16.msra.mxu0 0
  %512 = vmatpush.bf16.msra.mxu0 0
  %513 = vmatpush.bf16.msra.mxu0 0
  %514 = vmatpush.bf16.msra.mxu0 0
  %515 = vmatpush.bf16.msra.mxu0 %v496
  %516 = vmatpush.bf16.msra.mxu0 %v495
  %517 = vmatmul.bf16.gmra.mxu0 %v498
  %v518 = vpop.f32.mrf.mxu0
  %v519 = vadd.f32 1e-06, %v518
  %v520 = vpop.f32.mrf.mxu0
  %v521 = vadd.f32 1e-06, %v520
  %522 = vmatmul.bf16.gmra.mxu0 %v501
  %v523 = vpop.f32.mrf.mxu0
  %v524 = vadd.f32 1e-06, %v523
  %v525 = vpop.f32.mrf.mxu0
  %v526 = vadd.f32 1e-06, %v525
  %527 = vmatmul.bf16.gmra.mxu0 %v504
  %v528 = vpop.f32.mrf.mxu0
  %v529 = vadd.f32 1e-06, %v528
  %v530 = vpop.f32.mrf.mxu0
  %v531 = vadd.f32 1e-06, %v530
  %532 = vmatmul.bf16.gmra.mxu0 %v507
  %v533 = vpop.f32.mrf.mxu0
  %v534 = vadd.f32 1e-06, %v533
  %v535 = vpop.f32.mrf.mxu0
  %v536 = vadd.f32 1e-06, %v535
  %537 = vdwg.mxu0
  %v538 = vpack.c.bf16 %v454, %v453
  %v539 = vpack.c.bf16 %v456, %v455
  %v541 = vsel %vm217, %v371, 0
  %v544 = vsel %vm217, %v372, 0
  %v547 = vsel %vm217, %v373, 0
  %v550 = vsel %vm217, %v374, 0
  %552 = vmatpush.bf16.msra.mxu0 0
  %553 = vmatpush.bf16.msra.mxu0 0
  %554 = vmatpush.bf16.msra.mxu0 0
  %555 = vmatpush.bf16.msra.mxu0 0
  %556 = vmatpush.bf16.msra.mxu0 0
  %557 = vmatpush.bf16.msra.mxu0 0
  %558 = vmatpush.bf16.msra.mxu0 %v539
  %559 = vmatpush.bf16.msra.mxu0 %v538
  %560 = vmatmul.bf16.gmra.mxu0 %v541
  %v561 = vpop.f32.mrf.mxu0
  %v562 = vadd.f32 0.0, %v561
  %v563 = vpop.f32.mrf.mxu0
  %v564 = vadd.f32 0.0, %v563
  %565 = vmatmul.bf16.gmra.mxu0 %v544
  %v566 = vpop.f32.mrf.mxu0
  %v567 = vadd.f32 0.0, %v566
  %v568 = vpop.f32.mrf.mxu0
  %v569 = vadd.f32 0.0, %v568
  %570 = vmatmul.bf16.gmra.mxu0 %v547
  %v571 = vpop.f32.mrf.mxu0
  %v572 = vadd.f32 0.0, %v571
  %v573 = vpop.f32.mrf.mxu0
  %v574 = vadd.f32 0.0, %v573
  %575 = vmatmul.bf16.gmra.mxu0 %v550
  %v576 = vpop.f32.mrf.mxu0
  %v577 = vadd.f32 0.0, %v576
  %v578 = vpop.f32.mrf.mxu0
  %v579 = vadd.f32 0.0, %v578
  %580 = vdwg.mxu0
  %v581 = vrcp.pop %v519
  %v582 = vrcp.pop %v521
  %v583 = vrcp.pop %v524
  %v584 = vrcp.pop %v526
  %v585 = vrcp.pop %v529
  %v586 = vrcp.pop %v531
  %v587 = vrcp.pop %v534
  %v588 = vrcp.pop %v536
  %v589 = vmul.f32 %v562, %v581
  %v590 = vmul.f32 %v564, %v582
  %v591 = vmul.f32 %v567, %v583
  %v592 = vmul.f32 %v569, %v584
  %v593 = vmul.f32 %v572, %v585
  %v594 = vmul.f32 %v574, %v586
  %v595 = vmul.f32 %v577, %v587
  %v596 = vmul.f32 %v579, %v588
  %v597 = vpack.c.bf16 %v364, %v363
  %v598 = vpack.c.bf16 %v366, %v365
  %v599 = vpack.c.bf16 %v368, %v367
  %v600 = vpack.c.bf16 %v370, %v369
  %v601 = vpack.c.bf16 %v274, %v272
  %v602 = vpack.c.bf16 %v279, %v277
  %v603 = vpack.c.bf16 %v284, %v282
  %v604 = vpack.c.bf16 %v289, %v287
  %609 = vrot.lane.b32.xlu0 %v597, 96
  %v610 = vpop.permute.xlu0 %609
  %611 = vrot.lane.b32.xlu0 %v598, 96
  %v612 = vpop.permute.xlu0 %611
  %613 = vrot.lane.b32.xlu0 %v599, 96
  %v614 = vpop.permute.xlu0 %613
  %615 = vrot.lane.b32.xlu0 %v600, 96
  %v616 = vpop.permute.xlu0 %615
  %621 = vxpose.xlu0.c.b16.start [1/8] %v610, 128
  %622 = vxpose.xlu0.c.b16.cont [2/8] %v612, 128
  %623 = vxpose.xlu0.c.b16.cont [3/8] %v614, 128
  %624 = vxpose.xlu0.c.b16.cont [4/8] %v616, 128
  %625 = vxpose.xlu0.c.b16.cont [5/8] 0, 128
  %626 = vxpose.xlu0.c.b16.cont [6/8] 0, 128
  %627 = vxpose.xlu0.c.b16.cont [7/8] 0, 128
  %628 = vxpose.xlu0.c.b16.end [8/8] 0, 128
  %v629 = vpop.trf.xlu0
  %v630 = vpop.trf.xlu0
  %v631 = vpop.trf.xlu0
  %v632 = vpop.trf.xlu0
  %v633 = vpop.trf.xlu0
  %v634 = vpop.trf.xlu0
  %v635 = vpop.trf.xlu0
  %v636 = vpop.trf.xlu0
  %641 = vrot.lane.b32.xlu0 %v601, 64
  %v642 = vpop.permute.xlu0 %641
  %643 = vrot.lane.b32.xlu0 %v602, 64
  %v644 = vpop.permute.xlu0 %643
  %645 = vrot.lane.b32.xlu0 %v603, 64
  %v646 = vpop.permute.xlu0 %645
  %647 = vrot.lane.b32.xlu0 %v604, 64
  %v648 = vpop.permute.xlu0 %647
  %v654 = vsel %vm427, %v629, 0
  %v657 = vsel %vm427, %v630, 0
  %659 = vmatpush.bf16.msra.mxu0 0
  %660 = vmatpush.bf16.msra.mxu0 0
  %661 = vmatpush.bf16.msra.mxu0 0
  %662 = vmatpush.bf16.msra.mxu0 0
  %663 = vmatpush.bf16.msra.mxu0 %v648
  %664 = vmatpush.bf16.msra.mxu0 %v646
  %665 = vmatpush.bf16.msra.mxu0 %v644
  %666 = vmatpush.bf16.msra.mxu0 %v642
  %667 = vmatmul.bf16.gmra.mxu0 %v654
  %v668 = vpop.f32.mrf.mxu0
  %v669 = vadd.f32 0.0, %v668
  %v670 = vpop.f32.mrf.mxu0
  %v671 = vadd.f32 0.0, %v670
  %672 = vmatmul.bf16.gmra.mxu0 %v657
  %v673 = vpop.f32.mrf.mxu0
  %v674 = vadd.f32 0.0, %v673
  %v675 = vpop.f32.mrf.mxu0
  %v676 = vadd.f32 0.0, %v675
  %677 = vdwg.mxu0
  %v678 = vmul.f32 %v669, %v24
  %v679 = vmul.f32 %v671, %v25
  %v680 = vmul.f32 %v674, %v26
  %v681 = vmul.f32 %v676, %v27
  %v682 = vsel %vm457, %v363, 0.0
  %v683 = vsel %vm457, %v364, 0.0
  %v684 = vadd.f32 %v682, %v683
  %v685 = vsel %vm457, %v365, 0.0
  %v686 = vadd.f32 %v684, %v685
  %v687 = vsel %vm457, %v366, 0.0
  %v688 = vadd.f32 %v686, %v687
  %v689 = vsel %vm457, %v367, 0.0
  %v690 = vadd.f32 %v688, %v689
  %v691 = vsel %vm457, %v368, 0.0
  %v692 = vadd.f32 %v690, %v691
  %v693 = vsel %vm457, %v369, 0.0
  %v694 = vadd.f32 %v692, %v693
  %v695 = vsel %vm457, %v370, 0.0
  %v696 = vadd.f32 %v694, %v695
  %v697 = vrot.slane %v696, 4
  %v698 = vadd.f32 %v696, %v697
  %v699 = vrot.slane %v698, 2
  %v700 = vadd.f32 %v698, %v699
  %v701 = vrot.slane %v700, 1
  %v702 = vadd.f32 %v700, %v701
  %704 = vrot.lane.b32.xlu0 %v702, 96
  %v705 = vpop.permute.xlu0 %704
  %v707 = vmul.f32 %v363, %v705
  %v708 = vmul.f32 %v364, %v705
  %v709 = vmul.f32 %v365, %v705
  %v710 = vmul.f32 %v366, %v705
  %v711 = vmul.f32 %v367, %v705
  %v712 = vmul.f32 %v368, %v705
  %v713 = vmul.f32 %v369, %v705
  %v714 = vmul.f32 %v370, %v705
  %v715 = vpack.c.bf16 %v708, %v707
  %v716 = vpack.c.bf16 %v710, %v709
  %v717 = vpack.c.bf16 %v712, %v711
  %v718 = vpack.c.bf16 %v714, %v713
  %v720 = vsel %vm217, %v715, 0
  %v723 = vsel %vm217, %v716, 0
  %v726 = vsel %vm217, %v717, 0
  %v729 = vsel %vm217, %v718, 0
  %731 = vmatpush.bf16.msra.mxu0 0
  %732 = vmatpush.bf16.msra.mxu0 0
  %733 = vmatpush.bf16.msra.mxu0 0
  %734 = vmatpush.bf16.msra.mxu0 0
  %735 = vmatpush.bf16.msra.mxu0 0
  %736 = vmatpush.bf16.msra.mxu0 0
  %737 = vmatpush.bf16.msra.mxu0 %v496
  %738 = vmatpush.bf16.msra.mxu0 %v495
  %739 = vmatmul.bf16.gmra.mxu0 %v720
  %v740 = vpop.f32.mrf.mxu0
  %v741 = vadd.f32 1e-06, %v740
  %v742 = vpop.f32.mrf.mxu0
  %v743 = vadd.f32 1e-06, %v742
  %744 = vmatmul.bf16.gmra.mxu0 %v723
  %v745 = vpop.f32.mrf.mxu0
  %v746 = vadd.f32 1e-06, %v745
  %v747 = vpop.f32.mrf.mxu0
  %v748 = vadd.f32 1e-06, %v747
  %749 = vmatmul.bf16.gmra.mxu0 %v726
  %v750 = vpop.f32.mrf.mxu0
  %v751 = vadd.f32 1e-06, %v750
  %v752 = vpop.f32.mrf.mxu0
  %v753 = vadd.f32 1e-06, %v752
  %754 = vmatmul.bf16.gmra.mxu0 %v729
  %v755 = vpop.f32.mrf.mxu0
  %v756 = vadd.f32 1e-06, %v755
  %v757 = vpop.f32.mrf.mxu0
  %v758 = vadd.f32 1e-06, %v757
  %759 = vdwg.mxu0
  %v760 = vpack.c.bf16 %v679, %v678
  %v761 = vpack.c.bf16 %v681, %v680
  %v763 = vsel %vm217, %v597, 0
  %v766 = vsel %vm217, %v598, 0
  %v769 = vsel %vm217, %v599, 0
  %v772 = vsel %vm217, %v600, 0
  %774 = vmatpush.bf16.msra.mxu0 0
  %775 = vmatpush.bf16.msra.mxu0 0
  %776 = vmatpush.bf16.msra.mxu0 0
  %777 = vmatpush.bf16.msra.mxu0 0
  %778 = vmatpush.bf16.msra.mxu0 0
  %779 = vmatpush.bf16.msra.mxu0 0
  %780 = vmatpush.bf16.msra.mxu0 %v761
  %781 = vmatpush.bf16.msra.mxu0 %v760
  %782 = vmatmul.bf16.gmra.mxu0 %v763
  %v783 = vpop.f32.mrf.mxu0
  %v784 = vadd.f32 0.0, %v783
  %v785 = vpop.f32.mrf.mxu0
  %v786 = vadd.f32 0.0, %v785
  %787 = vmatmul.bf16.gmra.mxu0 %v766
  %v788 = vpop.f32.mrf.mxu0
  %v789 = vadd.f32 0.0, %v788
  %v790 = vpop.f32.mrf.mxu0
  %v791 = vadd.f32 0.0, %v790
  %792 = vmatmul.bf16.gmra.mxu0 %v769
  %v793 = vpop.f32.mrf.mxu0
  %v794 = vadd.f32 0.0, %v793
  %v795 = vpop.f32.mrf.mxu0
  %v796 = vadd.f32 0.0, %v795
  %797 = vmatmul.bf16.gmra.mxu0 %v772
  %v798 = vpop.f32.mrf.mxu0
  %v799 = vadd.f32 0.0, %v798
  %v800 = vpop.f32.mrf.mxu0
  %v801 = vadd.f32 0.0, %v800
  %802 = vdwg.mxu0
  %v803 = vrcp.pop %v741
  %v804 = vrcp.pop %v743
  %v805 = vrcp.pop %v746
  %v806 = vrcp.pop %v748
  %v807 = vrcp.pop %v751
  %v808 = vrcp.pop %v753
  %v809 = vrcp.pop %v756
  %v810 = vrcp.pop %v758
  %v811 = vmul.f32 %v784, %v803
  %v812 = vmul.f32 %v786, %v804
  %v813 = vmul.f32 %v789, %v805
  %v814 = vmul.f32 %v791, %v806
  %v815 = vmul.f32 %v794, %v807
  %v816 = vmul.f32 %v796, %v808
  %v817 = vmul.f32 %v799, %v809
  %v818 = vmul.f32 %v801, %v810
  %v819 = vpack.c.bf16 %v590, %v589
  %v820 = vpack.c.bf16 %v592, %v591
  %v821 = vpack.c.bf16 %v594, %v593
  %v822 = vpack.c.bf16 %v596, %v595
  %v823 = vpack.c.bf16 %v812, %v811
  %v824 = vpack.c.bf16 %v814, %v813
  %v825 = vpack.c.bf16 %v816, %v815
  %v826 = vpack.c.bf16 %v818, %v817
  %v843 = vunpack.c.l.b16 %v28
  %v844 = vunpack.c.l.b16 %v29
  %v845 = vunpack.c.l.b16 %v30
  %v846 = vunpack.c.l.b16 %v31
  %v847 = vunpack.c.l.b16 %v32
  %v848 = vunpack.c.l.b16 %v33
  %v849 = vunpack.c.l.b16 %v34
  %v850 = vunpack.c.l.b16 %v35
  %v851 = vunpack.c.l.b16 %v36
  %v852 = vunpack.c.l.b16 %v37
  %v853 = vunpack.c.l.b16 %v38
  %v854 = vunpack.c.l.b16 %v39
  %v855 = vunpack.c.l.b16 %v40
  %v856 = vunpack.c.l.b16 %v41
  %v857 = vunpack.c.l.b16 %v42
  %v858 = vunpack.c.l.b16 %v43
  %v859 = vpack.c.b16 %v844, %v843
  %v860 = vpack.c.b16 %v846, %v845
  %v861 = vpack.c.b16 %v848, %v847
  %v862 = vpack.c.b16 %v850, %v849
  %v863 = vpack.c.b16 %v852, %v851
  %v864 = vpack.c.b16 %v854, %v853
  %v865 = vpack.c.b16 %v856, %v855
  %v866 = vpack.c.b16 %v858, %v857
  %875 = vmatpush.bf16.msra.mxu0 %v826
  %876 = vmatpush.bf16.msra.mxu0 %v825
  %877 = vmatpush.bf16.msra.mxu0 %v824
  %878 = vmatpush.bf16.msra.mxu0 %v823
  %879 = vmatpush.bf16.msra.mxu0 %v822
  %880 = vmatpush.bf16.msra.mxu0 %v821
  %881 = vmatpush.bf16.msra.mxu0 %v820
  %882 = vmatpush.bf16.msra.mxu0 %v819
  %883 = vmatmul.bf16.gmra.mxu0 %v859
  %v884 = vpop.f32.mrf.mxu0
  %v885 = vadd.f32 0.0, %v884
  %v886 = vpop.f32.mrf.mxu0
  %v887 = vadd.f32 0.0, %v886
  %888 = vmatmul.bf16.gmra.mxu0 %v860
  %v889 = vpop.f32.mrf.mxu0
  %v890 = vadd.f32 0.0, %v889
  %v891 = vpop.f32.mrf.mxu0
  %v892 = vadd.f32 0.0, %v891
  %893 = vmatmul.bf16.gmra.mxu0 %v861
  %v894 = vpop.f32.mrf.mxu0
  %v895 = vadd.f32 0.0, %v894
  %v896 = vpop.f32.mrf.mxu0
  %v897 = vadd.f32 0.0, %v896
  %898 = vmatmul.bf16.gmra.mxu0 %v862
  %v899 = vpop.f32.mrf.mxu0
  %v900 = vadd.f32 0.0, %v899
  %v901 = vpop.f32.mrf.mxu0
  %v902 = vadd.f32 0.0, %v901
  %903 = vmatmul.bf16.gmra.mxu0 %v863
  %v904 = vpop.f32.mrf.mxu0
  %v905 = vadd.f32 0.0, %v904
  %v906 = vpop.f32.mrf.mxu0
  %v907 = vadd.f32 0.0, %v906
  %908 = vmatmul.bf16.gmra.mxu0 %v864
  %v909 = vpop.f32.mrf.mxu0
  %v910 = vadd.f32 0.0, %v909
  %v911 = vpop.f32.mrf.mxu0
  %v912 = vadd.f32 0.0, %v911
  %913 = vmatmul.bf16.gmra.mxu0 %v865
  %v914 = vpop.f32.mrf.mxu0
  %v915 = vadd.f32 0.0, %v914
  %v916 = vpop.f32.mrf.mxu0
  %v917 = vadd.f32 0.0, %v916
  %918 = vmatmul.bf16.gmra.mxu0 %v866
  %v919 = vpop.f32.mrf.mxu0
  %v920 = vadd.f32 0.0, %v919
  %v921 = vpop.f32.mrf.mxu0
  %v922 = vadd.f32 0.0, %v921
  %923 = vdwg.mxu0
  %v940 = vunpack.c.l.b16 %v44
  %v941 = vunpack.c.l.b16 %v45
  %v942 = vunpack.c.l.b16 %v46
  %v943 = vunpack.c.l.b16 %v47
  %v944 = vunpack.c.l.b16 %v48
  %v945 = vunpack.c.l.b16 %v49
  %v946 = vunpack.c.l.b16 %v50
  %v947 = vunpack.c.l.b16 %v51
  %v948 = vunpack.c.l.b16 %v52
  %v949 = vunpack.c.l.b16 %v53
  %v950 = vunpack.c.l.b16 %v54
  %v951 = vunpack.c.l.b16 %v55
  %v952 = vunpack.c.l.b16 %v56
  %v953 = vunpack.c.l.b16 %v57
  %v954 = vunpack.c.l.b16 %v58
  %v955 = vunpack.c.l.b16 %v59
  %v956 = vpack.c.b16 %v941, %v940
  %v957 = vpack.c.b16 %v943, %v942
  %v958 = vpack.c.b16 %v945, %v944
  %v959 = vpack.c.b16 %v947, %v946
  %v960 = vpack.c.b16 %v949, %v948
  %v961 = vpack.c.b16 %v951, %v950
  %v962 = vpack.c.b16 %v953, %v952
  %v963 = vpack.c.b16 %v955, %v954
  %972 = vmatpush.bf16.msra.mxu0 %v826
  %973 = vmatpush.bf16.msra.mxu0 %v825
  %974 = vmatpush.bf16.msra.mxu0 %v824
  %975 = vmatpush.bf16.msra.mxu0 %v823
  %976 = vmatpush.bf16.msra.mxu0 %v822
  %977 = vmatpush.bf16.msra.mxu0 %v821
  %978 = vmatpush.bf16.msra.mxu0 %v820
  %979 = vmatpush.bf16.msra.mxu0 %v819
  %980 = vmatmul.bf16.gmra.mxu0 %v956
  %v981 = vpop.f32.mrf.mxu0
  %v982 = vadd.f32 0.0, %v981
  %v983 = vpop.f32.mrf.mxu0
  %v984 = vadd.f32 0.0, %v983
  %985 = vmatmul.bf16.gmra.mxu0 %v957
  %v986 = vpop.f32.mrf.mxu0
  %v987 = vadd.f32 0.0, %v986
  %v988 = vpop.f32.mrf.mxu0
  %v989 = vadd.f32 0.0, %v988
  %990 = vmatmul.bf16.gmra.mxu0 %v958
  %v991 = vpop.f32.mrf.mxu0
  %v992 = vadd.f32 0.0, %v991
  %v993 = vpop.f32.mrf.mxu0
  %v994 = vadd.f32 0.0, %v993
  %995 = vmatmul.bf16.gmra.mxu0 %v959
  %v996 = vpop.f32.mrf.mxu0
  %v997 = vadd.f32 0.0, %v996
  %v998 = vpop.f32.mrf.mxu0
  %v999 = vadd.f32 0.0, %v998
  %1000 = vmatmul.bf16.gmra.mxu0 %v960
  %v1001 = vpop.f32.mrf.mxu0
  %v1002 = vadd.f32 0.0, %v1001
  %v1003 = vpop.f32.mrf.mxu0
  %v1004 = vadd.f32 0.0, %v1003
  %1005 = vmatmul.bf16.gmra.mxu0 %v961
  %v1006 = vpop.f32.mrf.mxu0
  %v1007 = vadd.f32 0.0, %v1006
  %v1008 = vpop.f32.mrf.mxu0
  %v1009 = vadd.f32 0.0, %v1008
  %1010 = vmatmul.bf16.gmra.mxu0 %v962
  %v1011 = vpop.f32.mrf.mxu0
  %v1012 = vadd.f32 0.0, %v1011
  %v1013 = vpop.f32.mrf.mxu0
  %v1014 = vadd.f32 0.0, %v1013
  %1015 = vmatmul.bf16.gmra.mxu0 %v963
  %v1016 = vpop.f32.mrf.mxu0
  %v1017 = vadd.f32 0.0, %v1016
  %v1018 = vpop.f32.mrf.mxu0
  %v1019 = vadd.f32 0.0, %v1018
  %1020 = vdwg.mxu0
  %1037 = vrot.lane.b32.xlu0 %v885, 32
  %v1038 = vpop.permute.xlu0 %1037
  %1039 = vrot.lane.b32.xlu0 %v887, 32
  %v1040 = vpop.permute.xlu0 %1039
  %1041 = vrot.lane.b32.xlu0 %v890, 32
  %v1042 = vpop.permute.xlu0 %1041
  %1043 = vrot.lane.b32.xlu0 %v892, 32
  %v1044 = vpop.permute.xlu0 %1043
  %1045 = vrot.lane.b32.xlu0 %v895, 32
  %v1046 = vpop.permute.xlu0 %1045
  %1047 = vrot.lane.b32.xlu0 %v897, 32
  %v1048 = vpop.permute.xlu0 %1047
  %1049 = vrot.lane.b32.xlu0 %v900, 32
  %v1050 = vpop.permute.xlu0 %1049
  %1051 = vrot.lane.b32.xlu0 %v902, 32
  %v1052 = vpop.permute.xlu0 %1051
  %1053 = vrot.lane.b32.xlu0 %v905, 32
  %v1054 = vpop.permute.xlu0 %1053
  %1055 = vrot.lane.b32.xlu0 %v907, 32
  %v1056 = vpop.permute.xlu0 %1055
  %1057 = vrot.lane.b32.xlu0 %v910, 32
  %v1058 = vpop.permute.xlu0 %1057
  %1059 = vrot.lane.b32.xlu0 %v912, 32
  %v1060 = vpop.permute.xlu0 %1059
  %1061 = vrot.lane.b32.xlu0 %v915, 32
  %v1062 = vpop.permute.xlu0 %1061
  %1063 = vrot.lane.b32.xlu0 %v917, 32
  %v1064 = vpop.permute.xlu0 %1063
  %1065 = vrot.lane.b32.xlu0 %v920, 32
  %v1066 = vpop.permute.xlu0 %1065
  %1067 = vrot.lane.b32.xlu0 %v922, 32
  %v1068 = vpop.permute.xlu0 %1067
  %1101 = vrot.lane.b32.xlu0 %v982, 64
  %v1102 = vpop.permute.xlu0 %1101
  %1103 = vrot.lane.b32.xlu0 %v984, 64
  %v1104 = vpop.permute.xlu0 %1103
  %1105 = vrot.lane.b32.xlu0 %v987, 64
  %v1106 = vpop.permute.xlu0 %1105
  %1107 = vrot.lane.b32.xlu0 %v989, 64
  %v1108 = vpop.permute.xlu0 %1107
  %1109 = vrot.lane.b32.xlu0 %v992, 64
  %v1110 = vpop.permute.xlu0 %1109
  %1111 = vrot.lane.b32.xlu0 %v994, 64
  %v1112 = vpop.permute.xlu0 %1111
  %1113 = vrot.lane.b32.xlu0 %v997, 64
  %v1114 = vpop.permute.xlu0 %1113
  %1115 = vrot.lane.b32.xlu0 %v999, 64
  %v1116 = vpop.permute.xlu0 %1115
  %1117 = vrot.lane.b32.xlu0 %v1002, 64
  %v1118 = vpop.permute.xlu0 %1117
  %1119 = vrot.lane.b32.xlu0 %v1004, 64
  %v1120 = vpop.permute.xlu0 %1119
  %1121 = vrot.lane.b32.xlu0 %v1007, 64
  %v1122 = vpop.permute.xlu0 %1121
  %1123 = vrot.lane.b32.xlu0 %v1009, 64
  %v1124 = vpop.permute.xlu0 %1123
  %1125 = vrot.lane.b32.xlu0 %v1012, 64
  %v1126 = vpop.permute.xlu0 %1125
  %1127 = vrot.lane.b32.xlu0 %v1014, 64
  %v1128 = vpop.permute.xlu0 %1127
  %1129 = vrot.lane.b32.xlu0 %v1017, 64
  %v1130 = vpop.permute.xlu0 %1129
  %1131 = vrot.lane.b32.xlu0 %v1019, 64
  %v1132 = vpop.permute.xlu0 %1131
  %v1149 = vsel %vm217, %v589, %v1038
  %v1150 = vsel %vm217, %v590, %v1040
  %v1151 = vsel %vm217, %v591, %v1042
  %v1152 = vsel %vm217, %v592, %v1044
  %v1153 = vsel %vm217, %v593, %v1046
  %v1154 = vsel %vm217, %v594, %v1048
  %v1155 = vsel %vm217, %v595, %v1050
  %v1156 = vsel %vm217, %v596, %v1052
  %v1157 = vsel %vm217, %v811, %v1054
  %v1158 = vsel %vm217, %v812, %v1056
  %v1159 = vsel %vm217, %v813, %v1058
  %v1160 = vsel %vm217, %v814, %v1060
  %v1161 = vsel %vm217, %v815, %v1062
  %v1162 = vsel %vm217, %v816, %v1064
  %v1163 = vsel %vm217, %v817, %v1066
  %v1164 = vsel %vm217, %v818, %v1068
  %v1165 = vsel %vm427, %v1149, %v1102
  %v1166 = vsel %vm427, %v1150, %v1104
  %v1167 = vsel %vm427, %v1151, %v1106
  %v1168 = vsel %vm427, %v1152, %v1108
  %v1169 = vsel %vm427, %v1153, %v1110
  %v1170 = vsel %vm427, %v1154, %v1112
  %v1171 = vsel %vm427, %v1155, %v1114
  %v1172 = vsel %vm427, %v1156, %v1116
  %v1173 = vsel %vm427, %v1157, %v1118
  %v1174 = vsel %vm427, %v1158, %v1120
  %v1175 = vsel %vm427, %v1159, %v1122
  %v1176 = vsel %vm427, %v1160, %v1124
  %v1177 = vsel %vm427, %v1161, %v1126
  %v1178 = vsel %vm427, %v1162, %v1128
  %v1179 = vsel %vm427, %v1163, %v1130
  %v1180 = vsel %vm427, %v1164, %v1132
  %v1181 = vpack.c.bf16 %v1166, %v1165
  %v1182 = vpack.c.bf16 %v1168, %v1167
  %v1183 = vpack.c.bf16 %v1170, %v1169
  %v1184 = vpack.c.bf16 %v1172, %v1171
  %v1185 = vpack.c.bf16 %v1174, %v1173
  %v1186 = vpack.c.bf16 %v1176, %v1175
  %v1187 = vpack.c.bf16 %v1178, %v1177
  %v1188 = vpack.c.bf16 %v1180, %v1179
  %v1189 = vpack.c.bf16 %v186, %v185
  %v1190 = vpack.c.bf16 %v188, %v187
  %v1191 = vpack.c.bf16 %v190, %v189
  %v1192 = vpack.c.bf16 %v192, %v191
  %v1193 = vpack.c.bf16 %v194, %v193
  %v1194 = vpack.c.bf16 %v196, %v195
  %v1195 = vperm.slane %v197, 0
  %vm1196 = vcmask 785408
  %v1198 = vsel %vm1196, %v1181, 0
  %v1201 = vsel %vm1196, %v1182, 0
  %v1204 = vsel %vm1196, %v1183, 0
  %v1207 = vsel %vm1196, %v1184, 0
  %v1210 = vsel %vm1196, %v1185, 0
  %v1213 = vsel %vm1196, %v1186, 0
  %v1216 = vsel %vm1196, %v1187, 0
  %v1219 = vsel %vm1196, %v1188, 0
  %1221 = vmatpush.bf16.msra.mxu0 0
  %1222 = vmatpush.bf16.msra.mxu0 0
  %1223 = vmatpush.bf16.msra.mxu0 %v1194
  %1224 = vmatpush.bf16.msra.mxu0 %v1193
  %1225 = vmatpush.bf16.msra.mxu0 %v1192
  %1226 = vmatpush.bf16.msra.mxu0 %v1191
  %1227 = vmatpush.bf16.msra.mxu0 %v1190
  %1228 = vmatpush.bf16.msra.mxu0 %v1189
  %1229 = vmatmul.bf16.gmra.mxu0 %v1198
  %v1230 = vpop.f32.mrf.mxu0
  %v1231 = vadd.f32 %v1195, %v1230
  %v1232 = vpop.f32.mrf.mxu0
  %v1233 = vadd.f32 %v1195, %v1232
  %1234 = vmatmul.bf16.gmra.mxu0 %v1201
  %v1235 = vpop.f32.mrf.mxu0
  %v1236 = vadd.f32 %v1195, %v1235
  %v1237 = vpop.f32.mrf.mxu0
  %v1238 = vadd.f32 %v1195, %v1237
  %1239 = vmatmul.bf16.gmra.mxu0 %v1204
  %v1240 = vpop.f32.mrf.mxu0
  %v1241 = vadd.f32 %v1195, %v1240
  %v1242 = vpop.f32.mrf.mxu0
  %v1243 = vadd.f32 %v1195, %v1242
  %1244 = vmatmul.bf16.gmra.mxu0 %v1207
  %v1245 = vpop.f32.mrf.mxu0
  %v1246 = vadd.f32 %v1195, %v1245
  %v1247 = vpop.f32.mrf.mxu0
  %v1248 = vadd.f32 %v1195, %v1247
  %1249 = vmatmul.bf16.gmra.mxu0 %v1210
  %v1250 = vpop.f32.mrf.mxu0
  %v1251 = vadd.f32 %v1195, %v1250
  %v1252 = vpop.f32.mrf.mxu0
  %v1253 = vadd.f32 %v1195, %v1252
  %1254 = vmatmul.bf16.gmra.mxu0 %v1213
  %v1255 = vpop.f32.mrf.mxu0
  %v1256 = vadd.f32 %v1195, %v1255
  %v1257 = vpop.f32.mrf.mxu0
  %v1258 = vadd.f32 %v1195, %v1257
  %1259 = vmatmul.bf16.gmra.mxu0 %v1216
  %v1260 = vpop.f32.mrf.mxu0
  %v1261 = vadd.f32 %v1195, %v1260
  %v1262 = vpop.f32.mrf.mxu0
  %v1263 = vadd.f32 %v1195, %v1262
  %1264 = vmatmul.bf16.gmra.mxu0 %v1219
  %v1265 = vpop.f32.mrf.mxu0
  %v1266 = vadd.f32 %v1195, %v1265
  %v1267 = vpop.f32.mrf.mxu0
  %v1268 = vadd.f32 %v1195, %v1267
  %1269 = vdwg.mxu0
  %v1270 = vadd.f32 %v141, %v1231
  %v1271 = vadd.f32 %v143, %v1233
  %v1272 = vadd.f32 %v146, %v1236
  %v1273 = vadd.f32 %v148, %v1238
  %v1274 = vadd.f32 %v151, %v1241
  %v1275 = vadd.f32 %v153, %v1243
  %v1276 = vadd.f32 %v156, %v1246
  %v1277 = vadd.f32 %v158, %v1248
  %v1278 = vadd.f32 %v161, %v1251
  %v1279 = vadd.f32 %v163, %v1253
  %v1280 = vadd.f32 %v166, %v1256
  %v1281 = vadd.f32 %v168, %v1258
  %v1282 = vadd.f32 %v171, %v1261
  %v1283 = vadd.f32 %v173, %v1263
  %v1284 = vadd.f32 %v176, %v1266
  %v1285 = vadd.f32 %v178, %v1268
  %v1286 = vsel %vm217, %v1270, 0.0
  %1287 = vadd.xlane.f32.xlu0 %v1286
  %v1288 = vpop.xlane.xlu0 %1287
  %v1289 = vsel %vm217, %v1271, 0.0
  %1290 = vadd.xlane.f32.xlu0 %v1289
  %v1291 = vpop.xlane.xlu0 %1290
  %v1292 = vsel %vm217, %v1272, 0.0
  %1293 = vadd.xlane.f32.xlu0 %v1292
  %v1294 = vpop.xlane.xlu0 %1293
  %v1295 = vsel %vm217, %v1273, 0.0
  %1296 = vadd.xlane.f32.xlu0 %v1295
  %v1297 = vpop.xlane.xlu0 %1296
  %v1298 = vsel %vm217, %v1274, 0.0
  %1299 = vadd.xlane.f32.xlu0 %v1298
  %v1300 = vpop.xlane.xlu0 %1299
  %v1301 = vsel %vm217, %v1275, 0.0
  %1302 = vadd.xlane.f32.xlu0 %v1301
  %v1303 = vpop.xlane.xlu0 %1302
  %v1304 = vsel %vm217, %v1276, 0.0
  %1305 = vadd.xlane.f32.xlu0 %v1304
  %v1306 = vpop.xlane.xlu0 %1305
  %v1307 = vsel %vm217, %v1277, 0.0
  %1308 = vadd.xlane.f32.xlu0 %v1307
  %v1309 = vpop.xlane.xlu0 %1308
  %v1310 = vsel %vm217, %v1278, 0.0
  %1311 = vadd.xlane.f32.xlu0 %v1310
  %v1312 = vpop.xlane.xlu0 %1311
  %v1313 = vsel %vm217, %v1279, 0.0
  %1314 = vadd.xlane.f32.xlu0 %v1313
  %v1315 = vpop.xlane.xlu0 %1314
  %v1316 = vsel %vm217, %v1280, 0.0
  %1317 = vadd.xlane.f32.xlu0 %v1316
  %v1318 = vpop.xlane.xlu0 %1317
  %v1319 = vsel %vm217, %v1281, 0.0
  %1320 = vadd.xlane.f32.xlu0 %v1319
  %v1321 = vpop.xlane.xlu0 %1320
  %v1322 = vsel %vm217, %v1282, 0.0
  %1323 = vadd.xlane.f32.xlu0 %v1322
  %v1324 = vpop.xlane.xlu0 %1323
  %v1325 = vsel %vm217, %v1283, 0.0
  %1326 = vadd.xlane.f32.xlu0 %v1325
  %v1327 = vpop.xlane.xlu0 %1326
  %v1328 = vsel %vm217, %v1284, 0.0
  %1329 = vadd.xlane.f32.xlu0 %v1328
  %v1330 = vpop.xlane.xlu0 %1329
  %v1331 = vsel %vm217, %v1285, 0.0
  %1332 = vadd.xlane.f32.xlu0 %v1331
  %v1333 = vpop.xlane.xlu0 %1332
  %v1334 = vrcp.pop 32.0
  %v1335 = vmul.f32 32.0, %v1334
  %v1336 = vsub.f32 1.0, %v1335
  %v1337 = vmul.f32 %v1334, %v1336
  %v1338 = vadd.f32 %v1334, %v1337
  %vm1339 = vweird.f32 %v1334
  %v1340 = vsel %vm1339, %v1334, %v1338
  %v1341 = vmul.f32 %v1288, %v1340
  %v1342 = vmul.f32 %v1291, %v1340
  %v1343 = vmul.f32 %v1294, %v1340
  %v1344 = vmul.f32 %v1297, %v1340
  %v1345 = vmul.f32 %v1300, %v1340
  %v1346 = vmul.f32 %v1303, %v1340
  %v1347 = vmul.f32 %v1306, %v1340
  %v1348 = vmul.f32 %v1309, %v1340
  %v1349 = vmul.f32 %v1312, %v1340
  %v1350 = vmul.f32 %v1315, %v1340
  %v1351 = vmul.f32 %v1318, %v1340
  %v1352 = vmul.f32 %v1321, %v1340
  %v1353 = vmul.f32 %v1324, %v1340
  %v1354 = vmul.f32 %v1327, %v1340
  %v1355 = vmul.f32 %v1330, %v1340
  %v1356 = vmul.f32 %v1333, %v1340
  %v1357 = vsub.f32 %v1270, %v1341
  %v1358 = vsub.f32 %v1271, %v1342
  %v1359 = vsub.f32 %v1272, %v1343
  %v1360 = vsub.f32 %v1273, %v1344
  %v1361 = vsub.f32 %v1274, %v1345
  %v1362 = vsub.f32 %v1275, %v1346
  %v1363 = vsub.f32 %v1276, %v1347
  %v1364 = vsub.f32 %v1277, %v1348
  %v1365 = vsub.f32 %v1278, %v1349
  %v1366 = vsub.f32 %v1279, %v1350
  %v1367 = vsub.f32 %v1280, %v1351
  %v1368 = vsub.f32 %v1281, %v1352
  %v1369 = vsub.f32 %v1282, %v1353
  %v1370 = vsub.f32 %v1283, %v1354
  %v1371 = vsub.f32 %v1284, %v1355
  %v1372 = vsub.f32 %v1285, %v1356
  %v1373 = vmul.f32 %v1357, %v1357
  %v1374 = vmul.f32 %v1358, %v1358
  %v1375 = vmul.f32 %v1359, %v1359
  %v1376 = vmul.f32 %v1360, %v1360
  %v1377 = vmul.f32 %v1361, %v1361
  %v1378 = vmul.f32 %v1362, %v1362
  %v1379 = vmul.f32 %v1363, %v1363
  %v1380 = vmul.f32 %v1364, %v1364
  %v1381 = vmul.f32 %v1365, %v1365
  %v1382 = vmul.f32 %v1366, %v1366
  %v1383 = vmul.f32 %v1367, %v1367
  %v1384 = vmul.f32 %v1368, %v1368
  %v1385 = vmul.f32 %v1369, %v1369
  %v1386 = vmul.f32 %v1370, %v1370
  %v1387 = vmul.f32 %v1371, %v1371
  %v1388 = vmul.f32 %v1372, %v1372
  %v1389 = vsel %vm217, %v1373, 0.0
  %1390 = vadd.xlane.f32.xlu0 %v1389
  %v1391 = vpop.xlane.xlu0 %1390
  %v1392 = vsel %vm217, %v1374, 0.0
  %1393 = vadd.xlane.f32.xlu0 %v1392
  %v1394 = vpop.xlane.xlu0 %1393
  %v1395 = vsel %vm217, %v1375, 0.0
  %1396 = vadd.xlane.f32.xlu0 %v1395
  %v1397 = vpop.xlane.xlu0 %1396
  %v1398 = vsel %vm217, %v1376, 0.0
  %1399 = vadd.xlane.f32.xlu0 %v1398
  %v1400 = vpop.xlane.xlu0 %1399
  %v1401 = vsel %vm217, %v1377, 0.0
  %1402 = vadd.xlane.f32.xlu0 %v1401
  %v1403 = vpop.xlane.xlu0 %1402
  %v1404 = vsel %vm217, %v1378, 0.0
  %1405 = vadd.xlane.f32.xlu0 %v1404
  %v1406 = vpop.xlane.xlu0 %1405
  %v1407 = vsel %vm217, %v1379, 0.0
  %1408 = vadd.xlane.f32.xlu0 %v1407
  %v1409 = vpop.xlane.xlu0 %1408
  %v1410 = vsel %vm217, %v1380, 0.0
  %1411 = vadd.xlane.f32.xlu0 %v1410
  %v1412 = vpop.xlane.xlu0 %1411
  %v1413 = vsel %vm217, %v1381, 0.0
  %1414 = vadd.xlane.f32.xlu0 %v1413
  %v1415 = vpop.xlane.xlu0 %1414
  %v1416 = vsel %vm217, %v1382, 0.0
  %1417 = vadd.xlane.f32.xlu0 %v1416
  %v1418 = vpop.xlane.xlu0 %1417
  %v1419 = vsel %vm217, %v1383, 0.0
  %1420 = vadd.xlane.f32.xlu0 %v1419
  %v1421 = vpop.xlane.xlu0 %1420
  %v1422 = vsel %vm217, %v1384, 0.0
  %1423 = vadd.xlane.f32.xlu0 %v1422
  %v1424 = vpop.xlane.xlu0 %1423
  %v1425 = vsel %vm217, %v1385, 0.0
  %1426 = vadd.xlane.f32.xlu0 %v1425
  %v1427 = vpop.xlane.xlu0 %1426
  %v1428 = vsel %vm217, %v1386, 0.0
  %1429 = vadd.xlane.f32.xlu0 %v1428
  %v1430 = vpop.xlane.xlu0 %1429
  %v1431 = vsel %vm217, %v1387, 0.0
  %1432 = vadd.xlane.f32.xlu0 %v1431
  %v1433 = vpop.xlane.xlu0 %1432
  %v1434 = vsel %vm217, %v1388, 0.0
  %1435 = vadd.xlane.f32.xlu0 %v1434
  %v1436 = vpop.xlane.xlu0 %1435
  %v1437 = vmul.f32 %v1391, %v1340
  %v1438 = vmul.f32 %v1394, %v1340
  %v1439 = vmul.f32 %v1397, %v1340
  %v1440 = vmul.f32 %v1400, %v1340
  %v1441 = vmul.f32 %v1403, %v1340
  %v1442 = vmul.f32 %v1406, %v1340
  %v1443 = vmul.f32 %v1409, %v1340
  %v1444 = vmul.f32 %v1412, %v1340
  %v1445 = vmul.f32 %v1415, %v1340
  %v1446 = vmul.f32 %v1418, %v1340
  %v1447 = vmul.f32 %v1421, %v1340
  %v1448 = vmul.f32 %v1424, %v1340
  %v1449 = vmul.f32 %v1427, %v1340
  %v1450 = vmul.f32 %v1430, %v1340
  %v1451 = vmul.f32 %v1433, %v1340
  %v1452 = vmul.f32 %v1436, %v1340
  %v1453 = vadd.f32 %v1437, 1e-05
  %v1454 = vadd.f32 %v1438, 1e-05
  %v1455 = vadd.f32 %v1439, 1e-05
  %v1456 = vadd.f32 %v1440, 1e-05
  %v1457 = vadd.f32 %v1441, 1e-05
  %v1458 = vadd.f32 %v1442, 1e-05
  %v1459 = vadd.f32 %v1443, 1e-05
  %v1460 = vadd.f32 %v1444, 1e-05
  %v1461 = vadd.f32 %v1445, 1e-05
  %v1462 = vadd.f32 %v1446, 1e-05
  %v1463 = vadd.f32 %v1447, 1e-05
  %v1464 = vadd.f32 %v1448, 1e-05
  %v1465 = vadd.f32 %v1449, 1e-05
  %v1466 = vadd.f32 %v1450, 1e-05
  %v1467 = vadd.f32 %v1451, 1e-05
  %v1468 = vadd.f32 %v1452, 1e-05
  %v1469 = vrsqrt.pop %v1453
  %v1470 = vmul.f32 %v1469, %v1453
  %v1471 = vmul.f32 %v1470, %v1469
  %v1472 = vmul.f32 0.5, %v1471
  %v1473 = vsub.f32 1.5, %v1472
  %v1474 = vmul.f32 %v1469, %v1473
  %vm1475 = vweird.f32 %v1453
  %vm1476 = vweird.f32 %v1469
  %vm1477 = vmor %vm1475, %vm1476
  %v1478 = vsel %vm1477, %v1469, %v1474
  %v1479 = vrsqrt.pop %v1454
  %v1480 = vmul.f32 %v1479, %v1454
  %v1481 = vmul.f32 %v1480, %v1479
  %v1482 = vmul.f32 0.5, %v1481
  %v1483 = vsub.f32 1.5, %v1482
  %v1484 = vmul.f32 %v1479, %v1483
  %vm1485 = vweird.f32 %v1454
  %vm1486 = vweird.f32 %v1479
  %vm1487 = vmor %vm1485, %vm1486
  %v1488 = vsel %vm1487, %v1479, %v1484
  %v1489 = vrsqrt.pop %v1455
  %v1490 = vmul.f32 %v1489, %v1455
  %v1491 = vmul.f32 %v1490, %v1489
  %v1492 = vmul.f32 0.5, %v1491
  %v1493 = vsub.f32 1.5, %v1492
  %v1494 = vmul.f32 %v1489, %v1493
  %vm1495 = vweird.f32 %v1455
  %vm1496 = vweird.f32 %v1489
  %vm1497 = vmor %vm1495, %vm1496
  %v1498 = vsel %vm1497, %v1489, %v1494
  %v1499 = vrsqrt.pop %v1456
  %v1500 = vmul.f32 %v1499, %v1456
  %v1501 = vmul.f32 %v1500, %v1499
  %v1502 = vmul.f32 0.5, %v1501
  %v1503 = vsub.f32 1.5, %v1502
  %v1504 = vmul.f32 %v1499, %v1503
  %vm1505 = vweird.f32 %v1456
  %vm1506 = vweird.f32 %v1499
  %vm1507 = vmor %vm1505, %vm1506
  %v1508 = vsel %vm1507, %v1499, %v1504
  %v1509 = vrsqrt.pop %v1457
  %v1510 = vmul.f32 %v1509, %v1457
  %v1511 = vmul.f32 %v1510, %v1509
  %v1512 = vmul.f32 0.5, %v1511
  %v1513 = vsub.f32 1.5, %v1512
  %v1514 = vmul.f32 %v1509, %v1513
  %vm1515 = vweird.f32 %v1457
  %vm1516 = vweird.f32 %v1509
  %vm1517 = vmor %vm1515, %vm1516
  %v1518 = vsel %vm1517, %v1509, %v1514
  %v1519 = vrsqrt.pop %v1458
  %v1520 = vmul.f32 %v1519, %v1458
  %v1521 = vmul.f32 %v1520, %v1519
  %v1522 = vmul.f32 0.5, %v1521
  %v1523 = vsub.f32 1.5, %v1522
  %v1524 = vmul.f32 %v1519, %v1523
  %vm1525 = vweird.f32 %v1458
  %vm1526 = vweird.f32 %v1519
  %vm1527 = vmor %vm1525, %vm1526
  %v1528 = vsel %vm1527, %v1519, %v1524
  %v1529 = vrsqrt.pop %v1459
  %v1530 = vmul.f32 %v1529, %v1459
  %v1531 = vmul.f32 %v1530, %v1529
  %v1532 = vmul.f32 0.5, %v1531
  %v1533 = vsub.f32 1.5, %v1532
  %v1534 = vmul.f32 %v1529, %v1533
  %vm1535 = vweird.f32 %v1459
  %vm1536 = vweird.f32 %v1529
  %vm1537 = vmor %vm1535, %vm1536
  %v1538 = vsel %vm1537, %v1529, %v1534
  %v1539 = vrsqrt.pop %v1460
  %v1540 = vmul.f32 %v1539, %v1460
  %v1541 = vmul.f32 %v1540, %v1539
  %v1542 = vmul.f32 0.5, %v1541
  %v1543 = vsub.f32 1.5, %v1542
  %v1544 = vmul.f32 %v1539, %v1543
  %vm1545 = vweird.f32 %v1460
  %vm1546 = vweird.f32 %v1539
  %vm1547 = vmor %vm1545, %vm1546
  %v1548 = vsel %vm1547, %v1539, %v1544
  %v1549 = vrsqrt.pop %v1461
  %v1550 = vmul.f32 %v1549, %v1461
  %v1551 = vmul.f32 %v1550, %v1549
  %v1552 = vmul.f32 0.5, %v1551
  %v1553 = vsub.f32 1.5, %v1552
  %v1554 = vmul.f32 %v1549, %v1553
  %vm1555 = vweird.f32 %v1461
  %vm1556 = vweird.f32 %v1549
  %vm1557 = vmor %vm1555, %vm1556
  %v1558 = vsel %vm1557, %v1549, %v1554
  %v1559 = vrsqrt.pop %v1462
  %v1560 = vmul.f32 %v1559, %v1462
  %v1561 = vmul.f32 %v1560, %v1559
  %v1562 = vmul.f32 0.5, %v1561
  %v1563 = vsub.f32 1.5, %v1562
  %v1564 = vmul.f32 %v1559, %v1563
  %vm1565 = vweird.f32 %v1462
  %vm1566 = vweird.f32 %v1559
  %vm1567 = vmor %vm1565, %vm1566
  %v1568 = vsel %vm1567, %v1559, %v1564
  %v1569 = vrsqrt.pop %v1463
  %v1570 = vmul.f32 %v1569, %v1463
  %v1571 = vmul.f32 %v1570, %v1569
  %v1572 = vmul.f32 0.5, %v1571
  %v1573 = vsub.f32 1.5, %v1572
  %v1574 = vmul.f32 %v1569, %v1573
  %vm1575 = vweird.f32 %v1463
  %vm1576 = vweird.f32 %v1569
  %vm1577 = vmor %vm1575, %vm1576
  %v1578 = vsel %vm1577, %v1569, %v1574
  %v1579 = vrsqrt.pop %v1464
  %v1580 = vmul.f32 %v1579, %v1464
  %v1581 = vmul.f32 %v1580, %v1579
  %v1582 = vmul.f32 0.5, %v1581
  %v1583 = vsub.f32 1.5, %v1582
  %v1584 = vmul.f32 %v1579, %v1583
  %vm1585 = vweird.f32 %v1464
  %vm1586 = vweird.f32 %v1579
  %vm1587 = vmor %vm1585, %vm1586
  %v1588 = vsel %vm1587, %v1579, %v1584
  %v1589 = vrsqrt.pop %v1465
  %v1590 = vmul.f32 %v1589, %v1465
  %v1591 = vmul.f32 %v1590, %v1589
  %v1592 = vmul.f32 0.5, %v1591
  %v1593 = vsub.f32 1.5, %v1592
  %v1594 = vmul.f32 %v1589, %v1593
  %vm1595 = vweird.f32 %v1465
  %vm1596 = vweird.f32 %v1589
  %vm1597 = vmor %vm1595, %vm1596
  %v1598 = vsel %vm1597, %v1589, %v1594
  %v1599 = vrsqrt.pop %v1466
  %v1600 = vmul.f32 %v1599, %v1466
  %v1601 = vmul.f32 %v1600, %v1599
  %v1602 = vmul.f32 0.5, %v1601
  %v1603 = vsub.f32 1.5, %v1602
  %v1604 = vmul.f32 %v1599, %v1603
  %vm1605 = vweird.f32 %v1466
  %vm1606 = vweird.f32 %v1599
  %vm1607 = vmor %vm1605, %vm1606
  %v1608 = vsel %vm1607, %v1599, %v1604
  %v1609 = vrsqrt.pop %v1467
  %v1610 = vmul.f32 %v1609, %v1467
  %v1611 = vmul.f32 %v1610, %v1609
  %v1612 = vmul.f32 0.5, %v1611
  %v1613 = vsub.f32 1.5, %v1612
  %v1614 = vmul.f32 %v1609, %v1613
  %vm1615 = vweird.f32 %v1467
  %vm1616 = vweird.f32 %v1609
  %vm1617 = vmor %vm1615, %vm1616
  %v1618 = vsel %vm1617, %v1609, %v1614
  %v1619 = vrsqrt.pop %v1468
  %v1620 = vmul.f32 %v1619, %v1468
  %v1621 = vmul.f32 %v1620, %v1619
  %v1622 = vmul.f32 0.5, %v1621
  %v1623 = vsub.f32 1.5, %v1622
  %v1624 = vmul.f32 %v1619, %v1623
  %vm1625 = vweird.f32 %v1468
  %vm1626 = vweird.f32 %v1619
  %vm1627 = vmor %vm1625, %vm1626
  %v1628 = vsel %vm1627, %v1619, %v1624
  %v1629 = vmul.f32 %v1357, %v1478
  %v1630 = vmul.f32 %v1358, %v1488
  %v1631 = vmul.f32 %v1359, %v1498
  %v1632 = vmul.f32 %v1360, %v1508
  %v1633 = vmul.f32 %v1361, %v1518
  %v1634 = vmul.f32 %v1362, %v1528
  %v1635 = vmul.f32 %v1363, %v1538
  %v1636 = vmul.f32 %v1364, %v1548
  %v1637 = vmul.f32 %v1365, %v1558
  %v1638 = vmul.f32 %v1366, %v1568
  %v1639 = vmul.f32 %v1367, %v1578
  %v1640 = vmul.f32 %v1368, %v1588
  %v1641 = vmul.f32 %v1369, %v1598
  %v1642 = vmul.f32 %v1370, %v1608
  %v1643 = vmul.f32 %v1371, %v1618
  %v1644 = vmul.f32 %v1372, %v1628
  %v1645 = vperm.slane %v197, 3
  %v1646 = vmul.f32 %v1629, %v1645
  %v1647 = vmul.f32 %v1630, %v1645
  %v1648 = vmul.f32 %v1631, %v1645
  %v1649 = vmul.f32 %v1632, %v1645
  %v1650 = vmul.f32 %v1633, %v1645
  %v1651 = vmul.f32 %v1634, %v1645
  %v1652 = vmul.f32 %v1635, %v1645
  %v1653 = vmul.f32 %v1636, %v1645
  %v1654 = vmul.f32 %v1637, %v1645
  %v1655 = vmul.f32 %v1638, %v1645
  %v1656 = vmul.f32 %v1639, %v1645
  %v1657 = vmul.f32 %v1640, %v1645
  %v1658 = vmul.f32 %v1641, %v1645
  %v1659 = vmul.f32 %v1642, %v1645
  %v1660 = vmul.f32 %v1643, %v1645
  %v1661 = vmul.f32 %v1644, %v1645
  %v1662 = vperm.slane %v197, 4
  %v1663 = vadd.f32 %v1646, %v1662
  %v1664 = vadd.f32 %v1647, %v1662
  %v1665 = vadd.f32 %v1648, %v1662
  %v1666 = vadd.f32 %v1649, %v1662
  %v1667 = vadd.f32 %v1650, %v1662
  %v1668 = vadd.f32 %v1651, %v1662
  %v1669 = vadd.f32 %v1652, %v1662
  %v1670 = vadd.f32 %v1653, %v1662
  %v1671 = vadd.f32 %v1654, %v1662
  %v1672 = vadd.f32 %v1655, %v1662
  %v1673 = vadd.f32 %v1656, %v1662
  %v1674 = vadd.f32 %v1657, %v1662
  %v1675 = vadd.f32 %v1658, %v1662
  %v1676 = vadd.f32 %v1659, %v1662
  %v1677 = vadd.f32 %v1660, %v1662
  %v1678 = vadd.f32 %v1661, %v1662
  %v1679 = vpack.c.bf16 %v1664, %v1663
  %v1680 = vpack.c.bf16 %v1666, %v1665
  %v1681 = vpack.c.bf16 %v1668, %v1667
  %v1682 = vpack.c.bf16 %v1670, %v1669
  %v1683 = vpack.c.bf16 %v1672, %v1671
  %v1684 = vpack.c.bf16 %v1674, %v1673
  %v1685 = vpack.c.bf16 %v1676, %v1675
  %v1686 = vpack.c.bf16 %v1678, %v1677
  %v1687 = vpack.c.bf16 %v199, %v198
  %v1688 = vpack.c.bf16 %v201, %v200
  %v1689 = vperm.slane %v197, 1
  %v1691 = vsel %vm217, %v1679, 0
  %v1694 = vsel %vm217, %v1680, 0
  %v1697 = vsel %vm217, %v1681, 0
  %v1700 = vsel %vm217, %v1682, 0
  %v1703 = vsel %vm217, %v1683, 0
  %v1706 = vsel %vm217, %v1684, 0
  %v1709 = vsel %vm217, %v1685, 0
  %v1712 = vsel %vm217, %v1686, 0
  %1714 = vmatpush.bf16.msra.mxu0 0
  %1715 = vmatpush.bf16.msra.mxu0 0
  %1716 = vmatpush.bf16.msra.mxu0 0
  %1717 = vmatpush.bf16.msra.mxu0 0
  %1718 = vmatpush.bf16.msra.mxu0 0
  %1719 = vmatpush.bf16.msra.mxu0 0
  %1720 = vmatpush.bf16.msra.mxu0 %v1688
  %1721 = vmatpush.bf16.msra.mxu0 %v1687
  %1722 = vmatmul.bf16.gmra.mxu0 %v1691
  %v1723 = vpop.f32.mrf.mxu0
  %v1724 = vadd.f32 %v1689, %v1723
  %v1725 = vpop.f32.mrf.mxu0
  %v1726 = vadd.f32 %v1689, %v1725
  %1727 = vmatmul.bf16.gmra.mxu0 %v1694
  %v1728 = vpop.f32.mrf.mxu0
  %v1729 = vadd.f32 %v1689, %v1728
  %v1730 = vpop.f32.mrf.mxu0
  %v1731 = vadd.f32 %v1689, %v1730
  %1732 = vmatmul.bf16.gmra.mxu0 %v1697
  %v1733 = vpop.f32.mrf.mxu0
  %v1734 = vadd.f32 %v1689, %v1733
  %v1735 = vpop.f32.mrf.mxu0
  %v1736 = vadd.f32 %v1689, %v1735
  %1737 = vmatmul.bf16.gmra.mxu0 %v1700
  %v1738 = vpop.f32.mrf.mxu0
  %v1739 = vadd.f32 %v1689, %v1738
  %v1740 = vpop.f32.mrf.mxu0
  %v1741 = vadd.f32 %v1689, %v1740
  %1742 = vmatmul.bf16.gmra.mxu0 %v1703
  %v1743 = vpop.f32.mrf.mxu0
  %v1744 = vadd.f32 %v1689, %v1743
  %v1745 = vpop.f32.mrf.mxu0
  %v1746 = vadd.f32 %v1689, %v1745
  %1747 = vmatmul.bf16.gmra.mxu0 %v1706
  %v1748 = vpop.f32.mrf.mxu0
  %v1749 = vadd.f32 %v1689, %v1748
  %v1750 = vpop.f32.mrf.mxu0
  %v1751 = vadd.f32 %v1689, %v1750
  %1752 = vmatmul.bf16.gmra.mxu0 %v1709
  %v1753 = vpop.f32.mrf.mxu0
  %v1754 = vadd.f32 %v1689, %v1753
  %v1755 = vpop.f32.mrf.mxu0
  %v1756 = vadd.f32 %v1689, %v1755
  %1757 = vmatmul.bf16.gmra.mxu0 %v1712
  %v1758 = vpop.f32.mrf.mxu0
  %v1759 = vadd.f32 %v1689, %v1758
  %v1760 = vpop.f32.mrf.mxu0
  %v1761 = vadd.f32 %v1689, %v1760
  %1762 = vdwg.mxu0
  %v1763 = vmul.f32 %v1724, %v1724
  %v1764 = vmul.f32 %v1726, %v1726
  %v1765 = vmul.f32 %v1729, %v1729
  %v1766 = vmul.f32 %v1731, %v1731
  %v1767 = vmul.f32 %v1734, %v1734
  %v1768 = vmul.f32 %v1736, %v1736
  %v1769 = vmul.f32 %v1739, %v1739
  %v1770 = vmul.f32 %v1741, %v1741
  %v1771 = vmul.f32 %v1744, %v1744
  %v1772 = vmul.f32 %v1746, %v1746
  %v1773 = vmul.f32 %v1749, %v1749
  %v1774 = vmul.f32 %v1751, %v1751
  %v1775 = vmul.f32 %v1754, %v1754
  %v1776 = vmul.f32 %v1756, %v1756
  %v1777 = vmul.f32 %v1759, %v1759
  %v1778 = vmul.f32 %v1761, %v1761
  %v1779 = vmul.f32 %v1724, %v1763
  %v1780 = vmul.f32 %v1726, %v1764
  %v1781 = vmul.f32 %v1729, %v1765
  %v1782 = vmul.f32 %v1731, %v1766
  %v1783 = vmul.f32 %v1734, %v1767
  %v1784 = vmul.f32 %v1736, %v1768
  %v1785 = vmul.f32 %v1739, %v1769
  %v1786 = vmul.f32 %v1741, %v1770
  %v1787 = vmul.f32 %v1744, %v1771
  %v1788 = vmul.f32 %v1746, %v1772
  %v1789 = vmul.f32 %v1749, %v1773
  %v1790 = vmul.f32 %v1751, %v1774
  %v1791 = vmul.f32 %v1754, %v1775
  %v1792 = vmul.f32 %v1756, %v1776
  %v1793 = vmul.f32 %v1759, %v1777
  %v1794 = vmul.f32 %v1761, %v1778
  %v1795 = vmul.f32 %v1779, 0.044715
  %v1796 = vmul.f32 %v1780, 0.044715
  %v1797 = vmul.f32 %v1781, 0.044715
  %v1798 = vmul.f32 %v1782, 0.044715
  %v1799 = vmul.f32 %v1783, 0.044715
  %v1800 = vmul.f32 %v1784, 0.044715
  %v1801 = vmul.f32 %v1785, 0.044715
  %v1802 = vmul.f32 %v1786, 0.044715
  %v1803 = vmul.f32 %v1787, 0.044715
  %v1804 = vmul.f32 %v1788, 0.044715
  %v1805 = vmul.f32 %v1789, 0.044715
  %v1806 = vmul.f32 %v1790, 0.044715
  %v1807 = vmul.f32 %v1791, 0.044715
  %v1808 = vmul.f32 %v1792, 0.044715
  %v1809 = vmul.f32 %v1793, 0.044715
  %v1810 = vmul.f32 %v1794, 0.044715
  %v1811 = vadd.f32 %v1724, %v1795
  %v1812 = vadd.f32 %v1726, %v1796
  %v1813 = vadd.f32 %v1729, %v1797
  %v1814 = vadd.f32 %v1731, %v1798
  %v1815 = vadd.f32 %v1734, %v1799
  %v1816 = vadd.f32 %v1736, %v1800
  %v1817 = vadd.f32 %v1739, %v1801
  %v1818 = vadd.f32 %v1741, %v1802
  %v1819 = vadd.f32 %v1744, %v1803
  %v1820 = vadd.f32 %v1746, %v1804
  %v1821 = vadd.f32 %v1749, %v1805
  %v1822 = vadd.f32 %v1751, %v1806
  %v1823 = vadd.f32 %v1754, %v1807
  %v1824 = vadd.f32 %v1756, %v1808
  %v1825 = vadd.f32 %v1759, %v1809
  %v1826 = vadd.f32 %v1761, %v1810
  %v1827 = vmul.f32 %v1811, 0.7978846
  %v1828 = vmul.f32 %v1812, 0.7978846
  %v1829 = vmul.f32 %v1813, 0.7978846
  %v1830 = vmul.f32 %v1814, 0.7978846
  %v1831 = vmul.f32 %v1815, 0.7978846
  %v1832 = vmul.f32 %v1816, 0.7978846
  %v1833 = vmul.f32 %v1817, 0.7978846
  %v1834 = vmul.f32 %v1818, 0.7978846
  %v1835 = vmul.f32 %v1819, 0.7978846
  %v1836 = vmul.f32 %v1820, 0.7978846
  %v1837 = vmul.f32 %v1821, 0.7978846
  %v1838 = vmul.f32 %v1822, 0.7978846
  %v1839 = vmul.f32 %v1823, 0.7978846
  %v1840 = vmul.f32 %v1824, 0.7978846
  %v1841 = vmul.f32 %v1825, 0.7978846
  %v1842 = vmul.f32 %v1826, 0.7978846
  %v1843 = vtanh.pop %v1827
  %v1844 = vtanh.pop %v1828
  %v1845 = vtanh.pop %v1829
  %v1846 = vtanh.pop %v1830
  %v1847 = vtanh.pop %v1831
  %v1848 = vtanh.pop %v1832
  %v1849 = vtanh.pop %v1833
  %v1850 = vtanh.pop %v1834
  %v1851 = vtanh.pop %v1835
  %v1852 = vtanh.pop %v1836
  %v1853 = vtanh.pop %v1837
  %v1854 = vtanh.pop %v1838
  %v1855 = vtanh.pop %v1839
  %v1856 = vtanh.pop %v1840
  %v1857 = vtanh.pop %v1841
  %v1858 = vtanh.pop %v1842
  %v1859 = vadd.f32 %v1843, 1.0
  %v1860 = vadd.f32 %v1844, 1.0
  %v1861 = vadd.f32 %v1845, 1.0
  %v1862 = vadd.f32 %v1846, 1.0
  %v1863 = vadd.f32 %v1847, 1.0
  %v1864 = vadd.f32 %v1848, 1.0
  %v1865 = vadd.f32 %v1849, 1.0
  %v1866 = vadd.f32 %v1850, 1.0
  %v1867 = vadd.f32 %v1851, 1.0
  %v1868 = vadd.f32 %v1852, 1.0
  %v1869 = vadd.f32 %v1853, 1.0
  %v1870 = vadd.f32 %v1854, 1.0
  %v1871 = vadd.f32 %v1855, 1.0
  %v1872 = vadd.f32 %v1856, 1.0
  %v1873 = vadd.f32 %v1857, 1.0
  %v1874 = vadd.f32 %v1858, 1.0
  %v1875 = vmul.f32 %v1859, 0.5
  %v1876 = vmul.f32 %v1860, 0.5
  %v1877 = vmul.f32 %v1861, 0.5
  %v1878 = vmul.f32 %v1862, 0.5
  %v1879 = vmul.f32 %v1863, 0.5
  %v1880 = vmul.f32 %v1864, 0.5
  %v1881 = vmul.f32 %v1865, 0.5
  %v1882 = vmul.f32 %v1866, 0.5
  %v1883 = vmul.f32 %v1867, 0.5
  %v1884 = vmul.f32 %v1868, 0.5
  %v1885 = vmul.f32 %v1869, 0.5
  %v1886 = vmul.f32 %v1870, 0.5
  %v1887 = vmul.f32 %v1871, 0.5
  %v1888 = vmul.f32 %v1872, 0.5
  %v1889 = vmul.f32 %v1873, 0.5
  %v1890 = vmul.f32 %v1874, 0.5
  %v1891 = vmul.f32 %v1724, %v1875
  %v1892 = vmul.f32 %v1726, %v1876
  %v1893 = vmul.f32 %v1729, %v1877
  %v1894 = vmul.f32 %v1731, %v1878
  %v1895 = vmul.f32 %v1734, %v1879
  %v1896 = vmul.f32 %v1736, %v1880
  %v1897 = vmul.f32 %v1739, %v1881
  %v1898 = vmul.f32 %v1741, %v1882
  %v1899 = vmul.f32 %v1744, %v1883
  %v1900 = vmul.f32 %v1746, %v1884
  %v1901 = vmul.f32 %v1749, %v1885
  %v1902 = vmul.f32 %v1751, %v1886
  %v1903 = vmul.f32 %v1754, %v1887
  %v1904 = vmul.f32 %v1756, %v1888
  %v1905 = vmul.f32 %v1759, %v1889
  %v1906 = vmul.f32 %v1761, %v1890
  %v1907 = vpack.c.bf16 %v1892, %v1891
  %v1908 = vpack.c.bf16 %v1894, %v1893
  %v1909 = vpack.c.bf16 %v1896, %v1895
  %v1910 = vpack.c.bf16 %v1898, %v1897
  %v1911 = vpack.c.bf16 %v1900, %v1899
  %v1912 = vpack.c.bf16 %v1902, %v1901
  %v1913 = vpack.c.bf16 %v1904, %v1903
  %v1914 = vpack.c.bf16 %v1906, %v1905
  %v1915 = vpack.c.bf16 %v203, %v202
  %v1916 = vpack.c.bf16 %v205, %v204
  %v1917 = vperm.slane %v197, 2
  %v1919 = vsel %vm217, %v1907, 0
  %v1922 = vsel %vm217, %v1908, 0
  %v1925 = vsel %vm217, %v1909, 0
  %v1928 = vsel %vm217, %v1910, 0
  %v1931 = vsel %vm217, %v1911, 0
  %v1934 = vsel %vm217, %v1912, 0
  %v1937 = vsel %vm217, %v1913, 0
  %v1940 = vsel %vm217, %v1914, 0
  %1942 = vmatpush.bf16.msra.mxu0 0
  %1943 = vmatpush.bf16.msra.mxu0 0
  %1944 = vmatpush.bf16.msra.mxu0 0
  %1945 = vmatpush.bf16.msra.mxu0 0
  %1946 = vmatpush.bf16.msra.mxu0 0
  %1947 = vmatpush.bf16.msra.mxu0 0
  %1948 = vmatpush.bf16.msra.mxu0 %v1916
  %1949 = vmatpush.bf16.msra.mxu0 %v1915
  %1950 = vmatmul.bf16.gmra.mxu0 %v1919
  %v1951 = vpop.f32.mrf.mxu0
  %v1952 = vadd.f32 %v1917, %v1951
  %v1953 = vpop.f32.mrf.mxu0
  %v1954 = vadd.f32 %v1917, %v1953
  %1955 = vmatmul.bf16.gmra.mxu0 %v1922
  %v1956 = vpop.f32.mrf.mxu0
  %v1957 = vadd.f32 %v1917, %v1956
  %v1958 = vpop.f32.mrf.mxu0
  %v1959 = vadd.f32 %v1917, %v1958
  %1960 = vmatmul.bf16.gmra.mxu0 %v1925
  %v1961 = vpop.f32.mrf.mxu0
  %v1962 = vadd.f32 %v1917, %v1961
  %v1963 = vpop.f32.mrf.mxu0
  %v1964 = vadd.f32 %v1917, %v1963
  %1965 = vmatmul.bf16.gmra.mxu0 %v1928
  %v1966 = vpop.f32.mrf.mxu0
  %v1967 = vadd.f32 %v1917, %v1966
  %v1968 = vpop.f32.mrf.mxu0
  %v1969 = vadd.f32 %v1917, %v1968
  %1970 = vmatmul.bf16.gmra.mxu0 %v1931
  %v1971 = vpop.f32.mrf.mxu0
  %v1972 = vadd.f32 %v1917, %v1971
  %v1973 = vpop.f32.mrf.mxu0
  %v1974 = vadd.f32 %v1917, %v1973
  %1975 = vmatmul.bf16.gmra.mxu0 %v1934
  %v1976 = vpop.f32.mrf.mxu0
  %v1977 = vadd.f32 %v1917, %v1976
  %v1978 = vpop.f32.mrf.mxu0
  %v1979 = vadd.f32 %v1917, %v1978
  %1980 = vmatmul.bf16.gmra.mxu0 %v1937
  %v1981 = vpop.f32.mrf.mxu0
  %v1982 = vadd.f32 %v1917, %v1981
  %v1983 = vpop.f32.mrf.mxu0
  %v1984 = vadd.f32 %v1917, %v1983
  %1985 = vmatmul.bf16.gmra.mxu0 %v1940
  %v1986 = vpop.f32.mrf.mxu0
  %v1987 = vadd.f32 %v1917, %v1986
  %v1988 = vpop.f32.mrf.mxu0
  %v1989 = vadd.f32 %v1917, %v1988
  %1990 = vdwg.mxu0
  %v1991 = vadd.f32 %v1663, %v1952
  %v1992 = vadd.f32 %v1664, %v1954
  %v1993 = vadd.f32 %v1665, %v1957
  %v1994 = vadd.f32 %v1666, %v1959
  %v1995 = vadd.f32 %v1667, %v1962
  %v1996 = vadd.f32 %v1668, %v1964
  %v1997 = vadd.f32 %v1669, %v1967
  %v1998 = vadd.f32 %v1670, %v1969
  %v1999 = vadd.f32 %v1671, %v1972
  %v2000 = vadd.f32 %v1672, %v1974
  %v2001 = vadd.f32 %v1673, %v1977
  %v2002 = vadd.f32 %v1674, %v1979
  %v2003 = vadd.f32 %v1675, %v1982
  %v2004 = vadd.f32 %v1676, %v1984
  %v2005 = vadd.f32 %v1677, %v1987
  %v2006 = vadd.f32 %v1678, %v1989
  %v2007 = vsel %vm217, %v1991, 0.0
  %2008 = vadd.xlane.f32.xlu0 %v2007
  %v2009 = vpop.xlane.xlu0 %2008
  %v2010 = vsel %vm217, %v1992, 0.0
  %2011 = vadd.xlane.f32.xlu0 %v2010
  %v2012 = vpop.xlane.xlu0 %2011
  %v2013 = vsel %vm217, %v1993, 0.0
  %2014 = vadd.xlane.f32.xlu0 %v2013
  %v2015 = vpop.xlane.xlu0 %2014
  %v2016 = vsel %vm217, %v1994, 0.0
  %2017 = vadd.xlane.f32.xlu0 %v2016
  %v2018 = vpop.xlane.xlu0 %2017
  %v2019 = vsel %vm217, %v1995, 0.0
  %2020 = vadd.xlane.f32.xlu0 %v2019
  %v2021 = vpop.xlane.xlu0 %2020
  %v2022 = vsel %vm217, %v1996, 0.0
  %2023 = vadd.xlane.f32.xlu0 %v2022
  %v2024 = vpop.xlane.xlu0 %2023
  %v2025 = vsel %vm217, %v1997, 0.0
  %2026 = vadd.xlane.f32.xlu0 %v2025
  %v2027 = vpop.xlane.xlu0 %2026
  %v2028 = vsel %vm217, %v1998, 0.0
  %2029 = vadd.xlane.f32.xlu0 %v2028
  %v2030 = vpop.xlane.xlu0 %2029
  %v2031 = vsel %vm217, %v1999, 0.0
  %2032 = vadd.xlane.f32.xlu0 %v2031
  %v2033 = vpop.xlane.xlu0 %2032
  %v2034 = vsel %vm217, %v2000, 0.0
  %2035 = vadd.xlane.f32.xlu0 %v2034
  %v2036 = vpop.xlane.xlu0 %2035
  %v2037 = vsel %vm217, %v2001, 0.0
  %2038 = vadd.xlane.f32.xlu0 %v2037
  %v2039 = vpop.xlane.xlu0 %2038
  %v2040 = vsel %vm217, %v2002, 0.0
  %2041 = vadd.xlane.f32.xlu0 %v2040
  %v2042 = vpop.xlane.xlu0 %2041
  %v2043 = vsel %vm217, %v2003, 0.0
  %2044 = vadd.xlane.f32.xlu0 %v2043
  %v2045 = vpop.xlane.xlu0 %2044
  %v2046 = vsel %vm217, %v2004, 0.0
  %2047 = vadd.xlane.f32.xlu0 %v2046
  %v2048 = vpop.xlane.xlu0 %2047
  %v2049 = vsel %vm217, %v2005, 0.0
  %2050 = vadd.xlane.f32.xlu0 %v2049
  %v2051 = vpop.xlane.xlu0 %2050
  %v2052 = vsel %vm217, %v2006, 0.0
  %2053 = vadd.xlane.f32.xlu0 %v2052
  %v2054 = vpop.xlane.xlu0 %2053
  %v2055 = vmul.f32 %v2009, %v1340
  %v2056 = vmul.f32 %v2012, %v1340
  %v2057 = vmul.f32 %v2015, %v1340
  %v2058 = vmul.f32 %v2018, %v1340
  %v2059 = vmul.f32 %v2021, %v1340
  %v2060 = vmul.f32 %v2024, %v1340
  %v2061 = vmul.f32 %v2027, %v1340
  %v2062 = vmul.f32 %v2030, %v1340
  %v2063 = vmul.f32 %v2033, %v1340
  %v2064 = vmul.f32 %v2036, %v1340
  %v2065 = vmul.f32 %v2039, %v1340
  %v2066 = vmul.f32 %v2042, %v1340
  %v2067 = vmul.f32 %v2045, %v1340
  %v2068 = vmul.f32 %v2048, %v1340
  %v2069 = vmul.f32 %v2051, %v1340
  %v2070 = vmul.f32 %v2054, %v1340
  %v2071 = vsub.f32 %v1991, %v2055
  %v2072 = vsub.f32 %v1992, %v2056
  %v2073 = vsub.f32 %v1993, %v2057
  %v2074 = vsub.f32 %v1994, %v2058
  %v2075 = vsub.f32 %v1995, %v2059
  %v2076 = vsub.f32 %v1996, %v2060
  %v2077 = vsub.f32 %v1997, %v2061
  %v2078 = vsub.f32 %v1998, %v2062
  %v2079 = vsub.f32 %v1999, %v2063
  %v2080 = vsub.f32 %v2000, %v2064
  %v2081 = vsub.f32 %v2001, %v2065
  %v2082 = vsub.f32 %v2002, %v2066
  %v2083 = vsub.f32 %v2003, %v2067
  %v2084 = vsub.f32 %v2004, %v2068
  %v2085 = vsub.f32 %v2005, %v2069
  %v2086 = vsub.f32 %v2006, %v2070
  %v2087 = vmul.f32 %v2071, %v2071
  %v2088 = vmul.f32 %v2072, %v2072
  %v2089 = vmul.f32 %v2073, %v2073
  %v2090 = vmul.f32 %v2074, %v2074
  %v2091 = vmul.f32 %v2075, %v2075
  %v2092 = vmul.f32 %v2076, %v2076
  %v2093 = vmul.f32 %v2077, %v2077
  %v2094 = vmul.f32 %v2078, %v2078
  %v2095 = vmul.f32 %v2079, %v2079
  %v2096 = vmul.f32 %v2080, %v2080
  %v2097 = vmul.f32 %v2081, %v2081
  %v2098 = vmul.f32 %v2082, %v2082
  %v2099 = vmul.f32 %v2083, %v2083
  %v2100 = vmul.f32 %v2084, %v2084
  %v2101 = vmul.f32 %v2085, %v2085
  %v2102 = vmul.f32 %v2086, %v2086
  %v2103 = vsel %vm217, %v2087, 0.0
  %2104 = vadd.xlane.f32.xlu0 %v2103
  %v2105 = vpop.xlane.xlu0 %2104
  %v2106 = vsel %vm217, %v2088, 0.0
  %2107 = vadd.xlane.f32.xlu0 %v2106
  %v2108 = vpop.xlane.xlu0 %2107
  %v2109 = vsel %vm217, %v2089, 0.0
  %2110 = vadd.xlane.f32.xlu0 %v2109
  %v2111 = vpop.xlane.xlu0 %2110
  %v2112 = vsel %vm217, %v2090, 0.0
  %2113 = vadd.xlane.f32.xlu0 %v2112
  %v2114 = vpop.xlane.xlu0 %2113
  %v2115 = vsel %vm217, %v2091, 0.0
  %2116 = vadd.xlane.f32.xlu0 %v2115
  %v2117 = vpop.xlane.xlu0 %2116
  %v2118 = vsel %vm217, %v2092, 0.0
  %2119 = vadd.xlane.f32.xlu0 %v2118
  %v2120 = vpop.xlane.xlu0 %2119
  %v2121 = vsel %vm217, %v2093, 0.0
  %2122 = vadd.xlane.f32.xlu0 %v2121
  %v2123 = vpop.xlane.xlu0 %2122
  %v2124 = vsel %vm217, %v2094, 0.0
  %2125 = vadd.xlane.f32.xlu0 %v2124
  %v2126 = vpop.xlane.xlu0 %2125
  %v2127 = vsel %vm217, %v2095, 0.0
  %2128 = vadd.xlane.f32.xlu0 %v2127
  %v2129 = vpop.xlane.xlu0 %2128
  %v2130 = vsel %vm217, %v2096, 0.0
  %2131 = vadd.xlane.f32.xlu0 %v2130
  %v2132 = vpop.xlane.xlu0 %2131
  %v2133 = vsel %vm217, %v2097, 0.0
  %2134 = vadd.xlane.f32.xlu0 %v2133
  %v2135 = vpop.xlane.xlu0 %2134
  %v2136 = vsel %vm217, %v2098, 0.0
  %2137 = vadd.xlane.f32.xlu0 %v2136
  %v2138 = vpop.xlane.xlu0 %2137
  %v2139 = vsel %vm217, %v2099, 0.0
  %2140 = vadd.xlane.f32.xlu0 %v2139
  %v2141 = vpop.xlane.xlu0 %2140
  %v2142 = vsel %vm217, %v2100, 0.0
  %2143 = vadd.xlane.f32.xlu0 %v2142
  %v2144 = vpop.xlane.xlu0 %2143
  %v2145 = vsel %vm217, %v2101, 0.0
  %2146 = vadd.xlane.f32.xlu0 %v2145
  %v2147 = vpop.xlane.xlu0 %2146
  %v2148 = vsel %vm217, %v2102, 0.0
  %2149 = vadd.xlane.f32.xlu0 %v2148
  %v2150 = vpop.xlane.xlu0 %2149
  %v2151 = vmul.f32 %v2105, %v1340
  %v2152 = vmul.f32 %v2108, %v1340
  %v2153 = vmul.f32 %v2111, %v1340
  %v2154 = vmul.f32 %v2114, %v1340
  %v2155 = vmul.f32 %v2117, %v1340
  %v2156 = vmul.f32 %v2120, %v1340
  %v2157 = vmul.f32 %v2123, %v1340
  %v2158 = vmul.f32 %v2126, %v1340
  %v2159 = vmul.f32 %v2129, %v1340
  %v2160 = vmul.f32 %v2132, %v1340
  %v2161 = vmul.f32 %v2135, %v1340
  %v2162 = vmul.f32 %v2138, %v1340
  %v2163 = vmul.f32 %v2141, %v1340
  %v2164 = vmul.f32 %v2144, %v1340
  %v2165 = vmul.f32 %v2147, %v1340
  %v2166 = vmul.f32 %v2150, %v1340
  %v2167 = vadd.f32 %v2151, 1e-05
  %v2168 = vadd.f32 %v2152, 1e-05
  %v2169 = vadd.f32 %v2153, 1e-05
  %v2170 = vadd.f32 %v2154, 1e-05
  %v2171 = vadd.f32 %v2155, 1e-05
  %v2172 = vadd.f32 %v2156, 1e-05
  %v2173 = vadd.f32 %v2157, 1e-05
  %v2174 = vadd.f32 %v2158, 1e-05
  %v2175 = vadd.f32 %v2159, 1e-05
  %v2176 = vadd.f32 %v2160, 1e-05
  %v2177 = vadd.f32 %v2161, 1e-05
  %v2178 = vadd.f32 %v2162, 1e-05
  %v2179 = vadd.f32 %v2163, 1e-05
  %v2180 = vadd.f32 %v2164, 1e-05
  %v2181 = vadd.f32 %v2165, 1e-05
  %v2182 = vadd.f32 %v2166, 1e-05
  %v2183 = vrsqrt.pop %v2167
  %v2184 = vmul.f32 %v2183, %v2167
  %v2185 = vmul.f32 %v2184, %v2183
  %v2186 = vmul.f32 0.5, %v2185
  %v2187 = vsub.f32 1.5, %v2186
  %v2188 = vmul.f32 %v2183, %v2187
  %vm2189 = vweird.f32 %v2167
  %vm2190 = vweird.f32 %v2183
  %vm2191 = vmor %vm2189, %vm2190
  %v2192 = vsel %vm2191, %v2183, %v2188
  %v2193 = vrsqrt.pop %v2168
  %v2194 = vmul.f32 %v2193, %v2168
  %v2195 = vmul.f32 %v2194, %v2193
  %v2196 = vmul.f32 0.5, %v2195
  %v2197 = vsub.f32 1.5, %v2196
  %v2198 = vmul.f32 %v2193, %v2197
  %vm2199 = vweird.f32 %v2168
  %vm2200 = vweird.f32 %v2193
  %vm2201 = vmor %vm2199, %vm2200
  %v2202 = vsel %vm2201, %v2193, %v2198
  %v2203 = vrsqrt.pop %v2169
  %v2204 = vmul.f32 %v2203, %v2169
  %v2205 = vmul.f32 %v2204, %v2203
  %v2206 = vmul.f32 0.5, %v2205
  %v2207 = vsub.f32 1.5, %v2206
  %v2208 = vmul.f32 %v2203, %v2207
  %vm2209 = vweird.f32 %v2169
  %vm2210 = vweird.f32 %v2203
  %vm2211 = vmor %vm2209, %vm2210
  %v2212 = vsel %vm2211, %v2203, %v2208
  %v2213 = vrsqrt.pop %v2170
  %v2214 = vmul.f32 %v2213, %v2170
  %v2215 = vmul.f32 %v2214, %v2213
  %v2216 = vmul.f32 0.5, %v2215
  %v2217 = vsub.f32 1.5, %v2216
  %v2218 = vmul.f32 %v2213, %v2217
  %vm2219 = vweird.f32 %v2170
  %vm2220 = vweird.f32 %v2213
  %vm2221 = vmor %vm2219, %vm2220
  %v2222 = vsel %vm2221, %v2213, %v2218
  %v2223 = vrsqrt.pop %v2171
  %v2224 = vmul.f32 %v2223, %v2171
  %v2225 = vmul.f32 %v2224, %v2223
  %v2226 = vmul.f32 0.5, %v2225
  %v2227 = vsub.f32 1.5, %v2226
  %v2228 = vmul.f32 %v2223, %v2227
  %vm2229 = vweird.f32 %v2171
  %vm2230 = vweird.f32 %v2223
  %vm2231 = vmor %vm2229, %vm2230
  %v2232 = vsel %vm2231, %v2223, %v2228
  %v2233 = vrsqrt.pop %v2172
  %v2234 = vmul.f32 %v2233, %v2172
  %v2235 = vmul.f32 %v2234, %v2233
  %v2236 = vmul.f32 0.5, %v2235
  %v2237 = vsub.f32 1.5, %v2236
  %v2238 = vmul.f32 %v2233, %v2237
  %vm2239 = vweird.f32 %v2172
  %vm2240 = vweird.f32 %v2233
  %vm2241 = vmor %vm2239, %vm2240
  %v2242 = vsel %vm2241, %v2233, %v2238
  %v2243 = vrsqrt.pop %v2173
  %v2244 = vmul.f32 %v2243, %v2173
  %v2245 = vmul.f32 %v2244, %v2243
  %v2246 = vmul.f32 0.5, %v2245
  %v2247 = vsub.f32 1.5, %v2246
  %v2248 = vmul.f32 %v2243, %v2247
  %vm2249 = vweird.f32 %v2173
  %vm2250 = vweird.f32 %v2243
  %vm2251 = vmor %vm2249, %vm2250
  %v2252 = vsel %vm2251, %v2243, %v2248
  %v2253 = vrsqrt.pop %v2174
  %v2254 = vmul.f32 %v2253, %v2174
  %v2255 = vmul.f32 %v2254, %v2253
  %v2256 = vmul.f32 0.5, %v2255
  %v2257 = vsub.f32 1.5, %v2256
  %v2258 = vmul.f32 %v2253, %v2257
  %vm2259 = vweird.f32 %v2174
  %vm2260 = vweird.f32 %v2253
  %vm2261 = vmor %vm2259, %vm2260
  %v2262 = vsel %vm2261, %v2253, %v2258
  %v2263 = vrsqrt.pop %v2175
  %v2264 = vmul.f32 %v2263, %v2175
  %v2265 = vmul.f32 %v2264, %v2263
  %v2266 = vmul.f32 0.5, %v2265
  %v2267 = vsub.f32 1.5, %v2266
  %v2268 = vmul.f32 %v2263, %v2267
  %vm2269 = vweird.f32 %v2175
  %vm2270 = vweird.f32 %v2263
  %vm2271 = vmor %vm2269, %vm2270
  %v2272 = vsel %vm2271, %v2263, %v2268
  %v2273 = vrsqrt.pop %v2176
  %v2274 = vmul.f32 %v2273, %v2176
  %v2275 = vmul.f32 %v2274, %v2273
  %v2276 = vmul.f32 0.5, %v2275
  %v2277 = vsub.f32 1.5, %v2276
  %v2278 = vmul.f32 %v2273, %v2277
  %vm2279 = vweird.f32 %v2176
  %vm2280 = vweird.f32 %v2273
  %vm2281 = vmor %vm2279, %vm2280
  %v2282 = vsel %vm2281, %v2273, %v2278
  %v2283 = vrsqrt.pop %v2177
  %v2284 = vmul.f32 %v2283, %v2177
  %v2285 = vmul.f32 %v2284, %v2283
  %v2286 = vmul.f32 0.5, %v2285
  %v2287 = vsub.f32 1.5, %v2286
  %v2288 = vmul.f32 %v2283, %v2287
  %vm2289 = vweird.f32 %v2177
  %vm2290 = vweird.f32 %v2283
  %vm2291 = vmor %vm2289, %vm2290
  %v2292 = vsel %vm2291, %v2283, %v2288
  %v2293 = vrsqrt.pop %v2178
  %v2294 = vmul.f32 %v2293, %v2178
  %v2295 = vmul.f32 %v2294, %v2293
  %v2296 = vmul.f32 0.5, %v2295
  %v2297 = vsub.f32 1.5, %v2296
  %v2298 = vmul.f32 %v2293, %v2297
  %vm2299 = vweird.f32 %v2178
  %vm2300 = vweird.f32 %v2293
  %vm2301 = vmor %vm2299, %vm2300
  %v2302 = vsel %vm2301, %v2293, %v2298
  %v2303 = vrsqrt.pop %v2179
  %v2304 = vmul.f32 %v2303, %v2179
  %v2305 = vmul.f32 %v2304, %v2303
  %v2306 = vmul.f32 0.5, %v2305
  %v2307 = vsub.f32 1.5, %v2306
  %v2308 = vmul.f32 %v2303, %v2307
  %vm2309 = vweird.f32 %v2179
  %vm2310 = vweird.f32 %v2303
  %vm2311 = vmor %vm2309, %vm2310
  %v2312 = vsel %vm2311, %v2303, %v2308
  %v2313 = vrsqrt.pop %v2180
  %v2314 = vmul.f32 %v2313, %v2180
  %v2315 = vmul.f32 %v2314, %v2313
  %v2316 = vmul.f32 0.5, %v2315
  %v2317 = vsub.f32 1.5, %v2316
  %v2318 = vmul.f32 %v2313, %v2317
  %vm2319 = vweird.f32 %v2180
  %vm2320 = vweird.f32 %v2313
  %vm2321 = vmor %vm2319, %vm2320
  %v2322 = vsel %vm2321, %v2313, %v2318
  %v2323 = vrsqrt.pop %v2181
  %v2324 = vmul.f32 %v2323, %v2181
  %v2325 = vmul.f32 %v2324, %v2323
  %v2326 = vmul.f32 0.5, %v2325
  %v2327 = vsub.f32 1.5, %v2326
  %v2328 = vmul.f32 %v2323, %v2327
  %vm2329 = vweird.f32 %v2181
  %vm2330 = vweird.f32 %v2323
  %vm2331 = vmor %vm2329, %vm2330
  %v2332 = vsel %vm2331, %v2323, %v2328
  %v2333 = vrsqrt.pop %v2182
  %v2334 = vmul.f32 %v2333, %v2182
  %v2335 = vmul.f32 %v2334, %v2333
  %v2336 = vmul.f32 0.5, %v2335
  %v2337 = vsub.f32 1.5, %v2336
  %v2338 = vmul.f32 %v2333, %v2337
  %vm2339 = vweird.f32 %v2182
  %vm2340 = vweird.f32 %v2333
  %vm2341 = vmor %vm2339, %vm2340
  %v2342 = vsel %vm2341, %v2333, %v2338
  %v2343 = vmul.f32 %v2071, %v2192
  %v2344 = vmul.f32 %v2072, %v2202
  %v2345 = vmul.f32 %v2073, %v2212
  %v2346 = vmul.f32 %v2074, %v2222
  %v2347 = vmul.f32 %v2075, %v2232
  %v2348 = vmul.f32 %v2076, %v2242
  %v2349 = vmul.f32 %v2077, %v2252
  %v2350 = vmul.f32 %v2078, %v2262
  %v2351 = vmul.f32 %v2079, %v2272
  %v2352 = vmul.f32 %v2080, %v2282
  %v2353 = vmul.f32 %v2081, %v2292
  %v2354 = vmul.f32 %v2082, %v2302
  %v2355 = vmul.f32 %v2083, %v2312
  %v2356 = vmul.f32 %v2084, %v2322
  %v2357 = vmul.f32 %v2085, %v2332
  %v2358 = vmul.f32 %v2086, %v2342
  %v2359 = vperm.slane %v197, 5
  %v2360 = vmul.f32 %v2343, %v2359
  %v2361 = vmul.f32 %v2344, %v2359
  %v2362 = vmul.f32 %v2345, %v2359
  %v2363 = vmul.f32 %v2346, %v2359
  %v2364 = vmul.f32 %v2347, %v2359
  %v2365 = vmul.f32 %v2348, %v2359
  %v2366 = vmul.f32 %v2349, %v2359
  %v2367 = vmul.f32 %v2350, %v2359
  %v2368 = vmul.f32 %v2351, %v2359
  %v2369 = vmul.f32 %v2352, %v2359
  %v2370 = vmul.f32 %v2353, %v2359
  %v2371 = vmul.f32 %v2354, %v2359
  %v2372 = vmul.f32 %v2355, %v2359
  %v2373 = vmul.f32 %v2356, %v2359
  %v2374 = vmul.f32 %v2357, %v2359
  %v2375 = vmul.f32 %v2358, %v2359
  %v2376 = vperm.slane %v197, 6
  %v2377 = vadd.f32 %v2360, %v2376
  %v2378 = vadd.f32 %v2361, %v2376
  %v2379 = vadd.f32 %v2362, %v2376
  %v2380 = vadd.f32 %v2363, %v2376
  %v2381 = vadd.f32 %v2364, %v2376
  %v2382 = vadd.f32 %v2365, %v2376
  %v2383 = vadd.f32 %v2366, %v2376
  %v2384 = vadd.f32 %v2367, %v2376
  %v2385 = vadd.f32 %v2368, %v2376
  %v2386 = vadd.f32 %v2369, %v2376
  %v2387 = vadd.f32 %v2370, %v2376
  %v2388 = vadd.f32 %v2371, %v2376
  %v2389 = vadd.f32 %v2372, %v2376
  %v2390 = vadd.f32 %v2373, %v2376
  %v2391 = vadd.f32 %v2374, %v2376
  %v2392 = vadd.f32 %v2375, %v2376
  %s2393 = scalar_lea.vmem %s4, 40
  %v2394 = vld [vmem:[%s2393] sm:$0xff]
  %v2395 = vld [vmem:[%s2393 + $0x8] sm:$0xff]
  %v2396 = vld [vmem:[%s2393 + $0x10] sm:$0xff]
  %v2397 = vld [vmem:[%s2393 + $0x18] sm:$0xff]
  %v2398 = vld [vmem:[%s2393 + $0x20] sm:$0xff]
  %s2399 = scalar_lea.vmem %s5, 168
  %v2400 = vld [vmem:[%s2399] sm:$0xff]
  %v2401 = vld [vmem:[%s2399 + $0x8] sm:$0xff]
  %v2402 = vld [vmem:[%s2399 + $0x10] sm:$0xff]
  %v2403 = vld [vmem:[%s2399 + $0x18] sm:$0xff]
  %v2404 = vld [vmem:[%s2399 + $0x20] sm:$0xff]
  %v2405 = vld [vmem:[%s2399 + $0x28] sm:$0xff]
  %v2406 = vld [vmem:[%s2399 + $0x30] sm:$0xff]
  %v2407 = vld [vmem:[%s2399 + $0x38] sm:$0xff]
  %v2408 = vld [vmem:[%s2399 + $0x40] sm:$0xff]
  %v2409 = vld [vmem:[%s2399 + $0x48] sm:$0xff]
  %v2410 = vld [vmem:[%s2399 + $0x50] sm:$0xff]
  %v2411 = vld [vmem:[%s2399 + $0x58] sm:$0xff]
  %v2412 = vld [vmem:[%s2399 + $0x60] sm:$0xff]
  %v2413 = vld [vmem:[%s2399 + $0x68] sm:$0xff]
  %v2414 = vld [vmem:[%s2399 + $0x70] sm:$0xff]
  %v2415 = vld [vmem:[%s2399 + $0x78] sm:$0xff]
  %v2416 = vld [vmem:[%s2399 + $0x80] sm:$0xff]
  %v2417 = vld [vmem:[%s2399 + $0x88] sm:$0xff]
  %v2418 = vld [vmem:[%s2399 + $0x90] sm:$0xff]
  %v2419 = vld [vmem:[%s2399 + $0x98] sm:$0xff]
  %v2420 = vld [vmem:[%s2399 + $0xa0] sm:$0xff]
  %v2421 = vpack.c.bf16 %v2378, %v2377
  %v2422 = vpack.c.bf16 %v2380, %v2379
  %v2423 = vpack.c.bf16 %v2382, %v2381
  %v2424 = vpack.c.bf16 %v2384, %v2383
  %v2425 = vpack.c.bf16 %v2386, %v2385
  %v2426 = vpack.c.bf16 %v2388, %v2387
  %v2427 = vpack.c.bf16 %v2390, %v2389
  %v2428 = vpack.c.bf16 %v2392, %v2391
  %v2429 = vpack.c.bf16 %v2395, %v2394
  %v2430 = vpack.c.bf16 %v2397, %v2396
  %v2431 = vperm.slane %v2398, 0
  %v2433 = vsel %vm217, %v2421, 0
  %v2436 = vsel %vm217, %v2422, 0
  %v2439 = vsel %vm217, %v2423, 0
  %v2442 = vsel %vm217, %v2424, 0
  %v2445 = vsel %vm217, %v2425, 0
  %v2448 = vsel %vm217, %v2426, 0
  %v2451 = vsel %vm217, %v2427, 0
  %v2454 = vsel %vm217, %v2428, 0
  %2456 = vmatpush.bf16.msra.mxu0 0
  %2457 = vmatpush.bf16.msra.mxu0 0
  %2458 = vmatpush.bf16.msra.mxu0 0
  %2459 = vmatpush.bf16.msra.mxu0 0
  %2460 = vmatpush.bf16.msra.mxu0 0
  %2461 = vmatpush.bf16.msra.mxu0 0
  %2462 = vmatpush.bf16.msra.mxu0 %v2430
  %2463 = vmatpush.bf16.msra.mxu0 %v2429
  %2464 = vmatmul.bf16.gmra.mxu0 %v2433
  %v2465 = vpop.f32.mrf.mxu0
  %v2466 = vadd.f32 %v2431, %v2465
  %v2467 = vpop.f32.mrf.mxu0
  %v2468 = vadd.f32 %v2431, %v2467
  %2469 = vmatmul.bf16.gmra.mxu0 %v2436
  %v2470 = vpop.f32.mrf.mxu0
  %v2471 = vadd.f32 %v2431, %v2470
  %v2472 = vpop.f32.mrf.mxu0
  %v2473 = vadd.f32 %v2431, %v2472
  %2474 = vmatmul.bf16.gmra.mxu0 %v2439
  %v2475 = vpop.f32.mrf.mxu0
  %v2476 = vadd.f32 %v2431, %v2475
  %v2477 = vpop.f32.mrf.mxu0
  %v2478 = vadd.f32 %v2431, %v2477
  %2479 = vmatmul.bf16.gmra.mxu0 %v2442
  %v2480 = vpop.f32.mrf.mxu0
  %v2481 = vadd.f32 %v2431, %v2480
  %v2482 = vpop.f32.mrf.mxu0
  %v2483 = vadd.f32 %v2431, %v2482
  %2484 = vmatmul.bf16.gmra.mxu0 %v2445
  %v2485 = vpop.f32.mrf.mxu0
  %v2486 = vadd.f32 %v2431, %v2485
  %v2487 = vpop.f32.mrf.mxu0
  %v2488 = vadd.f32 %v2431, %v2487
  %2489 = vmatmul.bf16.gmra.mxu0 %v2448
  %v2490 = vpop.f32.mrf.mxu0
  %v2491 = vadd.f32 %v2431, %v2490
  %v2492 = vpop.f32.mrf.mxu0
  %v2493 = vadd.f32 %v2431, %v2492
  %2494 = vmatmul.bf16.gmra.mxu0 %v2451
  %v2495 = vpop.f32.mrf.mxu0
  %v2496 = vadd.f32 %v2431, %v2495
  %v2497 = vpop.f32.mrf.mxu0
  %v2498 = vadd.f32 %v2431, %v2497
  %2499 = vmatmul.bf16.gmra.mxu0 %v2454
  %v2500 = vpop.f32.mrf.mxu0
  %v2501 = vadd.f32 %v2431, %v2500
  %v2502 = vpop.f32.mrf.mxu0
  %v2503 = vadd.f32 %v2431, %v2502
  %2504 = vdwg.mxu0
  %vm2505 = vcmp.gt.f32.partialorder %v2466, 0.0
  %vm2506 = vcmp.gt.f32.partialorder %v2468, 0.0
  %vm2507 = vcmp.gt.f32.partialorder %v2471, 0.0
  %vm2508 = vcmp.gt.f32.partialorder %v2473, 0.0
  %vm2509 = vcmp.gt.f32.partialorder %v2476, 0.0
  %vm2510 = vcmp.gt.f32.partialorder %v2478, 0.0
  %vm2511 = vcmp.gt.f32.partialorder %v2481, 0.0
  %vm2512 = vcmp.gt.f32.partialorder %v2483, 0.0
  %vm2513 = vcmp.gt.f32.partialorder %v2486, 0.0
  %vm2514 = vcmp.gt.f32.partialorder %v2488, 0.0
  %vm2515 = vcmp.gt.f32.partialorder %v2491, 0.0
  %vm2516 = vcmp.gt.f32.partialorder %v2493, 0.0
  %vm2517 = vcmp.gt.f32.partialorder %v2496, 0.0
  %vm2518 = vcmp.gt.f32.partialorder %v2498, 0.0
  %vm2519 = vcmp.gt.f32.partialorder %v2501, 0.0
  %vm2520 = vcmp.gt.f32.partialorder %v2503, 0.0
  %v2521 = vadd.f32 %v2466, 1.0
  %v2522 = vadd.f32 %v2468, 1.0
  %v2523 = vadd.f32 %v2471, 1.0
  %v2524 = vadd.f32 %v2473, 1.0
  %v2525 = vadd.f32 %v2476, 1.0
  %v2526 = vadd.f32 %v2478, 1.0
  %v2527 = vadd.f32 %v2481, 1.0
  %v2528 = vadd.f32 %v2483, 1.0
  %v2529 = vadd.f32 %v2486, 1.0
  %v2530 = vadd.f32 %v2488, 1.0
  %v2531 = vadd.f32 %v2491, 1.0
  %v2532 = vadd.f32 %v2493, 1.0
  %v2533 = vadd.f32 %v2496, 1.0
  %v2534 = vadd.f32 %v2498, 1.0
  %v2535 = vadd.f32 %v2501, 1.0
  %v2536 = vadd.f32 %v2503, 1.0
  %v2537 = vmul.f32 %v2466, 1.442695
  %v2538 = vpow.pop %v2537
  %v2539 = vmul.f32 %v2468, 1.442695
  %v2540 = vpow.pop %v2539
  %v2541 = vmul.f32 %v2471, 1.442695
  %v2542 = vpow.pop %v2541
  %v2543 = vmul.f32 %v2473, 1.442695
  %v2544 = vpow.pop %v2543
  %v2545 = vmul.f32 %v2476, 1.442695
  %v2546 = vpow.pop %v2545
  %v2547 = vmul.f32 %v2478, 1.442695
  %v2548 = vpow.pop %v2547
  %v2549 = vmul.f32 %v2481, 1.442695
  %v2550 = vpow.pop %v2549
  %v2551 = vmul.f32 %v2483, 1.442695
  %v2552 = vpow.pop %v2551
  %v2553 = vmul.f32 %v2486, 1.442695
  %v2554 = vpow.pop %v2553
  %v2555 = vmul.f32 %v2488, 1.442695
  %v2556 = vpow.pop %v2555
  %v2557 = vmul.f32 %v2491, 1.442695
  %v2558 = vpow.pop %v2557
  %v2559 = vmul.f32 %v2493, 1.442695
  %v2560 = vpow.pop %v2559
  %v2561 = vmul.f32 %v2496, 1.442695
  %v2562 = vpow.pop %v2561
  %v2563 = vmul.f32 %v2498, 1.442695
  %v2564 = vpow.pop %v2563
  %v2565 = vmul.f32 %v2501, 1.442695
  %v2566 = vpow.pop %v2565
  %v2567 = vmul.f32 %v2503, 1.442695
  %v2568 = vpow.pop %v2567
  %v2569 = vsel %vm2505, %v2521, %v2538
  %v2570 = vsel %vm2506, %v2522, %v2540
  %v2571 = vsel %vm2507, %v2523, %v2542
  %v2572 = vsel %vm2508, %v2524, %v2544
  %v2573 = vsel %vm2509, %v2525, %v2546
  %v2574 = vsel %vm2510, %v2526, %v2548
  %v2575 = vsel %vm2511, %v2527, %v2550
  %v2576 = vsel %vm2512, %v2528, %v2552
  %v2577 = vsel %vm2513, %v2529, %v2554
  %v2578 = vsel %vm2514, %v2530, %v2556
  %v2579 = vsel %vm2515, %v2531, %v2558
  %v2580 = vsel %vm2516, %v2532, %v2560
  %v2581 = vsel %vm2517, %v2533, %v2562
  %v2582 = vsel %vm2518, %v2534, %v2564
  %v2583 = vsel %vm2519, %v2535, %v2566
  %v2584 = vsel %vm2520, %v2536, %v2568
  %v2585 = vpack.c.bf16 %v2570, %v2569
  %v2586 = vpack.c.bf16 %v2572, %v2571
  %v2587 = vpack.c.bf16 %v2574, %v2573
  %v2588 = vpack.c.bf16 %v2576, %v2575
  %v2589 = vpack.c.bf16 %v2468, %v2466
  %v2590 = vpack.c.bf16 %v2473, %v2471
  %v2591 = vpack.c.bf16 %v2478, %v2476
  %v2592 = vpack.c.bf16 %v2483, %v2481
  %2597 = vrot.lane.b32.xlu0 %v2585, 96
  %v2598 = vpop.permute.xlu0 %2597
  %2599 = vrot.lane.b32.xlu0 %v2586, 96
  %v2600 = vpop.permute.xlu0 %2599
  %2601 = vrot.lane.b32.xlu0 %v2587, 96
  %v2602 = vpop.permute.xlu0 %2601
  %2603 = vrot.lane.b32.xlu0 %v2588, 96
  %v2604 = vpop.permute.xlu0 %2603
  %2609 = vxpose.xlu0.c.b16.start [1/8] %v2598, 128
  %2610 = vxpose.xlu0.c.b16.cont [2/8] %v2600, 128
  %2611 = vxpose.xlu0.c.b16.cont [3/8] %v2602, 128
  %2612 = vxpose.xlu0.c.b16.cont [4/8] %v2604, 128
  %2613 = vxpose.xlu0.c.b16.cont [5/8] 0, 128
  %2614 = vxpose.xlu0.c.b16.cont [6/8] 0, 128
  %2615 = vxpose.xlu0.c.b16.cont [7/8] 0, 128
  %2616 = vxpose.xlu0.c.b16.end [8/8] 0, 128
  %v2617 = vpop.trf.xlu0
  %v2618 = vpop.trf.xlu0
  %v2619 = vpop.trf.xlu0
  %v2620 = vpop.trf.xlu0
  %v2621 = vpop.trf.xlu0
  %v2622 = vpop.trf.xlu0
  %v2623 = vpop.trf.xlu0
  %v2624 = vpop.trf.xlu0
  %2629 = vrot.lane.b32.xlu0 %v2589, 64
  %v2630 = vpop.permute.xlu0 %2629
  %2631 = vrot.lane.b32.xlu0 %v2590, 64
  %v2632 = vpop.permute.xlu0 %2631
  %2633 = vrot.lane.b32.xlu0 %v2591, 64
  %v2634 = vpop.permute.xlu0 %2633
  %2635 = vrot.lane.b32.xlu0 %v2592, 64
  %v2636 = vpop.permute.xlu0 %2635
  %v2642 = vsel %vm427, %v2617, 0
  %v2645 = vsel %vm427, %v2618, 0
  %2647 = vmatpush.bf16.msra.mxu0 0
  %2648 = vmatpush.bf16.msra.mxu0 0
  %2649 = vmatpush.bf16.msra.mxu0 0
  %2650 = vmatpush.bf16.msra.mxu0 0
  %2651 = vmatpush.bf16.msra.mxu0 %v2636
  %2652 = vmatpush.bf16.msra.mxu0 %v2634
  %2653 = vmatpush.bf16.msra.mxu0 %v2632
  %2654 = vmatpush.bf16.msra.mxu0 %v2630
  %2655 = vmatmul.bf16.gmra.mxu0 %v2642
  %v2656 = vpop.f32.mrf.mxu0
  %v2657 = vadd.f32 0.0, %v2656
  %v2658 = vpop.f32.mrf.mxu0
  %v2659 = vadd.f32 0.0, %v2658
  %2660 = vmatmul.bf16.gmra.mxu0 %v2645
  %v2661 = vpop.f32.mrf.mxu0
  %v2662 = vadd.f32 0.0, %v2661
  %v2663 = vpop.f32.mrf.mxu0
  %v2664 = vadd.f32 0.0, %v2663
  %2665 = vdwg.mxu0
  %v2666 = vmul.f32 %v2657, %v24
  %v2667 = vmul.f32 %v2659, %v25
  %v2668 = vmul.f32 %v2662, %v26
  %v2669 = vmul.f32 %v2664, %v27
  %v2670 = vsel %vm457, %v2569, 0.0
  %v2671 = vsel %vm457, %v2570, 0.0
  %v2672 = vadd.f32 %v2670, %v2671
  %v2673 = vsel %vm457, %v2571, 0.0
  %v2674 = vadd.f32 %v2672, %v2673
  %v2675 = vsel %vm457, %v2572, 0.0
  %v2676 = vadd.f32 %v2674, %v2675
  %v2677 = vsel %vm457, %v2573, 0.0
  %v2678 = vadd.f32 %v2676, %v2677
  %v2679 = vsel %vm457, %v2574, 0.0
  %v2680 = vadd.f32 %v2678, %v2679
  %v2681 = vsel %vm457, %v2575, 0.0
  %v2682 = vadd.f32 %v2680, %v2681
  %v2683 = vsel %vm457, %v2576, 0.0
  %v2684 = vadd.f32 %v2682, %v2683
  %v2685 = vrot.slane %v2684, 4
  %v2686 = vadd.f32 %v2684, %v2685
  %v2687 = vrot.slane %v2686, 2
  %v2688 = vadd.f32 %v2686, %v2687
  %v2689 = vrot.slane %v2688, 1
  %v2690 = vadd.f32 %v2688, %v2689
  %2692 = vrot.lane.b32.xlu0 %v2690, 96
  %v2693 = vpop.permute.xlu0 %2692
  %v2695 = vmul.f32 %v2569, %v2693
  %v2696 = vmul.f32 %v2570, %v2693
  %v2697 = vmul.f32 %v2571, %v2693
  %v2698 = vmul.f32 %v2572, %v2693
  %v2699 = vmul.f32 %v2573, %v2693
  %v2700 = vmul.f32 %v2574, %v2693
  %v2701 = vmul.f32 %v2575, %v2693
  %v2702 = vmul.f32 %v2576, %v2693
  %v2703 = vpack.c.bf16 %v2696, %v2695
  %v2704 = vpack.c.bf16 %v2698, %v2697
  %v2705 = vpack.c.bf16 %v2700, %v2699
  %v2706 = vpack.c.bf16 %v2702, %v2701
  %v2708 = vsel %vm217, %v2703, 0
  %v2711 = vsel %vm217, %v2704, 0
  %v2714 = vsel %vm217, %v2705, 0
  %v2717 = vsel %vm217, %v2706, 0
  %2719 = vmatpush.bf16.msra.mxu0 0
  %2720 = vmatpush.bf16.msra.mxu0 0
  %2721 = vmatpush.bf16.msra.mxu0 0
  %2722 = vmatpush.bf16.msra.mxu0 0
  %2723 = vmatpush.bf16.msra.mxu0 0
  %2724 = vmatpush.bf16.msra.mxu0 0
  %2725 = vmatpush.bf16.msra.mxu0 %v496
  %2726 = vmatpush.bf16.msra.mxu0 %v495
  %2727 = vmatmul.bf16.gmra.mxu0 %v2708
  %v2728 = vpop.f32.mrf.mxu0
  %v2729 = vadd.f32 1e-06, %v2728
  %v2730 = vpop.f32.mrf.mxu0
  %v2731 = vadd.f32 1e-06, %v2730
  %2732 = vmatmul.bf16.gmra.mxu0 %v2711
  %v2733 = vpop.f32.mrf.mxu0
  %v2734 = vadd.f32 1e-06, %v2733
  %v2735 = vpop.f32.mrf.mxu0
  %v2736 = vadd.f32 1e-06, %v2735
  %2737 = vmatmul.bf16.gmra.mxu0 %v2714
  %v2738 = vpop.f32.mrf.mxu0
  %v2739 = vadd.f32 1e-06, %v2738
  %v2740 = vpop.f32.mrf.mxu0
  %v2741 = vadd.f32 1e-06, %v2740
  %2742 = vmatmul.bf16.gmra.mxu0 %v2717
  %v2743 = vpop.f32.mrf.mxu0
  %v2744 = vadd.f32 1e-06, %v2743
  %v2745 = vpop.f32.mrf.mxu0
  %v2746 = vadd.f32 1e-06, %v2745
  %2747 = vdwg.mxu0
  %v2748 = vpack.c.bf16 %v2667, %v2666
  %v2749 = vpack.c.bf16 %v2669, %v2668
  %v2751 = vsel %vm217, %v2585, 0
  %v2754 = vsel %vm217, %v2586, 0
  %v2757 = vsel %vm217, %v2587, 0
  %v2760 = vsel %vm217, %v2588, 0
  %2762 = vmatpush.bf16.msra.mxu0 0
  %2763 = vmatpush.bf16.msra.mxu0 0
  %2764 = vmatpush.bf16.msra.mxu0 0
  %2765 = vmatpush.bf16.msra.mxu0 0
  %2766 = vmatpush.bf16.msra.mxu0 0
  %2767 = vmatpush.bf16.msra.mxu0 0
  %2768 = vmatpush.bf16.msra.mxu0 %v2749
  %2769 = vmatpush.bf16.msra.mxu0 %v2748
  %2770 = vmatmul.bf16.gmra.mxu0 %v2751
  %v2771 = vpop.f32.mrf.mxu0
  %v2772 = vadd.f32 0.0, %v2771
  %v2773 = vpop.f32.mrf.mxu0
  %v2774 = vadd.f32 0.0, %v2773
  %2775 = vmatmul.bf16.gmra.mxu0 %v2754
  %v2776 = vpop.f32.mrf.mxu0
  %v2777 = vadd.f32 0.0, %v2776
  %v2778 = vpop.f32.mrf.mxu0
  %v2779 = vadd.f32 0.0, %v2778
  %2780 = vmatmul.bf16.gmra.mxu0 %v2757
  %v2781 = vpop.f32.mrf.mxu0
  %v2782 = vadd.f32 0.0, %v2781
  %v2783 = vpop.f32.mrf.mxu0
  %v2784 = vadd.f32 0.0, %v2783
  %2785 = vmatmul.bf16.gmra.mxu0 %v2760
  %v2786 = vpop.f32.mrf.mxu0
  %v2787 = vadd.f32 0.0, %v2786
  %v2788 = vpop.f32.mrf.mxu0
  %v2789 = vadd.f32 0.0, %v2788
  %2790 = vdwg.mxu0
  %v2791 = vrcp.pop %v2729
  %v2792 = vrcp.pop %v2731
  %v2793 = vrcp.pop %v2734
  %v2794 = vrcp.pop %v2736
  %v2795 = vrcp.pop %v2739
  %v2796 = vrcp.pop %v2741
  %v2797 = vrcp.pop %v2744
  %v2798 = vrcp.pop %v2746
  %v2799 = vmul.f32 %v2772, %v2791
  %v2800 = vmul.f32 %v2774, %v2792
  %v2801 = vmul.f32 %v2777, %v2793
  %v2802 = vmul.f32 %v2779, %v2794
  %v2803 = vmul.f32 %v2782, %v2795
  %v2804 = vmul.f32 %v2784, %v2796
  %v2805 = vmul.f32 %v2787, %v2797
  %v2806 = vmul.f32 %v2789, %v2798
  %v2807 = vpack.c.bf16 %v2578, %v2577
  %v2808 = vpack.c.bf16 %v2580, %v2579
  %v2809 = vpack.c.bf16 %v2582, %v2581
  %v2810 = vpack.c.bf16 %v2584, %v2583
  %v2811 = vpack.c.bf16 %v2488, %v2486
  %v2812 = vpack.c.bf16 %v2493, %v2491
  %v2813 = vpack.c.bf16 %v2498, %v2496
  %v2814 = vpack.c.bf16 %v2503, %v2501
  %2819 = vrot.lane.b32.xlu0 %v2807, 96
  %v2820 = vpop.permute.xlu0 %2819
  %2821 = vrot.lane.b32.xlu0 %v2808, 96
  %v2822 = vpop.permute.xlu0 %2821
  %2823 = vrot.lane.b32.xlu0 %v2809, 96
  %v2824 = vpop.permute.xlu0 %2823
  %2825 = vrot.lane.b32.xlu0 %v2810, 96
  %v2826 = vpop.permute.xlu0 %2825
  %2831 = vxpose.xlu0.c.b16.start [1/8] %v2820, 128
  %2832 = vxpose.xlu0.c.b16.cont [2/8] %v2822, 128
  %2833 = vxpose.xlu0.c.b16.cont [3/8] %v2824, 128
  %2834 = vxpose.xlu0.c.b16.cont [4/8] %v2826, 128
  %2835 = vxpose.xlu0.c.b16.cont [5/8] 0, 128
  %2836 = vxpose.xlu0.c.b16.cont [6/8] 0, 128
  %2837 = vxpose.xlu0.c.b16.cont [7/8] 0, 128
  %2838 = vxpose.xlu0.c.b16.end [8/8] 0, 128
  %v2839 = vpop.trf.xlu0
  %v2840 = vpop.trf.xlu0
  %v2841 = vpop.trf.xlu0
  %v2842 = vpop.trf.xlu0
  %v2843 = vpop.trf.xlu0
  %v2844 = vpop.trf.xlu0
  %v2845 = vpop.trf.xlu0
  %v2846 = vpop.trf.xlu0
  %2851 = vrot.lane.b32.xlu0 %v2811, 64
  %v2852 = vpop.permute.xlu0 %2851
  %2853 = vrot.lane.b32.xlu0 %v2812, 64
  %v2854 = vpop.permute.xlu0 %2853
  %2855 = vrot.lane.b32.xlu0 %v2813, 64
  %v2856 = vpop.permute.xlu0 %2855
  %2857 = vrot.lane.b32.xlu0 %v2814, 64
  %v2858 = vpop.permute.xlu0 %2857
  %v2864 = vsel %vm427, %v2839, 0
  %v2867 = vsel %vm427, %v2840, 0
  %2869 = vmatpush.bf16.msra.mxu0 0
  %2870 = vmatpush.bf16.msra.mxu0 0
  %2871 = vmatpush.bf16.msra.mxu0 0
  %2872 = vmatpush.bf16.msra.mxu0 0
  %2873 = vmatpush.bf16.msra.mxu0 %v2858
  %2874 = vmatpush.bf16.msra.mxu0 %v2856
  %2875 = vmatpush.bf16.msra.mxu0 %v2854
  %2876 = vmatpush.bf16.msra.mxu0 %v2852
  %2877 = vmatmul.bf16.gmra.mxu0 %v2864
  %v2878 = vpop.f32.mrf.mxu0
  %v2879 = vadd.f32 0.0, %v2878
  %v2880 = vpop.f32.mrf.mxu0
  %v2881 = vadd.f32 0.0, %v2880
  %2882 = vmatmul.bf16.gmra.mxu0 %v2867
  %v2883 = vpop.f32.mrf.mxu0
  %v2884 = vadd.f32 0.0, %v2883
  %v2885 = vpop.f32.mrf.mxu0
  %v2886 = vadd.f32 0.0, %v2885
  %2887 = vdwg.mxu0
  %v2888 = vmul.f32 %v2879, %v24
  %v2889 = vmul.f32 %v2881, %v25
  %v2890 = vmul.f32 %v2884, %v26
  %v2891 = vmul.f32 %v2886, %v27
  %v2892 = vsel %vm457, %v2577, 0.0
  %v2893 = vsel %vm457, %v2578, 0.0
  %v2894 = vadd.f32 %v2892, %v2893
  %v2895 = vsel %vm457, %v2579, 0.0
  %v2896 = vadd.f32 %v2894, %v2895
  %v2897 = vsel %vm457, %v2580, 0.0
  %v2898 = vadd.f32 %v2896, %v2897
  %v2899 = vsel %vm457, %v2581, 0.0
  %v2900 = vadd.f32 %v2898, %v2899
  %v2901 = vsel %vm457, %v2582, 0.0
  %v2902 = vadd.f32 %v2900, %v2901
  %v2903 = vsel %vm457, %v2583, 0.0
  %v2904 = vadd.f32 %v2902, %v2903
  %v2905 = vsel %vm457, %v2584, 0.0
  %v2906 = vadd.f32 %v2904, %v2905
  %v2907 = vrot.slane %v2906, 4
  %v2908 = vadd.f32 %v2906, %v2907
  %v2909 = vrot.slane %v2908, 2
  %v2910 = vadd.f32 %v2908, %v2909
  %v2911 = vrot.slane %v2910, 1
  %v2912 = vadd.f32 %v2910, %v2911
  %2914 = vrot.lane.b32.xlu0 %v2912, 96
  %v2915 = vpop.permute.xlu0 %2914
  %v2917 = vmul.f32 %v2577, %v2915
  %v2918 = vmul.f32 %v2578, %v2915
  %v2919 = vmul.f32 %v2579, %v2915
  %v2920 = vmul.f32 %v2580, %v2915
  %v2921 = vmul.f32 %v2581, %v2915
  %v2922 = vmul.f32 %v2582, %v2915
  %v2923 = vmul.f32 %v2583, %v2915
  %v2924 = vmul.f32 %v2584, %v2915
  %v2925 = vpack.c.bf16 %v2918, %v2917
  %v2926 = vpack.c.bf16 %v2920, %v2919
  %v2927 = vpack.c.bf16 %v2922, %v2921
  %v2928 = vpack.c.bf16 %v2924, %v2923
  %v2930 = vsel %vm217, %v2925, 0
  %v2933 = vsel %vm217, %v2926, 0
  %v2936 = vsel %vm217, %v2927, 0
  %v2939 = vsel %vm217, %v2928, 0
  %2941 = vmatpush.bf16.msra.mxu0 0
  %2942 = vmatpush.bf16.msra.mxu0 0
  %2943 = vmatpush.bf16.msra.mxu0 0
  %2944 = vmatpush.bf16.msra.mxu0 0
  %2945 = vmatpush.bf16.msra.mxu0 0
  %2946 = vmatpush.bf16.msra.mxu0 0
  %2947 = vmatpush.bf16.msra.mxu0 %v496
  %2948 = vmatpush.bf16.msra.mxu0 %v495
  %2949 = vmatmul.bf16.gmra.mxu0 %v2930
  %v2950 = vpop.f32.mrf.mxu0
  %v2951 = vadd.f32 1e-06, %v2950
  %v2952 = vpop.f32.mrf.mxu0
  %v2953 = vadd.f32 1e-06, %v2952
  %2954 = vmatmul.bf16.gmra.mxu0 %v2933
  %v2955 = vpop.f32.mrf.mxu0
  %v2956 = vadd.f32 1e-06, %v2955
  %v2957 = vpop.f32.mrf.mxu0
  %v2958 = vadd.f32 1e-06, %v2957
  %2959 = vmatmul.bf16.gmra.mxu0 %v2936
  %v2960 = vpop.f32.mrf.mxu0
  %v2961 = vadd.f32 1e-06, %v2960
  %v2962 = vpop.f32.mrf.mxu0
  %v2963 = vadd.f32 1e-06, %v2962
  %2964 = vmatmul.bf16.gmra.mxu0 %v2939
  %v2965 = vpop.f32.mrf.mxu0
  %v2966 = vadd.f32 1e-06, %v2965
  %v2967 = vpop.f32.mrf.mxu0
  %v2968 = vadd.f32 1e-06, %v2967
  %2969 = vdwg.mxu0
  %v2970 = vpack.c.bf16 %v2889, %v2888
  %v2971 = vpack.c.bf16 %v2891, %v2890
  %v2973 = vsel %vm217, %v2807, 0
  %v2976 = vsel %vm217, %v2808, 0
  %v2979 = vsel %vm217, %v2809, 0
  %v2982 = vsel %vm217, %v2810, 0
  %2984 = vmatpush.bf16.msra.mxu0 0
  %2985 = vmatpush.bf16.msra.mxu0 0
  %2986 = vmatpush.bf16.msra.mxu0 0
  %2987 = vmatpush.bf16.msra.mxu0 0
  %2988 = vmatpush.bf16.msra.mxu0 0
  %2989 = vmatpush.bf16.msra.mxu0 0
  %2990 = vmatpush.bf16.msra.mxu0 %v2971
  %2991 = vmatpush.bf16.msra.mxu0 %v2970
  %2992 = vmatmul.bf16.gmra.mxu0 %v2973
  %v2993 = vpop.f32.mrf.mxu0
  %v2994 = vadd.f32 0.0, %v2993
  %v2995 = vpop.f32.mrf.mxu0
  %v2996 = vadd.f32 0.0, %v2995
  %2997 = vmatmul.bf16.gmra.mxu0 %v2976
  %v2998 = vpop.f32.mrf.mxu0
  %v2999 = vadd.f32 0.0, %v2998
  %v3000 = vpop.f32.mrf.mxu0
  %v3001 = vadd.f32 0.0, %v3000
  %3002 = vmatmul.bf16.gmra.mxu0 %v2979
  %v3003 = vpop.f32.mrf.mxu0
  %v3004 = vadd.f32 0.0, %v3003
  %v3005 = vpop.f32.mrf.mxu0
  %v3006 = vadd.f32 0.0, %v3005
  %3007 = vmatmul.bf16.gmra.mxu0 %v2982
  %v3008 = vpop.f32.mrf.mxu0
  %v3009 = vadd.f32 0.0, %v3008
  %v3010 = vpop.f32.mrf.mxu0
  %v3011 = vadd.f32 0.0, %v3010
  %3012 = vdwg.mxu0
  %v3013 = vrcp.pop %v2951
  %v3014 = vrcp.pop %v2953
  %v3015 = vrcp.pop %v2956
  %v3016 = vrcp.pop %v2958
  %v3017 = vrcp.pop %v2961
  %v3018 = vrcp.pop %v2963
  %v3019 = vrcp.pop %v2966
  %v3020 = vrcp.pop %v2968
  %v3021 = vmul.f32 %v2994, %v3013
  %v3022 = vmul.f32 %v2996, %v3014
  %v3023 = vmul.f32 %v2999, %v3015
  %v3024 = vmul.f32 %v3001, %v3016
  %v3025 = vmul.f32 %v3004, %v3017
  %v3026 = vmul.f32 %v3006, %v3018
  %v3027 = vmul.f32 %v3009, %v3019
  %v3028 = vmul.f32 %v3011, %v3020
  %v3029 = vpack.c.bf16 %v2800, %v2799
  %v3030 = vpack.c.bf16 %v2802, %v2801
  %v3031 = vpack.c.bf16 %v2804, %v2803
  %v3032 = vpack.c.bf16 %v2806, %v2805
  %v3033 = vpack.c.bf16 %v3022, %v3021
  %v3034 = vpack.c.bf16 %v3024, %v3023
  %v3035 = vpack.c.bf16 %v3026, %v3025
  %v3036 = vpack.c.bf16 %v3028, %v3027
  %3037 = vmatpush.bf16.msra.mxu0 %v3036
  %3038 = vmatpush.bf16.msra.mxu0 %v3035
  %3039 = vmatpush.bf16.msra.mxu0 %v3034
  %3040 = vmatpush.bf16.msra.mxu0 %v3033
  %3041 = vmatpush.bf16.msra.mxu0 %v3032
  %3042 = vmatpush.bf16.msra.mxu0 %v3031
  %3043 = vmatpush.bf16.msra.mxu0 %v3030
  %3044 = vmatpush.bf16.msra.mxu0 %v3029
  %3045 = vmatmul.bf16.gmra.mxu0 %v859
  %v3046 = vpop.f32.mrf.mxu0
  %v3047 = vadd.f32 0.0, %v3046
  %v3048 = vpop.f32.mrf.mxu0
  %v3049 = vadd.f32 0.0, %v3048
  %3050 = vmatmul.bf16.gmra.mxu0 %v860
  %v3051 = vpop.f32.mrf.mxu0
  %v3052 = vadd.f32 0.0, %v3051
  %v3053 = vpop.f32.mrf.mxu0
  %v3054 = vadd.f32 0.0, %v3053
  %3055 = vmatmul.bf16.gmra.mxu0 %v861
  %v3056 = vpop.f32.mrf.mxu0
  %v3057 = vadd.f32 0.0, %v3056
  %v3058 = vpop.f32.mrf.mxu0
  %v3059 = vadd.f32 0.0, %v3058
  %3060 = vmatmul.bf16.gmra.mxu0 %v862
  %v3061 = vpop.f32.mrf.mxu0
  %v3062 = vadd.f32 0.0, %v3061
  %v3063 = vpop.f32.mrf.mxu0
  %v3064 = vadd.f32 0.0, %v3063
  %3065 = vmatmul.bf16.gmra.mxu0 %v863
  %v3066 = vpop.f32.mrf.mxu0
  %v3067 = vadd.f32 0.0, %v3066
  %v3068 = vpop.f32.mrf.mxu0
  %v3069 = vadd.f32 0.0, %v3068
  %3070 = vmatmul.bf16.gmra.mxu0 %v864
  %v3071 = vpop.f32.mrf.mxu0
  %v3072 = vadd.f32 0.0, %v3071
  %v3073 = vpop.f32.mrf.mxu0
  %v3074 = vadd.f32 0.0, %v3073
  %3075 = vmatmul.bf16.gmra.mxu0 %v865
  %v3076 = vpop.f32.mrf.mxu0
  %v3077 = vadd.f32 0.0, %v3076
  %v3078 = vpop.f32.mrf.mxu0
  %v3079 = vadd.f32 0.0, %v3078
  %3080 = vmatmul.bf16.gmra.mxu0 %v866
  %v3081 = vpop.f32.mrf.mxu0
  %v3082 = vadd.f32 0.0, %v3081
  %v3083 = vpop.f32.mrf.mxu0
  %v3084 = vadd.f32 0.0, %v3083
  %3085 = vdwg.mxu0
  %3086 = vmatpush.bf16.msra.mxu0 %v3036
  %3087 = vmatpush.bf16.msra.mxu0 %v3035
  %3088 = vmatpush.bf16.msra.mxu0 %v3034
  %3089 = vmatpush.bf16.msra.mxu0 %v3033
  %3090 = vmatpush.bf16.msra.mxu0 %v3032
  %3091 = vmatpush.bf16.msra.mxu0 %v3031
  %3092 = vmatpush.bf16.msra.mxu0 %v3030
  %3093 = vmatpush.bf16.msra.mxu0 %v3029
  %3094 = vmatmul.bf16.gmra.mxu0 %v956
  %v3095 = vpop.f32.mrf.mxu0
  %v3096 = vadd.f32 0.0, %v3095
  %v3097 = vpop.f32.mrf.mxu0
  %v3098 = vadd.f32 0.0, %v3097
  %3099 = vmatmul.bf16.gmra.mxu0 %v957
  %v3100 = vpop.f32.mrf.mxu0
  %v3101 = vadd.f32 0.0, %v3100
  %v3102 = vpop.f32.mrf.mxu0
  %v3103 = vadd.f32 0.0, %v3102
  %3104 = vmatmul.bf16.gmra.mxu0 %v958
  %v3105 = vpop.f32.mrf.mxu0
  %v3106 = vadd.f32 0.0, %v3105
  %v3107 = vpop.f32.mrf.mxu0
  %v3108 = vadd.f32 0.0, %v3107
  %3109 = vmatmul.bf16.gmra.mxu0 %v959
  %v3110 = vpop.f32.mrf.mxu0
  %v3111 = vadd.f32 0.0, %v3110
  %v3112 = vpop.f32.mrf.mxu0
  %v3113 = vadd.f32 0.0, %v3112
  %3114 = vmatmul.bf16.gmra.mxu0 %v960
  %v3115 = vpop.f32.mrf.mxu0
  %v3116 = vadd.f32 0.0, %v3115
  %v3117 = vpop.f32.mrf.mxu0
  %v3118 = vadd.f32 0.0, %v3117
  %3119 = vmatmul.bf16.gmra.mxu0 %v961
  %v3120 = vpop.f32.mrf.mxu0
  %v3121 = vadd.f32 0.0, %v3120
  %v3122 = vpop.f32.mrf.mxu0
  %v3123 = vadd.f32 0.0, %v3122
  %3124 = vmatmul.bf16.gmra.mxu0 %v962
  %v3125 = vpop.f32.mrf.mxu0
  %v3126 = vadd.f32 0.0, %v3125
  %v3127 = vpop.f32.mrf.mxu0
  %v3128 = vadd.f32 0.0, %v3127
  %3129 = vmatmul.bf16.gmra.mxu0 %v963
  %v3130 = vpop.f32.mrf.mxu0
  %v3131 = vadd.f32 0.0, %v3130
  %v3132 = vpop.f32.mrf.mxu0
  %v3133 = vadd.f32 0.0, %v3132
  %3134 = vdwg.mxu0
  %3151 = vrot.lane.b32.xlu0 %v3047, 32
  %v3152 = vpop.permute.xlu0 %3151
  %3153 = vrot.lane.b32.xlu0 %v3049, 32
  %v3154 = vpop.permute.xlu0 %3153
  %3155 = vrot.lane.b32.xlu0 %v3052, 32
  %v3156 = vpop.permute.xlu0 %3155
  %3157 = vrot.lane.b32.xlu0 %v3054, 32
  %v3158 = vpop.permute.xlu0 %3157
  %3159 = vrot.lane.b32.xlu0 %v3057, 32
  %v3160 = vpop.permute.xlu0 %3159
  %3161 = vrot.lane.b32.xlu0 %v3059, 32
  %v3162 = vpop.permute.xlu0 %3161
  %3163 = vrot.lane.b32.xlu0 %v3062, 32
  %v3164 = vpop.permute.xlu0 %3163
  %3165 = vrot.lane.b32.xlu0 %v3064, 32
  %v3166 = vpop.permute.xlu0 %3165
  %3167 = vrot.lane.b32.xlu0 %v3067, 32
  %v3168 = vpop.permute.xlu0 %3167
  %3169 = vrot.lane.b32.xlu0 %v3069, 32
  %v3170 = vpop.permute.xlu0 %3169
  %3171 = vrot.lane.b32.xlu0 %v3072, 32
  %v3172 = vpop.permute.xlu0 %3171
  %3173 = vrot.lane.b32.xlu0 %v3074, 32
  %v3174 = vpop.permute.xlu0 %3173
  %3175 = vrot.lane.b32.xlu0 %v3077, 32
  %v3176 = vpop.permute.xlu0 %3175
  %3177 = vrot.lane.b32.xlu0 %v3079, 32
  %v3178 = vpop.permute.xlu0 %3177
  %3179 = vrot.lane.b32.xlu0 %v3082, 32
  %v3180 = vpop.permute.xlu0 %3179
  %3181 = vrot.lane.b32.xlu0 %v3084, 32
  %v3182 = vpop.permute.xlu0 %3181
  %3215 = vrot.lane.b32.xlu0 %v3096, 64
  %v3216 = vpop.permute.xlu0 %3215
  %3217 = vrot.lane.b32.xlu0 %v3098, 64
  %v3218 = vpop.permute.xlu0 %3217
  %3219 = vrot.lane.b32.xlu0 %v3101, 64
  %v3220 = vpop.permute.xlu0 %3219
  %3221 = vrot.lane.b32.xlu0 %v3103, 64
  %v3222 = vpop.permute.xlu0 %3221
  %3223 = vrot.lane.b32.xlu0 %v3106, 64
  %v3224 = vpop.permute.xlu0 %3223
  %3225 = vrot.lane.b32.xlu0 %v3108, 64
  %v3226 = vpop.permute.xlu0 %3225
  %3227 = vrot.lane.b32.xlu0 %v3111, 64
  %v3228 = vpop.permute.xlu0 %3227
  %3229 = vrot.lane.b32.xlu0 %v3113, 64
  %v3230 = vpop.permute.xlu0 %3229
  %3231 = vrot.lane.b32.xlu0 %v3116, 64
  %v3232 = vpop.permute.xlu0 %3231
  %3233 = vrot.lane.b32.xlu0 %v3118, 64
  %v3234 = vpop.permute.xlu0 %3233
  %3235 = vrot.lane.b32.xlu0 %v3121, 64
  %v3236 = vpop.permute.xlu0 %3235
  %3237 = vrot.lane.b32.xlu0 %v3123, 64
  %v3238 = vpop.permute.xlu0 %3237
  %3239 = vrot.lane.b32.xlu0 %v3126, 64
  %v3240 = vpop.permute.xlu0 %3239
  %3241 = vrot.lane.b32.xlu0 %v3128, 64
  %v3242 = vpop.permute.xlu0 %3241
  %3243 = vrot.lane.b32.xlu0 %v3131, 64
  %v3244 = vpop.permute.xlu0 %3243
  %3245 = vrot.lane.b32.xlu0 %v3133, 64
  %v3246 = vpop.permute.xlu0 %3245
  %v3263 = vsel %vm217, %v2799, %v3152
  %v3264 = vsel %vm217, %v2800, %v3154
  %v3265 = vsel %vm217, %v2801, %v3156
  %v3266 = vsel %vm217, %v2802, %v3158
  %v3267 = vsel %vm217, %v2803, %v3160
  %v3268 = vsel %vm217, %v2804, %v3162
  %v3269 = vsel %vm217, %v2805, %v3164
  %v3270 = vsel %vm217, %v2806, %v3166
  %v3271 = vsel %vm217, %v3021, %v3168
  %v3272 = vsel %vm217, %v3022, %v3170
  %v3273 = vsel %vm217, %v3023, %v3172
  %v3274 = vsel %vm217, %v3024, %v3174
  %v3275 = vsel %vm217, %v3025, %v3176
  %v3276 = vsel %vm217, %v3026, %v3178
  %v3277 = vsel %vm217, %v3027, %v3180
  %v3278 = vsel %vm217, %v3028, %v3182
  %v3279 = vsel %vm427, %v3263, %v3216
  %v3280 = vsel %vm427, %v3264, %v3218
  %v3281 = vsel %vm427, %v3265, %v3220
  %v3282 = vsel %vm427, %v3266, %v3222
  %v3283 = vsel %vm427, %v3267, %v3224
  %v3284 = vsel %vm427, %v3268, %v3226
  %v3285 = vsel %vm427, %v3269, %v3228
  %v3286 = vsel %vm427, %v3270, %v3230
  %v3287 = vsel %vm427, %v3271, %v3232
  %v3288 = vsel %vm427, %v3272, %v3234
  %v3289 = vsel %vm427, %v3273, %v3236
  %v3290 = vsel %vm427, %v3274, %v3238
  %v3291 = vsel %vm427, %v3275, %v3240
  %v3292 = vsel %vm427, %v3276, %v3242
  %v3293 = vsel %vm427, %v3277, %v3244
  %v3294 = vsel %vm427, %v3278, %v3246
  %v3295 = vpack.c.bf16 %v3280, %v3279
  %v3296 = vpack.c.bf16 %v3282, %v3281
  %v3297 = vpack.c.bf16 %v3284, %v3283
  %v3298 = vpack.c.bf16 %v3286, %v3285
  %v3299 = vpack.c.bf16 %v3288, %v3287
  %v3300 = vpack.c.bf16 %v3290, %v3289
  %v3301 = vpack.c.bf16 %v3292, %v3291
  %v3302 = vpack.c.bf16 %v3294, %v3293
  %v3303 = vpack.c.bf16 %v2401, %v2400
  %v3304 = vpack.c.bf16 %v2403, %v2402
  %v3305 = vpack.c.bf16 %v2405, %v2404
  %v3306 = vpack.c.bf16 %v2407, %v2406
  %v3307 = vpack.c.bf16 %v2409, %v2408
  %v3308 = vpack.c.bf16 %v2411, %v2410
  %v3309 = vperm.slane %v2412, 0
  %v3311 = vsel %vm1196, %v3295, 0
  %v3314 = vsel %vm1196, %v3296, 0
  %v3317 = vsel %vm1196, %v3297, 0
  %v3320 = vsel %vm1196, %v3298, 0
  %v3323 = vsel %vm1196, %v3299, 0
  %v3326 = vsel %vm1196, %v3300, 0
  %v3329 = vsel %vm1196, %v3301, 0
  %v3332 = vsel %vm1196, %v3302, 0
  %3334 = vmatpush.bf16.msra.mxu0 0
  %3335 = vmatpush.bf16.msra.mxu0 0
  %3336 = vmatpush.bf16.msra.mxu0 %v3308
  %3337 = vmatpush.bf16.msra.mxu0 %v3307
  %3338 = vmatpush.bf16.msra.mxu0 %v3306
  %3339 = vmatpush.bf16.msra.mxu0 %v3305
  %3340 = vmatpush.bf16.msra.mxu0 %v3304
  %3341 = vmatpush.bf16.msra.mxu0 %v3303
  %3342 = vmatmul.bf16.gmra.mxu0 %v3311
  %v3343 = vpop.f32.mrf.mxu0
  %v3344 = vadd.f32 %v3309, %v3343
  %v3345 = vpop.f32.mrf.mxu0
  %v3346 = vadd.f32 %v3309, %v3345
  %3347 = vmatmul.bf16.gmra.mxu0 %v3314
  %v3348 = vpop.f32.mrf.mxu0
  %v3349 = vadd.f32 %v3309, %v3348
  %v3350 = vpop.f32.mrf.mxu0
  %v3351 = vadd.f32 %v3309, %v3350
  %3352 = vmatmul.bf16.gmra.mxu0 %v3317
  %v3353 = vpop.f32.mrf.mxu0
  %v3354 = vadd.f32 %v3309, %v3353
  %v3355 = vpop.f32.mrf.mxu0
  %v3356 = vadd.f32 %v3309, %v3355
  %3357 = vmatmul.bf16.gmra.mxu0 %v3320
  %v3358 = vpop.f32.mrf.mxu0
  %v3359 = vadd.f32 %v3309, %v3358
  %v3360 = vpop.f32.mrf.mxu0
  %v3361 = vadd.f32 %v3309, %v3360
  %3362 = vmatmul.bf16.gmra.mxu0 %v3323
  %v3363 = vpop.f32.mrf.mxu0
  %v3364 = vadd.f32 %v3309, %v3363
  %v3365 = vpop.f32.mrf.mxu0
  %v3366 = vadd.f32 %v3309, %v3365
  %3367 = vmatmul.bf16.gmra.mxu0 %v3326
  %v3368 = vpop.f32.mrf.mxu0
  %v3369 = vadd.f32 %v3309, %v3368
  %v3370 = vpop.f32.mrf.mxu0
  %v3371 = vadd.f32 %v3309, %v3370
  %3372 = vmatmul.bf16.gmra.mxu0 %v3329
  %v3373 = vpop.f32.mrf.mxu0
  %v3374 = vadd.f32 %v3309, %v3373
  %v3375 = vpop.f32.mrf.mxu0
  %v3376 = vadd.f32 %v3309, %v3375
  %3377 = vmatmul.bf16.gmra.mxu0 %v3332
  %v3378 = vpop.f32.mrf.mxu0
  %v3379 = vadd.f32 %v3309, %v3378
  %v3380 = vpop.f32.mrf.mxu0
  %v3381 = vadd.f32 %v3309, %v3380
  %3382 = vdwg.mxu0
  %v3383 = vadd.f32 %v2377, %v3344
  %v3384 = vadd.f32 %v2378, %v3346
  %v3385 = vadd.f32 %v2379, %v3349
  %v3386 = vadd.f32 %v2380, %v3351
  %v3387 = vadd.f32 %v2381, %v3354
  %v3388 = vadd.f32 %v2382, %v3356
  %v3389 = vadd.f32 %v2383, %v3359
  %v3390 = vadd.f32 %v2384, %v3361
  %v3391 = vadd.f32 %v2385, %v3364
  %v3392 = vadd.f32 %v2386, %v3366
  %v3393 = vadd.f32 %v2387, %v3369
  %v3394 = vadd.f32 %v2388, %v3371
  %v3395 = vadd.f32 %v2389, %v3374
  %v3396 = vadd.f32 %v2390, %v3376
  %v3397 = vadd.f32 %v2391, %v3379
  %v3398 = vadd.f32 %v2392, %v3381
  %v3399 = vsel %vm217, %v3383, 0.0
  %3400 = vadd.xlane.f32.xlu0 %v3399
  %v3401 = vpop.xlane.xlu0 %3400
  %v3402 = vsel %vm217, %v3384, 0.0
  %3403 = vadd.xlane.f32.xlu0 %v3402
  %v3404 = vpop.xlane.xlu0 %3403
  %v3405 = vsel %vm217, %v3385, 0.0
  %3406 = vadd.xlane.f32.xlu0 %v3405
  %v3407 = vpop.xlane.xlu0 %3406
  %v3408 = vsel %vm217, %v3386, 0.0
  %3409 = vadd.xlane.f32.xlu0 %v3408
  %v3410 = vpop.xlane.xlu0 %3409
  %v3411 = vsel %vm217, %v3387, 0.0
  %3412 = vadd.xlane.f32.xlu0 %v3411
  %v3413 = vpop.xlane.xlu0 %3412
  %v3414 = vsel %vm217, %v3388, 0.0
  %3415 = vadd.xlane.f32.xlu0 %v3414
  %v3416 = vpop.xlane.xlu0 %3415
  %v3417 = vsel %vm217, %v3389, 0.0
  %3418 = vadd.xlane.f32.xlu0 %v3417
  %v3419 = vpop.xlane.xlu0 %3418
  %v3420 = vsel %vm217, %v3390, 0.0
  %3421 = vadd.xlane.f32.xlu0 %v3420
  %v3422 = vpop.xlane.xlu0 %3421
  %v3423 = vsel %vm217, %v3391, 0.0
  %3424 = vadd.xlane.f32.xlu0 %v3423
  %v3425 = vpop.xlane.xlu0 %3424
  %v3426 = vsel %vm217, %v3392, 0.0
  %3427 = vadd.xlane.f32.xlu0 %v3426
  %v3428 = vpop.xlane.xlu0 %3427
  %v3429 = vsel %vm217, %v3393, 0.0
  %3430 = vadd.xlane.f32.xlu0 %v3429
  %v3431 = vpop.xlane.xlu0 %3430
  %v3432 = vsel %vm217, %v3394, 0.0
  %3433 = vadd.xlane.f32.xlu0 %v3432
  %v3434 = vpop.xlane.xlu0 %3433
  %v3435 = vsel %vm217, %v3395, 0.0
  %3436 = vadd.xlane.f32.xlu0 %v3435
  %v3437 = vpop.xlane.xlu0 %3436
  %v3438 = vsel %vm217, %v3396, 0.0
  %3439 = vadd.xlane.f32.xlu0 %v3438
  %v3440 = vpop.xlane.xlu0 %3439
  %v3441 = vsel %vm217, %v3397, 0.0
  %3442 = vadd.xlane.f32.xlu0 %v3441
  %v3443 = vpop.xlane.xlu0 %3442
  %v3444 = vsel %vm217, %v3398, 0.0
  %3445 = vadd.xlane.f32.xlu0 %v3444
  %v3446 = vpop.xlane.xlu0 %3445
  %v3447 = vmul.f32 %v3401, %v1340
  %v3448 = vmul.f32 %v3404, %v1340
  %v3449 = vmul.f32 %v3407, %v1340
  %v3450 = vmul.f32 %v3410, %v1340
  %v3451 = vmul.f32 %v3413, %v1340
  %v3452 = vmul.f32 %v3416, %v1340
  %v3453 = vmul.f32 %v3419, %v1340
  %v3454 = vmul.f32 %v3422, %v1340
  %v3455 = vmul.f32 %v3425, %v1340
  %v3456 = vmul.f32 %v3428, %v1340
  %v3457 = vmul.f32 %v3431, %v1340
  %v3458 = vmul.f32 %v3434, %v1340
  %v3459 = vmul.f32 %v3437, %v1340
  %v3460 = vmul.f32 %v3440, %v1340
  %v3461 = vmul.f32 %v3443, %v1340
  %v3462 = vmul.f32 %v3446, %v1340
  %v3463 = vsub.f32 %v3383, %v3447
  %v3464 = vsub.f32 %v3384, %v3448
  %v3465 = vsub.f32 %v3385, %v3449
  %v3466 = vsub.f32 %v3386, %v3450
  %v3467 = vsub.f32 %v3387, %v3451
  %v3468 = vsub.f32 %v3388, %v3452
  %v3469 = vsub.f32 %v3389, %v3453
  %v3470 = vsub.f32 %v3390, %v3454
  %v3471 = vsub.f32 %v3391, %v3455
  %v3472 = vsub.f32 %v3392, %v3456
  %v3473 = vsub.f32 %v3393, %v3457
  %v3474 = vsub.f32 %v3394, %v3458
  %v3475 = vsub.f32 %v3395, %v3459
  %v3476 = vsub.f32 %v3396, %v3460
  %v3477 = vsub.f32 %v3397, %v3461
  %v3478 = vsub.f32 %v3398, %v3462
  %v3479 = vmul.f32 %v3463, %v3463
  %v3480 = vmul.f32 %v3464, %v3464
  %v3481 = vmul.f32 %v3465, %v3465
  %v3482 = vmul.f32 %v3466, %v3466
  %v3483 = vmul.f32 %v3467, %v3467
  %v3484 = vmul.f32 %v3468, %v3468
  %v3485 = vmul.f32 %v3469, %v3469
  %v3486 = vmul.f32 %v3470, %v3470
  %v3487 = vmul.f32 %v3471, %v3471
  %v3488 = vmul.f32 %v3472, %v3472
  %v3489 = vmul.f32 %v3473, %v3473
  %v3490 = vmul.f32 %v3474, %v3474
  %v3491 = vmul.f32 %v3475, %v3475
  %v3492 = vmul.f32 %v3476, %v3476
  %v3493 = vmul.f32 %v3477, %v3477
  %v3494 = vmul.f32 %v3478, %v3478
  %v3495 = vsel %vm217, %v3479, 0.0
  %3496 = vadd.xlane.f32.xlu0 %v3495
  %v3497 = vpop.xlane.xlu0 %3496
  %v3498 = vsel %vm217, %v3480, 0.0
  %3499 = vadd.xlane.f32.xlu0 %v3498
  %v3500 = vpop.xlane.xlu0 %3499
  %v3501 = vsel %vm217, %v3481, 0.0
  %3502 = vadd.xlane.f32.xlu0 %v3501
  %v3503 = vpop.xlane.xlu0 %3502
  %v3504 = vsel %vm217, %v3482, 0.0
  %3505 = vadd.xlane.f32.xlu0 %v3504
  %v3506 = vpop.xlane.xlu0 %3505
  %v3507 = vsel %vm217, %v3483, 0.0
  %3508 = vadd.xlane.f32.xlu0 %v3507
  %v3509 = vpop.xlane.xlu0 %3508
  %v3510 = vsel %vm217, %v3484, 0.0
  %3511 = vadd.xlane.f32.xlu0 %v3510
  %v3512 = vpop.xlane.xlu0 %3511
  %v3513 = vsel %vm217, %v3485, 0.0
  %3514 = vadd.xlane.f32.xlu0 %v3513
  %v3515 = vpop.xlane.xlu0 %3514
  %v3516 = vsel %vm217, %v3486, 0.0
  %3517 = vadd.xlane.f32.xlu0 %v3516
  %v3518 = vpop.xlane.xlu0 %3517
  %v3519 = vsel %vm217, %v3487, 0.0
  %3520 = vadd.xlane.f32.xlu0 %v3519
  %v3521 = vpop.xlane.xlu0 %3520
  %v3522 = vsel %vm217, %v3488, 0.0
  %3523 = vadd.xlane.f32.xlu0 %v3522
  %v3524 = vpop.xlane.xlu0 %3523
  %v3525 = vsel %vm217, %v3489, 0.0
  %3526 = vadd.xlane.f32.xlu0 %v3525
  %v3527 = vpop.xlane.xlu0 %3526
  %v3528 = vsel %vm217, %v3490, 0.0
  %3529 = vadd.xlane.f32.xlu0 %v3528
  %v3530 = vpop.xlane.xlu0 %3529
  %v3531 = vsel %vm217, %v3491, 0.0
  %3532 = vadd.xlane.f32.xlu0 %v3531
  %v3533 = vpop.xlane.xlu0 %3532
  %v3534 = vsel %vm217, %v3492, 0.0
  %3535 = vadd.xlane.f32.xlu0 %v3534
  %v3536 = vpop.xlane.xlu0 %3535
  %v3537 = vsel %vm217, %v3493, 0.0
  %3538 = vadd.xlane.f32.xlu0 %v3537
  %v3539 = vpop.xlane.xlu0 %3538
  %v3540 = vsel %vm217, %v3494, 0.0
  %3541 = vadd.xlane.f32.xlu0 %v3540
  %v3542 = vpop.xlane.xlu0 %3541
  %v3543 = vmul.f32 %v3497, %v1340
  %v3544 = vmul.f32 %v3500, %v1340
  %v3545 = vmul.f32 %v3503, %v1340
  %v3546 = vmul.f32 %v3506, %v1340
  %v3547 = vmul.f32 %v3509, %v1340
  %v3548 = vmul.f32 %v3512, %v1340
  %v3549 = vmul.f32 %v3515, %v1340
  %v3550 = vmul.f32 %v3518, %v1340
  %v3551 = vmul.f32 %v3521, %v1340
  %v3552 = vmul.f32 %v3524, %v1340
  %v3553 = vmul.f32 %v3527, %v1340
  %v3554 = vmul.f32 %v3530, %v1340
  %v3555 = vmul.f32 %v3533, %v1340
  %v3556 = vmul.f32 %v3536, %v1340
  %v3557 = vmul.f32 %v3539, %v1340
  %v3558 = vmul.f32 %v3542, %v1340
  %v3559 = vadd.f32 %v3543, 1e-05
  %v3560 = vadd.f32 %v3544, 1e-05
  %v3561 = vadd.f32 %v3545, 1e-05
  %v3562 = vadd.f32 %v3546, 1e-05
  %v3563 = vadd.f32 %v3547, 1e-05
  %v3564 = vadd.f32 %v3548, 1e-05
  %v3565 = vadd.f32 %v3549, 1e-05
  %v3566 = vadd.f32 %v3550, 1e-05
  %v3567 = vadd.f32 %v3551, 1e-05
  %v3568 = vadd.f32 %v3552, 1e-05
  %v3569 = vadd.f32 %v3553, 1e-05
  %v3570 = vadd.f32 %v3554, 1e-05
  %v3571 = vadd.f32 %v3555, 1e-05
  %v3572 = vadd.f32 %v3556, 1e-05
  %v3573 = vadd.f32 %v3557, 1e-05
  %v3574 = vadd.f32 %v3558, 1e-05
  %v3575 = vrsqrt.pop %v3559
  %v3576 = vmul.f32 %v3575, %v3559
  %v3577 = vmul.f32 %v3576, %v3575
  %v3578 = vmul.f32 0.5, %v3577
  %v3579 = vsub.f32 1.5, %v3578
  %v3580 = vmul.f32 %v3575, %v3579
  %vm3581 = vweird.f32 %v3559
  %vm3582 = vweird.f32 %v3575
  %vm3583 = vmor %vm3581, %vm3582
  %v3584 = vsel %vm3583, %v3575, %v3580
  %v3585 = vrsqrt.pop %v3560
  %v3586 = vmul.f32 %v3585, %v3560
  %v3587 = vmul.f32 %v3586, %v3585
  %v3588 = vmul.f32 0.5, %v3587
  %v3589 = vsub.f32 1.5, %v3588
  %v3590 = vmul.f32 %v3585, %v3589
  %vm3591 = vweird.f32 %v3560
  %vm3592 = vweird.f32 %v3585
  %vm3593 = vmor %vm3591, %vm3592
  %v3594 = vsel %vm3593, %v3585, %v3590
  %v3595 = vrsqrt.pop %v3561
  %v3596 = vmul.f32 %v3595, %v3561
  %v3597 = vmul.f32 %v3596, %v3595
  %v3598 = vmul.f32 0.5, %v3597
  %v3599 = vsub.f32 1.5, %v3598
  %v3600 = vmul.f32 %v3595, %v3599
  %vm3601 = vweird.f32 %v3561
  %vm3602 = vweird.f32 %v3595
  %vm3603 = vmor %vm3601, %vm3602
  %v3604 = vsel %vm3603, %v3595, %v3600
  %v3605 = vrsqrt.pop %v3562
  %v3606 = vmul.f32 %v3605, %v3562
  %v3607 = vmul.f32 %v3606, %v3605
  %v3608 = vmul.f32 0.5, %v3607
  %v3609 = vsub.f32 1.5, %v3608
  %v3610 = vmul.f32 %v3605, %v3609
  %vm3611 = vweird.f32 %v3562
  %vm3612 = vweird.f32 %v3605
  %vm3613 = vmor %vm3611, %vm3612
  %v3614 = vsel %vm3613, %v3605, %v3610
  %v3615 = vrsqrt.pop %v3563
  %v3616 = vmul.f32 %v3615, %v3563
  %v3617 = vmul.f32 %v3616, %v3615
  %v3618 = vmul.f32 0.5, %v3617
  %v3619 = vsub.f32 1.5, %v3618
  %v3620 = vmul.f32 %v3615, %v3619
  %vm3621 = vweird.f32 %v3563
  %vm3622 = vweird.f32 %v3615
  %vm3623 = vmor %vm3621, %vm3622
  %v3624 = vsel %vm3623, %v3615, %v3620
  %v3625 = vrsqrt.pop %v3564
  %v3626 = vmul.f32 %v3625, %v3564
  %v3627 = vmul.f32 %v3626, %v3625
  %v3628 = vmul.f32 0.5, %v3627
  %v3629 = vsub.f32 1.5, %v3628
  %v3630 = vmul.f32 %v3625, %v3629
  %vm3631 = vweird.f32 %v3564
  %vm3632 = vweird.f32 %v3625
  %vm3633 = vmor %vm3631, %vm3632
  %v3634 = vsel %vm3633, %v3625, %v3630
  %v3635 = vrsqrt.pop %v3565
  %v3636 = vmul.f32 %v3635, %v3565
  %v3637 = vmul.f32 %v3636, %v3635
  %v3638 = vmul.f32 0.5, %v3637
  %v3639 = vsub.f32 1.5, %v3638
  %v3640 = vmul.f32 %v3635, %v3639
  %vm3641 = vweird.f32 %v3565
  %vm3642 = vweird.f32 %v3635
  %vm3643 = vmor %vm3641, %vm3642
  %v3644 = vsel %vm3643, %v3635, %v3640
  %v3645 = vrsqrt.pop %v3566
  %v3646 = vmul.f32 %v3645, %v3566
  %v3647 = vmul.f32 %v3646, %v3645
  %v3648 = vmul.f32 0.5, %v3647
  %v3649 = vsub.f32 1.5, %v3648
  %v3650 = vmul.f32 %v3645, %v3649
  %vm3651 = vweird.f32 %v3566
  %vm3652 = vweird.f32 %v3645
  %vm3653 = vmor %vm3651, %vm3652
  %v3654 = vsel %vm3653, %v3645, %v3650
  %v3655 = vrsqrt.pop %v3567
  %v3656 = vmul.f32 %v3655, %v3567
  %v3657 = vmul.f32 %v3656, %v3655
  %v3658 = vmul.f32 0.5, %v3657
  %v3659 = vsub.f32 1.5, %v3658
  %v3660 = vmul.f32 %v3655, %v3659
  %vm3661 = vweird.f32 %v3567
  %vm3662 = vweird.f32 %v3655
  %vm3663 = vmor %vm3661, %vm3662
  %v3664 = vsel %vm3663, %v3655, %v3660
  %v3665 = vrsqrt.pop %v3568
  %v3666 = vmul.f32 %v3665, %v3568
  %v3667 = vmul.f32 %v3666, %v3665
  %v3668 = vmul.f32 0.5, %v3667
  %v3669 = vsub.f32 1.5, %v3668
  %v3670 = vmul.f32 %v3665, %v3669
  %vm3671 = vweird.f32 %v3568
  %vm3672 = vweird.f32 %v3665
  %vm3673 = vmor %vm3671, %vm3672
  %v3674 = vsel %vm3673, %v3665, %v3670
  %v3675 = vrsqrt.pop %v3569
  %v3676 = vmul.f32 %v3675, %v3569
  %v3677 = vmul.f32 %v3676, %v3675
  %v3678 = vmul.f32 0.5, %v3677
  %v3679 = vsub.f32 1.5, %v3678
  %v3680 = vmul.f32 %v3675, %v3679
  %vm3681 = vweird.f32 %v3569
  %vm3682 = vweird.f32 %v3675
  %vm3683 = vmor %vm3681, %vm3682
  %v3684 = vsel %vm3683, %v3675, %v3680
  %v3685 = vrsqrt.pop %v3570
  %v3686 = vmul.f32 %v3685, %v3570
  %v3687 = vmul.f32 %v3686, %v3685
  %v3688 = vmul.f32 0.5, %v3687
  %v3689 = vsub.f32 1.5, %v3688
  %v3690 = vmul.f32 %v3685, %v3689
  %vm3691 = vweird.f32 %v3570
  %vm3692 = vweird.f32 %v3685
  %vm3693 = vmor %vm3691, %vm3692
  %v3694 = vsel %vm3693, %v3685, %v3690
  %v3695 = vrsqrt.pop %v3571
  %v3696 = vmul.f32 %v3695, %v3571
  %v3697 = vmul.f32 %v3696, %v3695
  %v3698 = vmul.f32 0.5, %v3697
  %v3699 = vsub.f32 1.5, %v3698
  %v3700 = vmul.f32 %v3695, %v3699
  %vm3701 = vweird.f32 %v3571
  %vm3702 = vweird.f32 %v3695
  %vm3703 = vmor %vm3701, %vm3702
  %v3704 = vsel %vm3703, %v3695, %v3700
  %v3705 = vrsqrt.pop %v3572
  %v3706 = vmul.f32 %v3705, %v3572
  %v3707 = vmul.f32 %v3706, %v3705
  %v3708 = vmul.f32 0.5, %v3707
  %v3709 = vsub.f32 1.5, %v3708
  %v3710 = vmul.f32 %v3705, %v3709
  %vm3711 = vweird.f32 %v3572
  %vm3712 = vweird.f32 %v3705
  %vm3713 = vmor %vm3711, %vm3712
  %v3714 = vsel %vm3713, %v3705, %v3710
  %v3715 = vrsqrt.pop %v3573
  %v3716 = vmul.f32 %v3715, %v3573
  %v3717 = vmul.f32 %v3716, %v3715
  %v3718 = vmul.f32 0.5, %v3717
  %v3719 = vsub.f32 1.5, %v3718
  %v3720 = vmul.f32 %v3715, %v3719
  %vm3721 = vweird.f32 %v3573
  %vm3722 = vweird.f32 %v3715
  %vm3723 = vmor %vm3721, %vm3722
  %v3724 = vsel %vm3723, %v3715, %v3720
  %v3725 = vrsqrt.pop %v3574
  %v3726 = vmul.f32 %v3725, %v3574
  %v3727 = vmul.f32 %v3726, %v3725
  %v3728 = vmul.f32 0.5, %v3727
  %v3729 = vsub.f32 1.5, %v3728
  %v3730 = vmul.f32 %v3725, %v3729
  %vm3731 = vweird.f32 %v3574
  %vm3732 = vweird.f32 %v3725
  %vm3733 = vmor %vm3731, %vm3732
  %v3734 = vsel %vm3733, %v3725, %v3730
  %v3735 = vmul.f32 %v3463, %v3584
  %v3736 = vmul.f32 %v3464, %v3594
  %v3737 = vmul.f32 %v3465, %v3604
  %v3738 = vmul.f32 %v3466, %v3614
  %v3739 = vmul.f32 %v3467, %v3624
  %v3740 = vmul.f32 %v3468, %v3634
  %v3741 = vmul.f32 %v3469, %v3644
  %v3742 = vmul.f32 %v3470, %v3654
  %v3743 = vmul.f32 %v3471, %v3664
  %v3744 = vmul.f32 %v3472, %v3674
  %v3745 = vmul.f32 %v3473, %v3684
  %v3746 = vmul.f32 %v3474, %v3694
  %v3747 = vmul.f32 %v3475, %v3704
  %v3748 = vmul.f32 %v3476, %v3714
  %v3749 = vmul.f32 %v3477, %v3724
  %v3750 = vmul.f32 %v3478, %v3734
  %v3751 = vperm.slane %v2412, 3
  %v3752 = vmul.f32 %v3735, %v3751
  %v3753 = vmul.f32 %v3736, %v3751
  %v3754 = vmul.f32 %v3737, %v3751
  %v3755 = vmul.f32 %v3738, %v3751
  %v3756 = vmul.f32 %v3739, %v3751
  %v3757 = vmul.f32 %v3740, %v3751
  %v3758 = vmul.f32 %v3741, %v3751
  %v3759 = vmul.f32 %v3742, %v3751
  %v3760 = vmul.f32 %v3743, %v3751
  %v3761 = vmul.f32 %v3744, %v3751
  %v3762 = vmul.f32 %v3745, %v3751
  %v3763 = vmul.f32 %v3746, %v3751
  %v3764 = vmul.f32 %v3747, %v3751
  %v3765 = vmul.f32 %v3748, %v3751
  %v3766 = vmul.f32 %v3749, %v3751
  %v3767 = vmul.f32 %v3750, %v3751
  %v3768 = vperm.slane %v2412, 4
  %v3769 = vadd.f32 %v3752, %v3768
  %v3770 = vadd.f32 %v3753, %v3768
  %v3771 = vadd.f32 %v3754, %v3768
  %v3772 = vadd.f32 %v3755, %v3768
  %v3773 = vadd.f32 %v3756, %v3768
  %v3774 = vadd.f32 %v3757, %v3768
  %v3775 = vadd.f32 %v3758, %v3768
  %v3776 = vadd.f32 %v3759, %v3768
  %v3777 = vadd.f32 %v3760, %v3768
  %v3778 = vadd.f32 %v3761, %v3768
  %v3779 = vadd.f32 %v3762, %v3768
  %v3780 = vadd.f32 %v3763, %v3768
  %v3781 = vadd.f32 %v3764, %v3768
  %v3782 = vadd.f32 %v3765, %v3768
  %v3783 = vadd.f32 %v3766, %v3768
  %v3784 = vadd.f32 %v3767, %v3768
  %v3785 = vpack.c.bf16 %v3770, %v3769
  %v3786 = vpack.c.bf16 %v3772, %v3771
  %v3787 = vpack.c.bf16 %v3774, %v3773
  %v3788 = vpack.c.bf16 %v3776, %v3775
  %v3789 = vpack.c.bf16 %v3778, %v3777
  %v3790 = vpack.c.bf16 %v3780, %v3779
  %v3791 = vpack.c.bf16 %v3782, %v3781
  %v3792 = vpack.c.bf16 %v3784, %v3783
  %v3793 = vpack.c.bf16 %v2414, %v2413
  %v3794 = vpack.c.bf16 %v2416, %v2415
  %v3795 = vperm.slane %v2412, 1
  %v3797 = vsel %vm217, %v3785, 0
  %v3800 = vsel %vm217, %v3786, 0
  %v3803 = vsel %vm217, %v3787, 0
  %v3806 = vsel %vm217, %v3788, 0
  %v3809 = vsel %vm217, %v3789, 0
  %v3812 = vsel %vm217, %v3790, 0
  %v3815 = vsel %vm217, %v3791, 0
  %v3818 = vsel %vm217, %v3792, 0
  %3820 = vmatpush.bf16.msra.mxu0 0
  %3821 = vmatpush.bf16.msra.mxu0 0
  %3822 = vmatpush.bf16.msra.mxu0 0
  %3823 = vmatpush.bf16.msra.mxu0 0
  %3824 = vmatpush.bf16.msra.mxu0 0
  %3825 = vmatpush.bf16.msra.mxu0 0
  %3826 = vmatpush.bf16.msra.mxu0 %v3794
  %3827 = vmatpush.bf16.msra.mxu0 %v3793
  %3828 = vmatmul.bf16.gmra.mxu0 %v3797
  %v3829 = vpop.f32.mrf.mxu0
  %v3830 = vadd.f32 %v3795, %v3829
  %v3831 = vpop.f32.mrf.mxu0
  %v3832 = vadd.f32 %v3795, %v3831
  %3833 = vmatmul.bf16.gmra.mxu0 %v3800
  %v3834 = vpop.f32.mrf.mxu0
  %v3835 = vadd.f32 %v3795, %v3834
  %v3836 = vpop.f32.mrf.mxu0
  %v3837 = vadd.f32 %v3795, %v3836
  %3838 = vmatmul.bf16.gmra.mxu0 %v3803
  %v3839 = vpop.f32.mrf.mxu0
  %v3840 = vadd.f32 %v3795, %v3839
  %v3841 = vpop.f32.mrf.mxu0
  %v3842 = vadd.f32 %v3795, %v3841
  %3843 = vmatmul.bf16.gmra.mxu0 %v3806
  %v3844 = vpop.f32.mrf.mxu0
  %v3845 = vadd.f32 %v3795, %v3844
  %v3846 = vpop.f32.mrf.mxu0
  %v3847 = vadd.f32 %v3795, %v3846
  %3848 = vmatmul.bf16.gmra.mxu0 %v3809
  %v3849 = vpop.f32.mrf.mxu0
  %v3850 = vadd.f32 %v3795, %v3849
  %v3851 = vpop.f32.mrf.mxu0
  %v3852 = vadd.f32 %v3795, %v3851
  %3853 = vmatmul.bf16.gmra.mxu0 %v3812
  %v3854 = vpop.f32.mrf.mxu0
  %v3855 = vadd.f32 %v3795, %v3854
  %v3856 = vpop.f32.mrf.mxu0
  %v3857 = vadd.f32 %v3795, %v3856
  %3858 = vmatmul.bf16.gmra.mxu0 %v3815
  %v3859 = vpop.f32.mrf.mxu0
  %v3860 = vadd.f32 %v3795, %v3859
  %v3861 = vpop.f32.mrf.mxu0
  %v3862 = vadd.f32 %v3795, %v3861
  %3863 = vmatmul.bf16.gmra.mxu0 %v3818
  %v3864 = vpop.f32.mrf.mxu0
  %v3865 = vadd.f32 %v3795, %v3864
  %v3866 = vpop.f32.mrf.mxu0
  %v3867 = vadd.f32 %v3795, %v3866
  %3868 = vdwg.mxu0
  %v3869 = vmul.f32 %v3830, %v3830
  %v3870 = vmul.f32 %v3832, %v3832
  %v3871 = vmul.f32 %v3835, %v3835
  %v3872 = vmul.f32 %v3837, %v3837
  %v3873 = vmul.f32 %v3840, %v3840
  %v3874 = vmul.f32 %v3842, %v3842
  %v3875 = vmul.f32 %v3845, %v3845
  %v3876 = vmul.f32 %v3847, %v3847
  %v3877 = vmul.f32 %v3850, %v3850
  %v3878 = vmul.f32 %v3852, %v3852
  %v3879 = vmul.f32 %v3855, %v3855
  %v3880 = vmul.f32 %v3857, %v3857
  %v3881 = vmul.f32 %v3860, %v3860
  %v3882 = vmul.f32 %v3862, %v3862
  %v3883 = vmul.f32 %v3865, %v3865
  %v3884 = vmul.f32 %v3867, %v3867
  %v3885 = vmul.f32 %v3830, %v3869
  %v3886 = vmul.f32 %v3832, %v3870
  %v3887 = vmul.f32 %v3835, %v3871
  %v3888 = vmul.f32 %v3837, %v3872
  %v3889 = vmul.f32 %v3840, %v3873
  %v3890 = vmul.f32 %v3842, %v3874
  %v3891 = vmul.f32 %v3845, %v3875
  %v3892 = vmul.f32 %v3847, %v3876
  %v3893 = vmul.f32 %v3850, %v3877
  %v3894 = vmul.f32 %v3852, %v3878
  %v3895 = vmul.f32 %v3855, %v3879
  %v3896 = vmul.f32 %v3857, %v3880
  %v3897 = vmul.f32 %v3860, %v3881
  %v3898 = vmul.f32 %v3862, %v3882
  %v3899 = vmul.f32 %v3865, %v3883
  %v3900 = vmul.f32 %v3867, %v3884
  %v3901 = vmul.f32 %v3885, 0.044715
  %v3902 = vmul.f32 %v3886, 0.044715
  %v3903 = vmul.f32 %v3887, 0.044715
  %v3904 = vmul.f32 %v3888, 0.044715
  %v3905 = vmul.f32 %v3889, 0.044715
  %v3906 = vmul.f32 %v3890, 0.044715
  %v3907 = vmul.f32 %v3891, 0.044715
  %v3908 = vmul.f32 %v3892, 0.044715
  %v3909 = vmul.f32 %v3893, 0.044715
  %v3910 = vmul.f32 %v3894, 0.044715
  %v3911 = vmul.f32 %v3895, 0.044715
  %v3912 = vmul.f32 %v3896, 0.044715
  %v3913 = vmul.f32 %v3897, 0.044715
  %v3914 = vmul.f32 %v3898, 0.044715
  %v3915 = vmul.f32 %v3899, 0.044715
  %v3916 = vmul.f32 %v3900, 0.044715
  %v3917 = vadd.f32 %v3830, %v3901
  %v3918 = vadd.f32 %v3832, %v3902
  %v3919 = vadd.f32 %v3835, %v3903
  %v3920 = vadd.f32 %v3837, %v3904
  %v3921 = vadd.f32 %v3840, %v3905
  %v3922 = vadd.f32 %v3842, %v3906
  %v3923 = vadd.f32 %v3845, %v3907
  %v3924 = vadd.f32 %v3847, %v3908
  %v3925 = vadd.f32 %v3850, %v3909
  %v3926 = vadd.f32 %v3852, %v3910
  %v3927 = vadd.f32 %v3855, %v3911
  %v3928 = vadd.f32 %v3857, %v3912
  %v3929 = vadd.f32 %v3860, %v3913
  %v3930 = vadd.f32 %v3862, %v3914
  %v3931 = vadd.f32 %v3865, %v3915
  %v3932 = vadd.f32 %v3867, %v3916
  %v3933 = vmul.f32 %v3917, 0.7978846
  %v3934 = vmul.f32 %v3918, 0.7978846
  %v3935 = vmul.f32 %v3919, 0.7978846
  %v3936 = vmul.f32 %v3920, 0.7978846
  %v3937 = vmul.f32 %v3921, 0.7978846
  %v3938 = vmul.f32 %v3922, 0.7978846
  %v3939 = vmul.f32 %v3923, 0.7978846
  %v3940 = vmul.f32 %v3924, 0.7978846
  %v3941 = vmul.f32 %v3925, 0.7978846
  %v3942 = vmul.f32 %v3926, 0.7978846
  %v3943 = vmul.f32 %v3927, 0.7978846
  %v3944 = vmul.f32 %v3928, 0.7978846
  %v3945 = vmul.f32 %v3929, 0.7978846
  %v3946 = vmul.f32 %v3930, 0.7978846
  %v3947 = vmul.f32 %v3931, 0.7978846
  %v3948 = vmul.f32 %v3932, 0.7978846
  %v3949 = vtanh.pop %v3933
  %v3950 = vtanh.pop %v3934
  %v3951 = vtanh.pop %v3935
  %v3952 = vtanh.pop %v3936
  %v3953 = vtanh.pop %v3937
  %v3954 = vtanh.pop %v3938
  %v3955 = vtanh.pop %v3939
  %v3956 = vtanh.pop %v3940
  %v3957 = vtanh.pop %v3941
  %v3958 = vtanh.pop %v3942
  %v3959 = vtanh.pop %v3943
  %v3960 = vtanh.pop %v3944
  %v3961 = vtanh.pop %v3945
  %v3962 = vtanh.pop %v3946
  %v3963 = vtanh.pop %v3947
  %v3964 = vtanh.pop %v3948
  %v3965 = vadd.f32 %v3949, 1.0
  %v3966 = vadd.f32 %v3950, 1.0
  %v3967 = vadd.f32 %v3951, 1.0
  %v3968 = vadd.f32 %v3952, 1.0
  %v3969 = vadd.f32 %v3953, 1.0
  %v3970 = vadd.f32 %v3954, 1.0
  %v3971 = vadd.f32 %v3955, 1.0
  %v3972 = vadd.f32 %v3956, 1.0
  %v3973 = vadd.f32 %v3957, 1.0
  %v3974 = vadd.f32 %v3958, 1.0
  %v3975 = vadd.f32 %v3959, 1.0
  %v3976 = vadd.f32 %v3960, 1.0
  %v3977 = vadd.f32 %v3961, 1.0
  %v3978 = vadd.f32 %v3962, 1.0
  %v3979 = vadd.f32 %v3963, 1.0
  %v3980 = vadd.f32 %v3964, 1.0
  %v3981 = vmul.f32 %v3965, 0.5
  %v3982 = vmul.f32 %v3966, 0.5
  %v3983 = vmul.f32 %v3967, 0.5
  %v3984 = vmul.f32 %v3968, 0.5
  %v3985 = vmul.f32 %v3969, 0.5
  %v3986 = vmul.f32 %v3970, 0.5
  %v3987 = vmul.f32 %v3971, 0.5
  %v3988 = vmul.f32 %v3972, 0.5
  %v3989 = vmul.f32 %v3973, 0.5
  %v3990 = vmul.f32 %v3974, 0.5
  %v3991 = vmul.f32 %v3975, 0.5
  %v3992 = vmul.f32 %v3976, 0.5
  %v3993 = vmul.f32 %v3977, 0.5
  %v3994 = vmul.f32 %v3978, 0.5
  %v3995 = vmul.f32 %v3979, 0.5
  %v3996 = vmul.f32 %v3980, 0.5
  %v3997 = vmul.f32 %v3830, %v3981
  %v3998 = vmul.f32 %v3832, %v3982
  %v3999 = vmul.f32 %v3835, %v3983
  %v4000 = vmul.f32 %v3837, %v3984
  %v4001 = vmul.f32 %v3840, %v3985
  %v4002 = vmul.f32 %v3842, %v3986
  %v4003 = vmul.f32 %v3845, %v3987
  %v4004 = vmul.f32 %v3847, %v3988
  %v4005 = vmul.f32 %v3850, %v3989
  %v4006 = vmul.f32 %v3852, %v3990
  %v4007 = vmul.f32 %v3855, %v3991
  %v4008 = vmul.f32 %v3857, %v3992
  %v4009 = vmul.f32 %v3860, %v3993
  %v4010 = vmul.f32 %v3862, %v3994
  %v4011 = vmul.f32 %v3865, %v3995
  %v4012 = vmul.f32 %v3867, %v3996
  %v4013 = vpack.c.bf16 %v3998, %v3997
  %v4014 = vpack.c.bf16 %v4000, %v3999
  %v4015 = vpack.c.bf16 %v4002, %v4001
  %v4016 = vpack.c.bf16 %v4004, %v4003
  %v4017 = vpack.c.bf16 %v4006, %v4005
  %v4018 = vpack.c.bf16 %v4008, %v4007
  %v4019 = vpack.c.bf16 %v4010, %v4009
  %v4020 = vpack.c.bf16 %v4012, %v4011
  %v4021 = vpack.c.bf16 %v2418, %v2417
  %v4022 = vpack.c.bf16 %v2420, %v2419
  %v4023 = vperm.slane %v2412, 2
  %v4025 = vsel %vm217, %v4013, 0
  %v4028 = vsel %vm217, %v4014, 0
  %v4031 = vsel %vm217, %v4015, 0
  %v4034 = vsel %vm217, %v4016, 0
  %v4037 = vsel %vm217, %v4017, 0
  %v4040 = vsel %vm217, %v4018, 0
  %v4043 = vsel %vm217, %v4019, 0
  %v4046 = vsel %vm217, %v4020, 0
  %4048 = vmatpush.bf16.msra.mxu0 0
  %4049 = vmatpush.bf16.msra.mxu0 0
  %4050 = vmatpush.bf16.msra.mxu0 0
  %4051 = vmatpush.bf16.msra.mxu0 0
  %4052 = vmatpush.bf16.msra.mxu0 0
  %4053 = vmatpush.bf16.msra.mxu0 0
  %4054 = vmatpush.bf16.msra.mxu0 %v4022
  %4055 = vmatpush.bf16.msra.mxu0 %v4021
  %4056 = vmatmul.bf16.gmra.mxu0 %v4025
  %v4057 = vpop.f32.mrf.mxu0
  %v4058 = vadd.f32 %v4023, %v4057
  %v4059 = vpop.f32.mrf.mxu0
  %v4060 = vadd.f32 %v4023, %v4059
  %4061 = vmatmul.bf16.gmra.mxu0 %v4028
  %v4062 = vpop.f32.mrf.mxu0
  %v4063 = vadd.f32 %v4023, %v4062
  %v4064 = vpop.f32.mrf.mxu0
  %v4065 = vadd.f32 %v4023, %v4064
  %4066 = vmatmul.bf16.gmra.mxu0 %v4031
  %v4067 = vpop.f32.mrf.mxu0
  %v4068 = vadd.f32 %v4023, %v4067
  %v4069 = vpop.f32.mrf.mxu0
  %v4070 = vadd.f32 %v4023, %v4069
  %4071 = vmatmul.bf16.gmra.mxu0 %v4034
  %v4072 = vpop.f32.mrf.mxu0
  %v4073 = vadd.f32 %v4023, %v4072
  %v4074 = vpop.f32.mrf.mxu0
  %v4075 = vadd.f32 %v4023, %v4074
  %4076 = vmatmul.bf16.gmra.mxu0 %v4037
  %v4077 = vpop.f32.mrf.mxu0
  %v4078 = vadd.f32 %v4023, %v4077
  %v4079 = vpop.f32.mrf.mxu0
  %v4080 = vadd.f32 %v4023, %v4079
  %4081 = vmatmul.bf16.gmra.mxu0 %v4040
  %v4082 = vpop.f32.mrf.mxu0
  %v4083 = vadd.f32 %v4023, %v4082
  %v4084 = vpop.f32.mrf.mxu0
  %v4085 = vadd.f32 %v4023, %v4084
  %4086 = vmatmul.bf16.gmra.mxu0 %v4043
  %v4087 = vpop.f32.mrf.mxu0
  %v4088 = vadd.f32 %v4023, %v4087
  %v4089 = vpop.f32.mrf.mxu0
  %v4090 = vadd.f32 %v4023, %v4089
  %4091 = vmatmul.bf16.gmra.mxu0 %v4046
  %v4092 = vpop.f32.mrf.mxu0
  %v4093 = vadd.f32 %v4023, %v4092
  %v4094 = vpop.f32.mrf.mxu0
  %v4095 = vadd.f32 %v4023, %v4094
  %4096 = vdwg.mxu0
  %v4097 = vadd.f32 %v3769, %v4058
  %v4098 = vadd.f32 %v3770, %v4060
  %v4099 = vadd.f32 %v3771, %v4063
  %v4100 = vadd.f32 %v3772, %v4065
  %v4101 = vadd.f32 %v3773, %v4068
  %v4102 = vadd.f32 %v3774, %v4070
  %v4103 = vadd.f32 %v3775, %v4073
  %v4104 = vadd.f32 %v3776, %v4075
  %v4105 = vadd.f32 %v3777, %v4078
  %v4106 = vadd.f32 %v3778, %v4080
  %v4107 = vadd.f32 %v3779, %v4083
  %v4108 = vadd.f32 %v3780, %v4085
  %v4109 = vadd.f32 %v3781, %v4088
  %v4110 = vadd.f32 %v3782, %v4090
  %v4111 = vadd.f32 %v3783, %v4093
  %v4112 = vadd.f32 %v3784, %v4095
  %v4113 = vsel %vm217, %v4097, 0.0
  %4114 = vadd.xlane.f32.xlu0 %v4113
  %v4115 = vpop.xlane.xlu0 %4114
  %v4116 = vsel %vm217, %v4098, 0.0
  %4117 = vadd.xlane.f32.xlu0 %v4116
  %v4118 = vpop.xlane.xlu0 %4117
  %v4119 = vsel %vm217, %v4099, 0.0
  %4120 = vadd.xlane.f32.xlu0 %v4119
  %v4121 = vpop.xlane.xlu0 %4120
  %v4122 = vsel %vm217, %v4100, 0.0
  %4123 = vadd.xlane.f32.xlu0 %v4122
  %v4124 = vpop.xlane.xlu0 %4123
  %v4125 = vsel %vm217, %v4101, 0.0
  %4126 = vadd.xlane.f32.xlu0 %v4125
  %v4127 = vpop.xlane.xlu0 %4126
  %v4128 = vsel %vm217, %v4102, 0.0
  %4129 = vadd.xlane.f32.xlu0 %v4128
  %v4130 = vpop.xlane.xlu0 %4129
  %v4131 = vsel %vm217, %v4103, 0.0
  %4132 = vadd.xlane.f32.xlu0 %v4131
  %v4133 = vpop.xlane.xlu0 %4132
  %v4134 = vsel %vm217, %v4104, 0.0
  %4135 = vadd.xlane.f32.xlu0 %v4134
  %v4136 = vpop.xlane.xlu0 %4135
  %v4137 = vsel %vm217, %v4105, 0.0
  %4138 = vadd.xlane.f32.xlu0 %v4137
  %v4139 = vpop.xlane.xlu0 %4138
  %v4140 = vsel %vm217, %v4106, 0.0
  %4141 = vadd.xlane.f32.xlu0 %v4140
  %v4142 = vpop.xlane.xlu0 %4141
  %v4143 = vsel %vm217, %v4107, 0.0
  %4144 = vadd.xlane.f32.xlu0 %v4143
  %v4145 = vpop.xlane.xlu0 %4144
  %v4146 = vsel %vm217, %v4108, 0.0
  %4147 = vadd.xlane.f32.xlu0 %v4146
  %v4148 = vpop.xlane.xlu0 %4147
  %v4149 = vsel %vm217, %v4109, 0.0
  %4150 = vadd.xlane.f32.xlu0 %v4149
  %v4151 = vpop.xlane.xlu0 %4150
  %v4152 = vsel %vm217, %v4110, 0.0
  %4153 = vadd.xlane.f32.xlu0 %v4152
  %v4154 = vpop.xlane.xlu0 %4153
  %v4155 = vsel %vm217, %v4111, 0.0
  %4156 = vadd.xlane.f32.xlu0 %v4155
  %v4157 = vpop.xlane.xlu0 %4156
  %v4158 = vsel %vm217, %v4112, 0.0
  %4159 = vadd.xlane.f32.xlu0 %v4158
  %v4160 = vpop.xlane.xlu0 %4159
  %v4161 = vmul.f32 %v4115, %v1340
  %v4162 = vmul.f32 %v4118, %v1340
  %v4163 = vmul.f32 %v4121, %v1340
  %v4164 = vmul.f32 %v4124, %v1340
  %v4165 = vmul.f32 %v4127, %v1340
  %v4166 = vmul.f32 %v4130, %v1340
  %v4167 = vmul.f32 %v4133, %v1340
  %v4168 = vmul.f32 %v4136, %v1340
  %v4169 = vmul.f32 %v4139, %v1340
  %v4170 = vmul.f32 %v4142, %v1340
  %v4171 = vmul.f32 %v4145, %v1340
  %v4172 = vmul.f32 %v4148, %v1340
  %v4173 = vmul.f32 %v4151, %v1340
  %v4174 = vmul.f32 %v4154, %v1340
  %v4175 = vmul.f32 %v4157, %v1340
  %v4176 = vmul.f32 %v4160, %v1340
  %v4177 = vsub.f32 %v4097, %v4161
  %v4178 = vsub.f32 %v4098, %v4162
  %v4179 = vsub.f32 %v4099, %v4163
  %v4180 = vsub.f32 %v4100, %v4164
  %v4181 = vsub.f32 %v4101, %v4165
  %v4182 = vsub.f32 %v4102, %v4166
  %v4183 = vsub.f32 %v4103, %v4167
  %v4184 = vsub.f32 %v4104, %v4168
  %v4185 = vsub.f32 %v4105, %v4169
  %v4186 = vsub.f32 %v4106, %v4170
  %v4187 = vsub.f32 %v4107, %v4171
  %v4188 = vsub.f32 %v4108, %v4172
  %v4189 = vsub.f32 %v4109, %v4173
  %v4190 = vsub.f32 %v4110, %v4174
  %v4191 = vsub.f32 %v4111, %v4175
  %v4192 = vsub.f32 %v4112, %v4176
  %v4193 = vmul.f32 %v4177, %v4177
  %v4194 = vmul.f32 %v4178, %v4178
  %v4195 = vmul.f32 %v4179, %v4179
  %v4196 = vmul.f32 %v4180, %v4180
  %v4197 = vmul.f32 %v4181, %v4181
  %v4198 = vmul.f32 %v4182, %v4182
  %v4199 = vmul.f32 %v4183, %v4183
  %v4200 = vmul.f32 %v4184, %v4184
  %v4201 = vmul.f32 %v4185, %v4185
  %v4202 = vmul.f32 %v4186, %v4186
  %v4203 = vmul.f32 %v4187, %v4187
  %v4204 = vmul.f32 %v4188, %v4188
  %v4205 = vmul.f32 %v4189, %v4189
  %v4206 = vmul.f32 %v4190, %v4190
  %v4207 = vmul.f32 %v4191, %v4191
  %v4208 = vmul.f32 %v4192, %v4192
  %v4209 = vsel %vm217, %v4193, 0.0
  %4210 = vadd.xlane.f32.xlu0 %v4209
  %v4211 = vpop.xlane.xlu0 %4210
  %v4212 = vsel %vm217, %v4194, 0.0
  %4213 = vadd.xlane.f32.xlu0 %v4212
  %v4214 = vpop.xlane.xlu0 %4213
  %v4215 = vsel %vm217, %v4195, 0.0
  %4216 = vadd.xlane.f32.xlu0 %v4215
  %v4217 = vpop.xlane.xlu0 %4216
  %v4218 = vsel %vm217, %v4196, 0.0
  %4219 = vadd.xlane.f32.xlu0 %v4218
  %v4220 = vpop.xlane.xlu0 %4219
  %v4221 = vsel %vm217, %v4197, 0.0
  %4222 = vadd.xlane.f32.xlu0 %v4221
  %v4223 = vpop.xlane.xlu0 %4222
  %v4224 = vsel %vm217, %v4198, 0.0
  %4225 = vadd.xlane.f32.xlu0 %v4224
  %v4226 = vpop.xlane.xlu0 %4225
  %v4227 = vsel %vm217, %v4199, 0.0
  %4228 = vadd.xlane.f32.xlu0 %v4227
  %v4229 = vpop.xlane.xlu0 %4228
  %v4230 = vsel %vm217, %v4200, 0.0
  %4231 = vadd.xlane.f32.xlu0 %v4230
  %v4232 = vpop.xlane.xlu0 %4231
  %v4233 = vsel %vm217, %v4201, 0.0
  %4234 = vadd.xlane.f32.xlu0 %v4233
  %v4235 = vpop.xlane.xlu0 %4234
  %v4236 = vsel %vm217, %v4202, 0.0
  %4237 = vadd.xlane.f32.xlu0 %v4236
  %v4238 = vpop.xlane.xlu0 %4237
  %v4239 = vsel %vm217, %v4203, 0.0
  %4240 = vadd.xlane.f32.xlu0 %v4239
  %v4241 = vpop.xlane.xlu0 %4240
  %v4242 = vsel %vm217, %v4204, 0.0
  %4243 = vadd.xlane.f32.xlu0 %v4242
  %v4244 = vpop.xlane.xlu0 %4243
  %v4245 = vsel %vm217, %v4205, 0.0
  %4246 = vadd.xlane.f32.xlu0 %v4245
  %v4247 = vpop.xlane.xlu0 %4246
  %v4248 = vsel %vm217, %v4206, 0.0
  %4249 = vadd.xlane.f32.xlu0 %v4248
  %v4250 = vpop.xlane.xlu0 %4249
  %v4251 = vsel %vm217, %v4207, 0.0
  %4252 = vadd.xlane.f32.xlu0 %v4251
  %v4253 = vpop.xlane.xlu0 %4252
  %v4254 = vsel %vm217, %v4208, 0.0
  %4255 = vadd.xlane.f32.xlu0 %v4254
  %v4256 = vpop.xlane.xlu0 %4255
  %v4257 = vmul.f32 %v4211, %v1340
  %v4258 = vmul.f32 %v4214, %v1340
  %v4259 = vmul.f32 %v4217, %v1340
  %v4260 = vmul.f32 %v4220, %v1340
  %v4261 = vmul.f32 %v4223, %v1340
  %v4262 = vmul.f32 %v4226, %v1340
  %v4263 = vmul.f32 %v4229, %v1340
  %v4264 = vmul.f32 %v4232, %v1340
  %v4265 = vmul.f32 %v4235, %v1340
  %v4266 = vmul.f32 %v4238, %v1340
  %v4267 = vmul.f32 %v4241, %v1340
  %v4268 = vmul.f32 %v4244, %v1340
  %v4269 = vmul.f32 %v4247, %v1340
  %v4270 = vmul.f32 %v4250, %v1340
  %v4271 = vmul.f32 %v4253, %v1340
  %v4272 = vmul.f32 %v4256, %v1340
  %v4273 = vadd.f32 %v4257, 1e-05
  %v4274 = vadd.f32 %v4258, 1e-05
  %v4275 = vadd.f32 %v4259, 1e-05
  %v4276 = vadd.f32 %v4260, 1e-05
  %v4277 = vadd.f32 %v4261, 1e-05
  %v4278 = vadd.f32 %v4262, 1e-05
  %v4279 = vadd.f32 %v4263, 1e-05
  %v4280 = vadd.f32 %v4264, 1e-05
  %v4281 = vadd.f32 %v4265, 1e-05
  %v4282 = vadd.f32 %v4266, 1e-05
  %v4283 = vadd.f32 %v4267, 1e-05
  %v4284 = vadd.f32 %v4268, 1e-05
  %v4285 = vadd.f32 %v4269, 1e-05
  %v4286 = vadd.f32 %v4270, 1e-05
  %v4287 = vadd.f32 %v4271, 1e-05
  %v4288 = vadd.f32 %v4272, 1e-05
  %v4289 = vrsqrt.pop %v4273
  %v4290 = vmul.f32 %v4289, %v4273
  %v4291 = vmul.f32 %v4290, %v4289
  %v4292 = vmul.f32 0.5, %v4291
  %v4293 = vsub.f32 1.5, %v4292
  %v4294 = vmul.f32 %v4289, %v4293
  %vm4295 = vweird.f32 %v4273
  %vm4296 = vweird.f32 %v4289
  %vm4297 = vmor %vm4295, %vm4296
  %v4298 = vsel %vm4297, %v4289, %v4294
  %v4299 = vrsqrt.pop %v4274
  %v4300 = vmul.f32 %v4299, %v4274
  %v4301 = vmul.f32 %v4300, %v4299
  %v4302 = vmul.f32 0.5, %v4301
  %v4303 = vsub.f32 1.5, %v4302
  %v4304 = vmul.f32 %v4299, %v4303
  %vm4305 = vweird.f32 %v4274
  %vm4306 = vweird.f32 %v4299
  %vm4307 = vmor %vm4305, %vm4306
  %v4308 = vsel %vm4307, %v4299, %v4304
  %v4309 = vrsqrt.pop %v4275
  %v4310 = vmul.f32 %v4309, %v4275
  %v4311 = vmul.f32 %v4310, %v4309
  %v4312 = vmul.f32 0.5, %v4311
  %v4313 = vsub.f32 1.5, %v4312
  %v4314 = vmul.f32 %v4309, %v4313
  %vm4315 = vweird.f32 %v4275
  %vm4316 = vweird.f32 %v4309
  %vm4317 = vmor %vm4315, %vm4316
  %v4318 = vsel %vm4317, %v4309, %v4314
  %v4319 = vrsqrt.pop %v4276
  %v4320 = vmul.f32 %v4319, %v4276
  %v4321 = vmul.f32 %v4320, %v4319
  %v4322 = vmul.f32 0.5, %v4321
  %v4323 = vsub.f32 1.5, %v4322
  %v4324 = vmul.f32 %v4319, %v4323
  %vm4325 = vweird.f32 %v4276
  %vm4326 = vweird.f32 %v4319
  %vm4327 = vmor %vm4325, %vm4326
  %v4328 = vsel %vm4327, %v4319, %v4324
  %v4329 = vrsqrt.pop %v4277
  %v4330 = vmul.f32 %v4329, %v4277
  %v4331 = vmul.f32 %v4330, %v4329
  %v4332 = vmul.f32 0.5, %v4331
  %v4333 = vsub.f32 1.5, %v4332
  %v4334 = vmul.f32 %v4329, %v4333
  %vm4335 = vweird.f32 %v4277
  %vm4336 = vweird.f32 %v4329
  %vm4337 = vmor %vm4335, %vm4336
  %v4338 = vsel %vm4337, %v4329, %v4334
  %v4339 = vrsqrt.pop %v4278
  %v4340 = vmul.f32 %v4339, %v4278
  %v4341 = vmul.f32 %v4340, %v4339
  %v4342 = vmul.f32 0.5, %v4341
  %v4343 = vsub.f32 1.5, %v4342
  %v4344 = vmul.f32 %v4339, %v4343
  %vm4345 = vweird.f32 %v4278
  %vm4346 = vweird.f32 %v4339
  %vm4347 = vmor %vm4345, %vm4346
  %v4348 = vsel %vm4347, %v4339, %v4344
  %v4349 = vrsqrt.pop %v4279
  %v4350 = vmul.f32 %v4349, %v4279
  %v4351 = vmul.f32 %v4350, %v4349
  %v4352 = vmul.f32 0.5, %v4351
  %v4353 = vsub.f32 1.5, %v4352
  %v4354 = vmul.f32 %v4349, %v4353
  %vm4355 = vweird.f32 %v4279
  %vm4356 = vweird.f32 %v4349
  %vm4357 = vmor %vm4355, %vm4356
  %v4358 = vsel %vm4357, %v4349, %v4354
  %v4359 = vrsqrt.pop %v4280
  %v4360 = vmul.f32 %v4359, %v4280
  %v4361 = vmul.f32 %v4360, %v4359
  %v4362 = vmul.f32 0.5, %v4361
  %v4363 = vsub.f32 1.5, %v4362
  %v4364 = vmul.f32 %v4359, %v4363
  %vm4365 = vweird.f32 %v4280
  %vm4366 = vweird.f32 %v4359
  %vm4367 = vmor %vm4365, %vm4366
  %v4368 = vsel %vm4367, %v4359, %v4364
  %v4369 = vrsqrt.pop %v4281
  %v4370 = vmul.f32 %v4369, %v4281
  %v4371 = vmul.f32 %v4370, %v4369
  %v4372 = vmul.f32 0.5, %v4371
  %v4373 = vsub.f32 1.5, %v4372
  %v4374 = vmul.f32 %v4369, %v4373
  %vm4375 = vweird.f32 %v4281
  %vm4376 = vweird.f32 %v4369
  %vm4377 = vmor %vm4375, %vm4376
  %v4378 = vsel %vm4377, %v4369, %v4374
  %v4379 = vrsqrt.pop %v4282
  %v4380 = vmul.f32 %v4379, %v4282
  %v4381 = vmul.f32 %v4380, %v4379
  %v4382 = vmul.f32 0.5, %v4381
  %v4383 = vsub.f32 1.5, %v4382
  %v4384 = vmul.f32 %v4379, %v4383
  %vm4385 = vweird.f32 %v4282
  %vm4386 = vweird.f32 %v4379
  %vm4387 = vmor %vm4385, %vm4386
  %v4388 = vsel %vm4387, %v4379, %v4384
  %v4389 = vrsqrt.pop %v4283
  %v4390 = vmul.f32 %v4389, %v4283
  %v4391 = vmul.f32 %v4390, %v4389
  %v4392 = vmul.f32 0.5, %v4391
  %v4393 = vsub.f32 1.5, %v4392
  %v4394 = vmul.f32 %v4389, %v4393
  %vm4395 = vweird.f32 %v4283
  %vm4396 = vweird.f32 %v4389
  %vm4397 = vmor %vm4395, %vm4396
  %v4398 = vsel %vm4397, %v4389, %v4394
  %v4399 = vrsqrt.pop %v4284
  %v4400 = vmul.f32 %v4399, %v4284
  %v4401 = vmul.f32 %v4400, %v4399
  %v4402 = vmul.f32 0.5, %v4401
  %v4403 = vsub.f32 1.5, %v4402
  %v4404 = vmul.f32 %v4399, %v4403
  %vm4405 = vweird.f32 %v4284
  %vm4406 = vweird.f32 %v4399
  %vm4407 = vmor %vm4405, %vm4406
  %v4408 = vsel %vm4407, %v4399, %v4404
  %v4409 = vrsqrt.pop %v4285
  %v4410 = vmul.f32 %v4409, %v4285
  %v4411 = vmul.f32 %v4410, %v4409
  %v4412 = vmul.f32 0.5, %v4411
  %v4413 = vsub.f32 1.5, %v4412
  %v4414 = vmul.f32 %v4409, %v4413
  %vm4415 = vweird.f32 %v4285
  %vm4416 = vweird.f32 %v4409
  %vm4417 = vmor %vm4415, %vm4416
  %v4418 = vsel %vm4417, %v4409, %v4414
  %v4419 = vrsqrt.pop %v4286
  %v4420 = vmul.f32 %v4419, %v4286
  %v4421 = vmul.f32 %v4420, %v4419
  %v4422 = vmul.f32 0.5, %v4421
  %v4423 = vsub.f32 1.5, %v4422
  %v4424 = vmul.f32 %v4419, %v4423
  %vm4425 = vweird.f32 %v4286
  %vm4426 = vweird.f32 %v4419
  %vm4427 = vmor %vm4425, %vm4426
  %v4428 = vsel %vm4427, %v4419, %v4424
  %v4429 = vrsqrt.pop %v4287
  %v4430 = vmul.f32 %v4429, %v4287
  %v4431 = vmul.f32 %v4430, %v4429
  %v4432 = vmul.f32 0.5, %v4431
  %v4433 = vsub.f32 1.5, %v4432
  %v4434 = vmul.f32 %v4429, %v4433
  %vm4435 = vweird.f32 %v4287
  %vm4436 = vweird.f32 %v4429
  %vm4437 = vmor %vm4435, %vm4436
  %v4438 = vsel %vm4437, %v4429, %v4434
  %v4439 = vrsqrt.pop %v4288
  %v4440 = vmul.f32 %v4439, %v4288
  %v4441 = vmul.f32 %v4440, %v4439
  %v4442 = vmul.f32 0.5, %v4441
  %v4443 = vsub.f32 1.5, %v4442
  %v4444 = vmul.f32 %v4439, %v4443
  %vm4445 = vweird.f32 %v4288
  %vm4446 = vweird.f32 %v4439
  %vm4447 = vmor %vm4445, %vm4446
  %v4448 = vsel %vm4447, %v4439, %v4444
  %v4449 = vmul.f32 %v4177, %v4298
  %v4450 = vmul.f32 %v4178, %v4308
  %v4451 = vmul.f32 %v4179, %v4318
  %v4452 = vmul.f32 %v4180, %v4328
  %v4453 = vmul.f32 %v4181, %v4338
  %v4454 = vmul.f32 %v4182, %v4348
  %v4455 = vmul.f32 %v4183, %v4358
  %v4456 = vmul.f32 %v4184, %v4368
  %v4457 = vmul.f32 %v4185, %v4378
  %v4458 = vmul.f32 %v4186, %v4388
  %v4459 = vmul.f32 %v4187, %v4398
  %v4460 = vmul.f32 %v4188, %v4408
  %v4461 = vmul.f32 %v4189, %v4418
  %v4462 = vmul.f32 %v4190, %v4428
  %v4463 = vmul.f32 %v4191, %v4438
  %v4464 = vmul.f32 %v4192, %v4448
  %v4465 = vperm.slane %v2412, 5
  %v4466 = vmul.f32 %v4449, %v4465
  %v4467 = vmul.f32 %v4450, %v4465
  %v4468 = vmul.f32 %v4451, %v4465
  %v4469 = vmul.f32 %v4452, %v4465
  %v4470 = vmul.f32 %v4453, %v4465
  %v4471 = vmul.f32 %v4454, %v4465
  %v4472 = vmul.f32 %v4455, %v4465
  %v4473 = vmul.f32 %v4456, %v4465
  %v4474 = vmul.f32 %v4457, %v4465
  %v4475 = vmul.f32 %v4458, %v4465
  %v4476 = vmul.f32 %v4459, %v4465
  %v4477 = vmul.f32 %v4460, %v4465
  %v4478 = vmul.f32 %v4461, %v4465
  %v4479 = vmul.f32 %v4462, %v4465
  %v4480 = vmul.f32 %v4463, %v4465
  %v4481 = vmul.f32 %v4464, %v4465
  %v4482 = vperm.slane %v2412, 6
  %v4483 = vadd.f32 %v4466, %v4482
  %v4484 = vadd.f32 %v4467, %v4482
  %v4485 = vadd.f32 %v4468, %v4482
  %v4486 = vadd.f32 %v4469, %v4482
  %v4487 = vadd.f32 %v4470, %v4482
  %v4488 = vadd.f32 %v4471, %v4482
  %v4489 = vadd.f32 %v4472, %v4482
  %v4490 = vadd.f32 %v4473, %v4482
  %v4491 = vadd.f32 %v4474, %v4482
  %v4492 = vadd.f32 %v4475, %v4482
  %v4493 = vadd.f32 %v4476, %v4482
  %v4494 = vadd.f32 %v4477, %v4482
  %v4495 = vadd.f32 %v4478, %v4482
  %v4496 = vadd.f32 %v4479, %v4482
  %v4497 = vadd.f32 %v4480, %v4482
  %v4498 = vadd.f32 %v4481, %v4482
  %v4499 = vld [vmem:[%s1 + $0xa8] sm:$0x1]
  %v4500 = vld [vmem:[%s1 + $0xa9] sm:$0x1]
  %v4501 = vsel %vm217, %v4483, 0.0
  %4502 = vadd.xlane.f32.xlu0 %v4501
  %v4503 = vpop.xlane.xlu0 %4502
  %v4504 = vsel %vm217, %v4484, 0.0
  %4505 = vadd.xlane.f32.xlu0 %v4504
  %v4506 = vpop.xlane.xlu0 %4505
  %v4507 = vsel %vm217, %v4485, 0.0
  %4508 = vadd.xlane.f32.xlu0 %v4507
  %v4509 = vpop.xlane.xlu0 %4508
  %v4510 = vsel %vm217, %v4486, 0.0
  %4511 = vadd.xlane.f32.xlu0 %v4510
  %v4512 = vpop.xlane.xlu0 %4511
  %v4513 = vsel %vm217, %v4487, 0.0
  %4514 = vadd.xlane.f32.xlu0 %v4513
  %v4515 = vpop.xlane.xlu0 %4514
  %v4516 = vsel %vm217, %v4488, 0.0
  %4517 = vadd.xlane.f32.xlu0 %v4516
  %v4518 = vpop.xlane.xlu0 %4517
  %v4519 = vsel %vm217, %v4489, 0.0
  %4520 = vadd.xlane.f32.xlu0 %v4519
  %v4521 = vpop.xlane.xlu0 %4520
  %v4522 = vsel %vm217, %v4490, 0.0
  %4523 = vadd.xlane.f32.xlu0 %v4522
  %v4524 = vpop.xlane.xlu0 %4523
  %v4525 = vsel %vm217, %v4491, 0.0
  %4526 = vadd.xlane.f32.xlu0 %v4525
  %v4527 = vpop.xlane.xlu0 %4526
  %v4528 = vsel %vm217, %v4492, 0.0
  %4529 = vadd.xlane.f32.xlu0 %v4528
  %v4530 = vpop.xlane.xlu0 %4529
  %v4531 = vsel %vm217, %v4493, 0.0
  %4532 = vadd.xlane.f32.xlu0 %v4531
  %v4533 = vpop.xlane.xlu0 %4532
  %v4534 = vsel %vm217, %v4494, 0.0
  %4535 = vadd.xlane.f32.xlu0 %v4534
  %v4536 = vpop.xlane.xlu0 %4535
  %v4537 = vsel %vm217, %v4495, 0.0
  %4538 = vadd.xlane.f32.xlu0 %v4537
  %v4539 = vpop.xlane.xlu0 %4538
  %v4540 = vsel %vm217, %v4496, 0.0
  %4541 = vadd.xlane.f32.xlu0 %v4540
  %v4542 = vpop.xlane.xlu0 %4541
  %v4543 = vsel %vm217, %v4497, 0.0
  %4544 = vadd.xlane.f32.xlu0 %v4543
  %v4545 = vpop.xlane.xlu0 %4544
  %v4546 = vsel %vm217, %v4498, 0.0
  %4547 = vadd.xlane.f32.xlu0 %v4546
  %v4548 = vpop.xlane.xlu0 %4547
  %v4549 = vmul.f32 %v4503, %v1340
  %v4550 = vmul.f32 %v4506, %v1340
  %v4551 = vmul.f32 %v4509, %v1340
  %v4552 = vmul.f32 %v4512, %v1340
  %v4553 = vmul.f32 %v4515, %v1340
  %v4554 = vmul.f32 %v4518, %v1340
  %v4555 = vmul.f32 %v4521, %v1340
  %v4556 = vmul.f32 %v4524, %v1340
  %v4557 = vmul.f32 %v4527, %v1340
  %v4558 = vmul.f32 %v4530, %v1340
  %v4559 = vmul.f32 %v4533, %v1340
  %v4560 = vmul.f32 %v4536, %v1340
  %v4561 = vmul.f32 %v4539, %v1340
  %v4562 = vmul.f32 %v4542, %v1340
  %v4563 = vmul.f32 %v4545, %v1340
  %v4564 = vmul.f32 %v4548, %v1340
  %v4565 = vsub.f32 %v4483, %v4549
  %v4566 = vsub.f32 %v4484, %v4550
  %v4567 = vsub.f32 %v4485, %v4551
  %v4568 = vsub.f32 %v4486, %v4552
  %v4569 = vsub.f32 %v4487, %v4553
  %v4570 = vsub.f32 %v4488, %v4554
  %v4571 = vsub.f32 %v4489, %v4555
  %v4572 = vsub.f32 %v4490, %v4556
  %v4573 = vsub.f32 %v4491, %v4557
  %v4574 = vsub.f32 %v4492, %v4558
  %v4575 = vsub.f32 %v4493, %v4559
  %v4576 = vsub.f32 %v4494, %v4560
  %v4577 = vsub.f32 %v4495, %v4561
  %v4578 = vsub.f32 %v4496, %v4562
  %v4579 = vsub.f32 %v4497, %v4563
  %v4580 = vsub.f32 %v4498, %v4564
  %v4581 = vmul.f32 %v4565, %v4565
  %v4582 = vmul.f32 %v4566, %v4566
  %v4583 = vmul.f32 %v4567, %v4567
  %v4584 = vmul.f32 %v4568, %v4568
  %v4585 = vmul.f32 %v4569, %v4569
  %v4586 = vmul.f32 %v4570, %v4570
  %v4587 = vmul.f32 %v4571, %v4571
  %v4588 = vmul.f32 %v4572, %v4572
  %v4589 = vmul.f32 %v4573, %v4573
  %v4590 = vmul.f32 %v4574, %v4574
  %v4591 = vmul.f32 %v4575, %v4575
  %v4592 = vmul.f32 %v4576, %v4576
  %v4593 = vmul.f32 %v4577, %v4577
  %v4594 = vmul.f32 %v4578, %v4578
  %v4595 = vmul.f32 %v4579, %v4579
  %v4596 = vmul.f32 %v4580, %v4580
  %v4597 = vsel %vm217, %v4581, 0.0
  %4598 = vadd.xlane.f32.xlu0 %v4597
  %v4599 = vpop.xlane.xlu0 %4598
  %v4600 = vsel %vm217, %v4582, 0.0
  %4601 = vadd.xlane.f32.xlu0 %v4600
  %v4602 = vpop.xlane.xlu0 %4601
  %v4603 = vsel %vm217, %v4583, 0.0
  %4604 = vadd.xlane.f32.xlu0 %v4603
  %v4605 = vpop.xlane.xlu0 %4604
  %v4606 = vsel %vm217, %v4584, 0.0
  %4607 = vadd.xlane.f32.xlu0 %v4606
  %v4608 = vpop.xlane.xlu0 %4607
  %v4609 = vsel %vm217, %v4585, 0.0
  %4610 = vadd.xlane.f32.xlu0 %v4609
  %v4611 = vpop.xlane.xlu0 %4610
  %v4612 = vsel %vm217, %v4586, 0.0
  %4613 = vadd.xlane.f32.xlu0 %v4612
  %v4614 = vpop.xlane.xlu0 %4613
  %v4615 = vsel %vm217, %v4587, 0.0
  %4616 = vadd.xlane.f32.xlu0 %v4615
  %v4617 = vpop.xlane.xlu0 %4616
  %v4618 = vsel %vm217, %v4588, 0.0
  %4619 = vadd.xlane.f32.xlu0 %v4618
  %v4620 = vpop.xlane.xlu0 %4619
  %v4621 = vsel %vm217, %v4589, 0.0
  %4622 = vadd.xlane.f32.xlu0 %v4621
  %v4623 = vpop.xlane.xlu0 %4622
  %v4624 = vsel %vm217, %v4590, 0.0
  %4625 = vadd.xlane.f32.xlu0 %v4624
  %v4626 = vpop.xlane.xlu0 %4625
  %v4627 = vsel %vm217, %v4591, 0.0
  %4628 = vadd.xlane.f32.xlu0 %v4627
  %v4629 = vpop.xlane.xlu0 %4628
  %v4630 = vsel %vm217, %v4592, 0.0
  %4631 = vadd.xlane.f32.xlu0 %v4630
  %v4632 = vpop.xlane.xlu0 %4631
  %v4633 = vsel %vm217, %v4593, 0.0
  %4634 = vadd.xlane.f32.xlu0 %v4633
  %v4635 = vpop.xlane.xlu0 %4634
  %v4636 = vsel %vm217, %v4594, 0.0
  %4637 = vadd.xlane.f32.xlu0 %v4636
  %v4638 = vpop.xlane.xlu0 %4637
  %v4639 = vsel %vm217, %v4595, 0.0
  %4640 = vadd.xlane.f32.xlu0 %v4639
  %v4641 = vpop.xlane.xlu0 %4640
  %v4642 = vsel %vm217, %v4596, 0.0
  %4643 = vadd.xlane.f32.xlu0 %v4642
  %v4644 = vpop.xlane.xlu0 %4643
  %v4645 = vmul.f32 %v4599, %v1340
  %v4646 = vmul.f32 %v4602, %v1340
  %v4647 = vmul.f32 %v4605, %v1340
  %v4648 = vmul.f32 %v4608, %v1340
  %v4649 = vmul.f32 %v4611, %v1340
  %v4650 = vmul.f32 %v4614, %v1340
  %v4651 = vmul.f32 %v4617, %v1340
  %v4652 = vmul.f32 %v4620, %v1340
  %v4653 = vmul.f32 %v4623, %v1340
  %v4654 = vmul.f32 %v4626, %v1340
  %v4655 = vmul.f32 %v4629, %v1340
  %v4656 = vmul.f32 %v4632, %v1340
  %v4657 = vmul.f32 %v4635, %v1340
  %v4658 = vmul.f32 %v4638, %v1340
  %v4659 = vmul.f32 %v4641, %v1340
  %v4660 = vmul.f32 %v4644, %v1340
  %v4661 = vadd.f32 %v4645, 1e-05
  %v4662 = vadd.f32 %v4646, 1e-05
  %v4663 = vadd.f32 %v4647, 1e-05
  %v4664 = vadd.f32 %v4648, 1e-05
  %v4665 = vadd.f32 %v4649, 1e-05
  %v4666 = vadd.f32 %v4650, 1e-05
  %v4667 = vadd.f32 %v4651, 1e-05
  %v4668 = vadd.f32 %v4652, 1e-05
  %v4669 = vadd.f32 %v4653, 1e-05
  %v4670 = vadd.f32 %v4654, 1e-05
  %v4671 = vadd.f32 %v4655, 1e-05
  %v4672 = vadd.f32 %v4656, 1e-05
  %v4673 = vadd.f32 %v4657, 1e-05
  %v4674 = vadd.f32 %v4658, 1e-05
  %v4675 = vadd.f32 %v4659, 1e-05
  %v4676 = vadd.f32 %v4660, 1e-05
  %v4677 = vrsqrt.pop %v4661
  %v4678 = vmul.f32 %v4677, %v4661
  %v4679 = vmul.f32 %v4678, %v4677
  %v4680 = vmul.f32 0.5, %v4679
  %v4681 = vsub.f32 1.5, %v4680
  %v4682 = vmul.f32 %v4677, %v4681
  %vm4683 = vweird.f32 %v4661
  %vm4684 = vweird.f32 %v4677
  %vm4685 = vmor %vm4683, %vm4684
  %v4686 = vsel %vm4685, %v4677, %v4682
  %v4687 = vrsqrt.pop %v4662
  %v4688 = vmul.f32 %v4687, %v4662
  %v4689 = vmul.f32 %v4688, %v4687
  %v4690 = vmul.f32 0.5, %v4689
  %v4691 = vsub.f32 1.5, %v4690
  %v4692 = vmul.f32 %v4687, %v4691
  %vm4693 = vweird.f32 %v4662
  %vm4694 = vweird.f32 %v4687
  %vm4695 = vmor %vm4693, %vm4694
  %v4696 = vsel %vm4695, %v4687, %v4692
  %v4697 = vrsqrt.pop %v4663
  %v4698 = vmul.f32 %v4697, %v4663
  %v4699 = vmul.f32 %v4698, %v4697
  %v4700 = vmul.f32 0.5, %v4699
  %v4701 = vsub.f32 1.5, %v4700
  %v4702 = vmul.f32 %v4697, %v4701
  %vm4703 = vweird.f32 %v4663
  %vm4704 = vweird.f32 %v4697
  %vm4705 = vmor %vm4703, %vm4704
  %v4706 = vsel %vm4705, %v4697, %v4702
  %v4707 = vrsqrt.pop %v4664
  %v4708 = vmul.f32 %v4707, %v4664
  %v4709 = vmul.f32 %v4708, %v4707
  %v4710 = vmul.f32 0.5, %v4709
  %v4711 = vsub.f32 1.5, %v4710
  %v4712 = vmul.f32 %v4707, %v4711
  %vm4713 = vweird.f32 %v4664
  %vm4714 = vweird.f32 %v4707
  %vm4715 = vmor %vm4713, %vm4714
  %v4716 = vsel %vm4715, %v4707, %v4712
  %v4717 = vrsqrt.pop %v4665
  %v4718 = vmul.f32 %v4717, %v4665
  %v4719 = vmul.f32 %v4718, %v4717
  %v4720 = vmul.f32 0.5, %v4719
  %v4721 = vsub.f32 1.5, %v4720
  %v4722 = vmul.f32 %v4717, %v4721
  %vm4723 = vweird.f32 %v4665
  %vm4724 = vweird.f32 %v4717
  %vm4725 = vmor %vm4723, %vm4724
  %v4726 = vsel %vm4725, %v4717, %v4722
  %v4727 = vrsqrt.pop %v4666
  %v4728 = vmul.f32 %v4727, %v4666
  %v4729 = vmul.f32 %v4728, %v4727
  %v4730 = vmul.f32 0.5, %v4729
  %v4731 = vsub.f32 1.5, %v4730
  %v4732 = vmul.f32 %v4727, %v4731
  %vm4733 = vweird.f32 %v4666
  %vm4734 = vweird.f32 %v4727
  %vm4735 = vmor %vm4733, %vm4734
  %v4736 = vsel %vm4735, %v4727, %v4732
  %v4737 = vrsqrt.pop %v4667
  %v4738 = vmul.f32 %v4737, %v4667
  %v4739 = vmul.f32 %v4738, %v4737
  %v4740 = vmul.f32 0.5, %v4739
  %v4741 = vsub.f32 1.5, %v4740
  %v4742 = vmul.f32 %v4737, %v4741
  %vm4743 = vweird.f32 %v4667
  %vm4744 = vweird.f32 %v4737
  %vm4745 = vmor %vm4743, %vm4744
  %v4746 = vsel %vm4745, %v4737, %v4742
  %v4747 = vrsqrt.pop %v4668
  %v4748 = vmul.f32 %v4747, %v4668
  %v4749 = vmul.f32 %v4748, %v4747
  %v4750 = vmul.f32 0.5, %v4749
  %v4751 = vsub.f32 1.5, %v4750
  %v4752 = vmul.f32 %v4747, %v4751
  %vm4753 = vweird.f32 %v4668
  %vm4754 = vweird.f32 %v4747
  %vm4755 = vmor %vm4753, %vm4754
  %v4756 = vsel %vm4755, %v4747, %v4752
  %v4757 = vrsqrt.pop %v4669
  %v4758 = vmul.f32 %v4757, %v4669
  %v4759 = vmul.f32 %v4758, %v4757
  %v4760 = vmul.f32 0.5, %v4759
  %v4761 = vsub.f32 1.5, %v4760
  %v4762 = vmul.f32 %v4757, %v4761
  %vm4763 = vweird.f32 %v4669
  %vm4764 = vweird.f32 %v4757
  %vm4765 = vmor %vm4763, %vm4764
  %v4766 = vsel %vm4765, %v4757, %v4762
  %v4767 = vrsqrt.pop %v4670
  %v4768 = vmul.f32 %v4767, %v4670
  %v4769 = vmul.f32 %v4768, %v4767
  %v4770 = vmul.f32 0.5, %v4769
  %v4771 = vsub.f32 1.5, %v4770
  %v4772 = vmul.f32 %v4767, %v4771
  %vm4773 = vweird.f32 %v4670
  %vm4774 = vweird.f32 %v4767
  %vm4775 = vmor %vm4773, %vm4774
  %v4776 = vsel %vm4775, %v4767, %v4772
  %v4777 = vrsqrt.pop %v4671
  %v4778 = vmul.f32 %v4777, %v4671
  %v4779 = vmul.f32 %v4778, %v4777
  %v4780 = vmul.f32 0.5, %v4779
  %v4781 = vsub.f32 1.5, %v4780
  %v4782 = vmul.f32 %v4777, %v4781
  %vm4783 = vweird.f32 %v4671
  %vm4784 = vweird.f32 %v4777
  %vm4785 = vmor %vm4783, %vm4784
  %v4786 = vsel %vm4785, %v4777, %v4782
  %v4787 = vrsqrt.pop %v4672
  %v4788 = vmul.f32 %v4787, %v4672
  %v4789 = vmul.f32 %v4788, %v4787
  %v4790 = vmul.f32 0.5, %v4789
  %v4791 = vsub.f32 1.5, %v4790
  %v4792 = vmul.f32 %v4787, %v4791
  %vm4793 = vweird.f32 %v4672
  %vm4794 = vweird.f32 %v4787
  %vm4795 = vmor %vm4793, %vm4794
  %v4796 = vsel %vm4795, %v4787, %v4792
  %v4797 = vrsqrt.pop %v4673
  %v4798 = vmul.f32 %v4797, %v4673
  %v4799 = vmul.f32 %v4798, %v4797
  %v4800 = vmul.f32 0.5, %v4799
  %v4801 = vsub.f32 1.5, %v4800
  %v4802 = vmul.f32 %v4797, %v4801
  %vm4803 = vweird.f32 %v4673
  %vm4804 = vweird.f32 %v4797
  %vm4805 = vmor %vm4803, %vm4804
  %v4806 = vsel %vm4805, %v4797, %v4802
  %v4807 = vrsqrt.pop %v4674
  %v4808 = vmul.f32 %v4807, %v4674
  %v4809 = vmul.f32 %v4808, %v4807
  %v4810 = vmul.f32 0.5, %v4809
  %v4811 = vsub.f32 1.5, %v4810
  %v4812 = vmul.f32 %v4807, %v4811
  %vm4813 = vweird.f32 %v4674
  %vm4814 = vweird.f32 %v4807
  %vm4815 = vmor %vm4813, %vm4814
  %v4816 = vsel %vm4815, %v4807, %v4812
  %v4817 = vrsqrt.pop %v4675
  %v4818 = vmul.f32 %v4817, %v4675
  %v4819 = vmul.f32 %v4818, %v4817
  %v4820 = vmul.f32 0.5, %v4819
  %v4821 = vsub.f32 1.5, %v4820
  %v4822 = vmul.f32 %v4817, %v4821
  %vm4823 = vweird.f32 %v4675
  %vm4824 = vweird.f32 %v4817
  %vm4825 = vmor %vm4823, %vm4824
  %v4826 = vsel %vm4825, %v4817, %v4822
  %v4827 = vrsqrt.pop %v4676
  %v4828 = vmul.f32 %v4827, %v4676
  %v4829 = vmul.f32 %v4828, %v4827
  %v4830 = vmul.f32 0.5, %v4829
  %v4831 = vsub.f32 1.5, %v4830
  %v4832 = vmul.f32 %v4827, %v4831
  %vm4833 = vweird.f32 %v4676
  %vm4834 = vweird.f32 %v4827
  %vm4835 = vmor %vm4833, %vm4834
  %v4836 = vsel %vm4835, %v4827, %v4832
  %v4837 = vmul.f32 %v4565, %v4686
  %v4838 = vmul.f32 %v4566, %v4696
  %v4839 = vmul.f32 %v4567, %v4706
  %v4840 = vmul.f32 %v4568, %v4716
  %v4841 = vmul.f32 %v4569, %v4726
  %v4842 = vmul.f32 %v4570, %v4736
  %v4843 = vmul.f32 %v4571, %v4746
  %v4844 = vmul.f32 %v4572, %v4756
  %v4845 = vmul.f32 %v4573, %v4766
  %v4846 = vmul.f32 %v4574, %v4776
  %v4847 = vmul.f32 %v4575, %v4786
  %v4848 = vmul.f32 %v4576, %v4796
  %v4849 = vmul.f32 %v4577, %v4806
  %v4850 = vmul.f32 %v4578, %v4816
  %v4851 = vmul.f32 %v4579, %v4826
  %v4852 = vmul.f32 %v4580, %v4836
  %v4853 = vperm.slane %v4499, 0
  %v4854 = vmul.f32 %v4837, %v4853
  %v4855 = vmul.f32 %v4838, %v4853
  %v4856 = vmul.f32 %v4839, %v4853
  %v4857 = vmul.f32 %v4840, %v4853
  %v4858 = vmul.f32 %v4841, %v4853
  %v4859 = vmul.f32 %v4842, %v4853
  %v4860 = vmul.f32 %v4843, %v4853
  %v4861 = vmul.f32 %v4844, %v4853
  %v4862 = vmul.f32 %v4845, %v4853
  %v4863 = vmul.f32 %v4846, %v4853
  %v4864 = vmul.f32 %v4847, %v4853
  %v4865 = vmul.f32 %v4848, %v4853
  %v4866 = vmul.f32 %v4849, %v4853
  %v4867 = vmul.f32 %v4850, %v4853
  %v4868 = vmul.f32 %v4851, %v4853
  %v4869 = vmul.f32 %v4852, %v4853
  %v4870 = vperm.slane %v4500, 0
  %v4871 = vadd.f32 %v4854, %v4870
  %v4872 = vadd.f32 %v4855, %v4870
  %v4873 = vadd.f32 %v4856, %v4870
  %v4874 = vadd.f32 %v4857, %v4870
  %v4875 = vadd.f32 %v4858, %v4870
  %v4876 = vadd.f32 %v4859, %v4870
  %v4877 = vadd.f32 %v4860, %v4870
  %v4878 = vadd.f32 %v4861, %v4870
  %v4879 = vadd.f32 %v4862, %v4870
  %v4880 = vadd.f32 %v4863, %v4870
  %v4881 = vadd.f32 %v4864, %v4870
  %v4882 = vadd.f32 %v4865, %v4870
  %v4883 = vadd.f32 %v4866, %v4870
  %v4884 = vadd.f32 %v4867, %v4870
  %v4885 = vadd.f32 %v4868, %v4870
  %v4886 = vadd.f32 %v4869, %v4870
  %v4887 = vld [vmem:[%s2 + $0x80] sm:$0xf]
  %v4888 = vld [vmem:[%s2 + $0x84] sm:$0xf]
  %v4889 = vld [vmem:[%s2 + $0x88] sm:$0xf]
  %v4890 = vld [vmem:[%s2 + $0x8c] sm:$0xf]
  %v4891 = vld [vmem:[%s2 + $0x90] sm:$0xf]
  %v4892 = vld [vmem:[%s2 + $0x94] sm:$0xf]
  %v4893 = vld [vmem:[%s2 + $0x98] sm:$0xf]
  %v4894 = vld [vmem:[%s2 + $0x9c] sm:$0xf]
  %v4895 = vpack.c.bf16 %v4872, %v4871
  %v4896 = vpack.c.bf16 %v4874, %v4873
  %v4897 = vpack.c.bf16 %v4876, %v4875
  %v4898 = vpack.c.bf16 %v4878, %v4877
  %v4899 = vpack.c.bf16 %v4880, %v4879
  %v4900 = vpack.c.bf16 %v4882, %v4881
  %v4901 = vpack.c.bf16 %v4884, %v4883
  %v4902 = vpack.c.bf16 %v4886, %v4885
  %v4903 = vld [vmem:[%s1 + $0xb0] sm:$0xff]
  %v4904 = vld [vmem:[%s1 + $0xb8] sm:$0xff]
  %v4905 = vld [vmem:[%s1 + $0xc0] sm:$0xff]
  %v4906 = vld [vmem:[%s1 + $0xc8] sm:$0xff]
  %v4907 = vld [vmem:[%s1 + $0xd0] sm:$0xff]
  %v4908 = vld [vmem:[%s1 + $0xd8] sm:$0xff]
  %v4909 = vld [vmem:[%s1 + $0xe0] sm:$0xff]
  %v4910 = vld [vmem:[%s1 + $0xe8] sm:$0xff]
  %v4919 = vunpack.c.l.b16 %v4887
  %v4920 = vunpack.c.l.b16 %v4888
  %v4921 = vunpack.c.l.b16 %v4889
  %v4922 = vunpack.c.l.b16 %v4890
  %v4923 = vunpack.c.l.b16 %v4891
  %v4924 = vunpack.c.l.b16 %v4892
  %v4925 = vunpack.c.l.b16 %v4893
  %v4926 = vunpack.c.l.b16 %v4894
  %v4927 = vpack.c.b16 %v4920, %v4919
  %v4928 = vpack.c.b16 %v4922, %v4921
  %v4929 = vpack.c.b16 %v4924, %v4923
  %v4930 = vpack.c.b16 %v4926, %v4925
  %4935 = vmatpush.bf16.msra.mxu0 %v4902
  %4936 = vmatpush.bf16.msra.mxu0 %v4901
  %4937 = vmatpush.bf16.msra.mxu0 %v4900
  %4938 = vmatpush.bf16.msra.mxu0 %v4899
  %4939 = vmatpush.bf16.msra.mxu0 %v4898
  %4940 = vmatpush.bf16.msra.mxu0 %v4897
  %4941 = vmatpush.bf16.msra.mxu0 %v4896
  %4942 = vmatpush.bf16.msra.mxu0 %v4895
  %4943 = vmatmul.bf16.gmra.mxu0 %v4927
  %v4944 = vpop.f32.mrf.mxu0
  %v4945 = vadd.f32 %v4903, %v4944
  %v4946 = vpop.f32.mrf.mxu0
  %v4947 = vadd.f32 %v4904, %v4946
  %4948 = vmatmul.bf16.gmra.mxu0 %v4928
  %v4949 = vpop.f32.mrf.mxu0
  %v4950 = vadd.f32 %v4905, %v4949
  %v4951 = vpop.f32.mrf.mxu0
  %v4952 = vadd.f32 %v4906, %v4951
  %4953 = vmatmul.bf16.gmra.mxu0 %v4929
  %v4954 = vpop.f32.mrf.mxu0
  %v4955 = vadd.f32 %v4907, %v4954
  %v4956 = vpop.f32.mrf.mxu0
  %v4957 = vadd.f32 %v4908, %v4956
  %4958 = vmatmul.bf16.gmra.mxu0 %v4930
  %v4959 = vpop.f32.mrf.mxu0
  %v4960 = vadd.f32 %v4909, %v4959
  %v4961 = vpop.f32.mrf.mxu0
  %v4962 = vadd.f32 %v4910, %v4961
  %4963 = vdwg.mxu0
  %v4964 = vmax.f32 %v4945, 0.0
  %v4965 = vmax.f32 %v4947, 0.0
  %v4966 = vmax.f32 %v4950, 0.0
  %v4967 = vmax.f32 %v4952, 0.0
  %v4968 = vmax.f32 %v4955, 0.0
  %v4969 = vmax.f32 %v4957, 0.0
  %v4970 = vmax.f32 %v4960, 0.0
  %v4971 = vmax.f32 %v4962, 0.0
  %v4972 = vld [vmem:[%s3] sm:$0xff]
  %v4973 = vld [vmem:[%s3 + $0x8] sm:$0xff]
  %v4974 = vld [vmem:[%s3 + $0x10] sm:$0xff]
  %v4975 = vld [vmem:[%s3 + $0x18] sm:$0xff]
  %v4976 = vld [vmem:[%s3 + $0x20] sm:$0xff]
  %v4977 = vpack.c.bf16 %v4965, %v4964
  %v4978 = vpack.c.bf16 %v4967, %v4966
  %v4979 = vpack.c.bf16 %v4969, %v4968
  %v4980 = vpack.c.bf16 %v4971, %v4970
  %v4981 = vpack.c.bf16 %v4973, %v4972
  %v4982 = vpack.c.bf16 %v4975, %v4974
  %v4983 = vperm.slane %v4976, 0
  %v4985 = vsel %vm217, %v4977, 0
  %v4988 = vsel %vm217, %v4978, 0
  %v4991 = vsel %vm217, %v4979, 0
  %v4994 = vsel %vm217, %v4980, 0
  %4996 = vmatpush.bf16.msra.mxu0 0
  %4997 = vmatpush.bf16.msra.mxu0 0
  %4998 = vmatpush.bf16.msra.mxu0 0
  %4999 = vmatpush.bf16.msra.mxu0 0
  %5000 = vmatpush.bf16.msra.mxu0 0
  %5001 = vmatpush.bf16.msra.mxu0 0
  %5002 = vmatpush.bf16.msra.mxu0 %v4982
  %5003 = vmatpush.bf16.msra.mxu0 %v4981
  %5004 = vmatmul.bf16.gmra.mxu0 %v4985
  %v5005 = vpop.f32.mrf.mxu0
  %v5006 = vadd.f32 %v4983, %v5005
  %v5007 = vpop.f32.mrf.mxu0
  %v5008 = vadd.f32 %v4983, %v5007
  %5009 = vmatmul.bf16.gmra.mxu0 %v4988
  %v5010 = vpop.f32.mrf.mxu0
  %v5011 = vadd.f32 %v4983, %v5010
  %v5012 = vpop.f32.mrf.mxu0
  %v5013 = vadd.f32 %v4983, %v5012
  %5014 = vmatmul.bf16.gmra.mxu0 %v4991
  %v5015 = vpop.f32.mrf.mxu0
  %v5016 = vadd.f32 %v4983, %v5015
  %v5017 = vpop.f32.mrf.mxu0
  %v5018 = vadd.f32 %v4983, %v5017
  %5019 = vmatmul.bf16.gmra.mxu0 %v4994
  %v5020 = vpop.f32.mrf.mxu0
  %v5021 = vadd.f32 %v4983, %v5020
  %v5022 = vpop.f32.mrf.mxu0
  %v5023 = vadd.f32 %v4983, %v5022
  %5024 = vdwg.mxu0
  %vm5025 = vcmask 15360
  %5026 = vst.msk [vmem:[%s6] sm:$0xff] %vm5025, %v5006
  %5027 = vst.msk [vmem:[%s6 + $0x8] sm:$0xff] %vm5025, %v5008
  %5028 = vst.msk [vmem:[%s6 + $0x10] sm:$0xff] %vm5025, %v5011
  %5029 = vst.msk [vmem:[%s6 + $0x18] sm:$0xff] %vm5025, %v5013
  %5030 = vst.msk [vmem:[%s6 + $0x20] sm:$0xff] %vm5025, %v5016
  %5031 = vst.msk [vmem:[%s6 + $0x28] sm:$0xff] %vm5025, %v5018
  %5032 = vst.msk [vmem:[%s6 + $0x30] sm:$0xff] %vm5025, %v5021
  %5033 = vst.msk [vmem:[%s6 + $0x38] sm:$0xff] %vm5025, %v5023
  // Predicated region
  $region26: #{polla_adpadj_forward.1} parent=0 // pred_check
    _
  $region27: #{polla_adpadj_forward.1} parent=0 // pred_check_branch
    %5035 = sbr.rel (0) target = $region29
  $region28: #{polla_adpadj_forward.1} parent=0 // pred_region
    _
  $region29: #{polla_adpadj_forward.1} parent=0 // pred_fallthru
    _
  // Predicated region
  $region30: #{polla_adpadj_forward.1} parent=0 // pred_check
    _
  $region31: #{polla_adpadj_forward.1} parent=0 // pred_check_branch
    %5037 = sbr.rel (0) target = $region33
  $region32: #{polla_adpadj_forward.1} parent=0 // pred_region
    _
  $region33: #{polla_adpadj_forward.1} parent=0 // pred_fallthru
    _

</llo_original>
